<compile_context>
chip_gen: v7x
topology: tpu7x:2x2x1
jax: 0.10.0
libtpu: 0.0.40
codegen_flags: <defaults>
</compile_context>

<pallas_src>
import functools

import jax
import jax.numpy as jnp
from jax import lax
from jax.experimental import pallas as pl
from jax.experimental.pallas import tpu as pltpu


def _round_up(n, m):
    return ((n + m - 1) // m) * m


# ------------------------- fused LSTM-stack + dense kernel -------------------
def _fused_lstm_dense_kernel(x_ref, wih0_ref, wihr_ref, whh_ref, b_ref,
                             wd_ref, bd_ref, out_ref, act_ref, xw_ref, *,
                             num_layers, seq_len, batch_p, hidden_p,
                             time_unroll):
    L, T, Bp, Hp = num_layers, seq_len, batch_p, hidden_p

    h_last = None
    for l in range(L):                                   # static layer loop
        bias = b_ref[l]                                  # (1, 4Hp) f32

        # ---- hoisted input projection: ONE big MXU matmul per layer;
        #      only the truly sequential h @ W_hh stays in the time loop. ----
        if l == 0:
            xw_ref[...] = (jnp.dot(x_ref[...], wih0_ref[...],
                                   preferred_element_type=jnp.float32)
                           + bias)                       # (T*Bp, 4Hp) f32
        else:
            xw_ref[...] = (jnp.dot(act_ref[...], wihr_ref[l - 1],
                                   preferred_element_type=jnp.float32)
                           + bias)

        write_next = l < L - 1

        def step(t, carry, _l=l, _write_next=write_next):
            h, c = carry                                 # (Bp, Hp) f32
            row = pl.multiple_of(t * Bp, Bp)             # aligned sublane start
            gates = (xw_ref[pl.ds(row, Bp), :]
                     + jnp.dot(h.astype(whh_ref.dtype), whh_ref[_l],
                               preferred_element_type=jnp.float32))
            # Gate blocks are padded to Hp (lane multiple): every slice below
            # is vreg-aligned -> no XLU relayout, full-vreg EUP ops.  Padding
            # gate columns are exactly 0, so padded h/c columns stay 0.
            i = jax.nn.sigmoid(gates[:, 0:Hp])
            f = jax.nn.sigmoid(gates[:, Hp:2 * Hp])
            g = jnp.tanh(gates[:, 2 * Hp:3 * Hp])
            o = jax.nn.sigmoid(gates[:, 3 * Hp:4 * Hp])
            c_new = f * c + i * g
            h_new = o * jnp.tanh(c_new)
            if _write_next:                              # feed next layer (VMEM only)
                act_ref[pl.ds(row, Bp), :] = h_new.astype(act_ref.dtype)
            return h_new, c_new

        h0 = jnp.zeros((Bp, Hp), jnp.float32)
        c0 = jnp.zeros((Bp, Hp), jnp.float32)
        h_last, _ = lax.fori_loop(0, T, step, (h0, c0), unroll=time_unroll)

    # ---- fused final dense on the last timestep's hidden state ----
    out_ref[...] = (jnp.dot(h_last.astype(wd_ref.dtype), wd_ref[...],
                            preferred_element_type=jnp.float32)
                    + bd_ref[...]).astype(out_ref.dtype)


# ------------------------------ parameter prep -------------------------------
def prepare_params(params, compute_dtype=jnp.float32):
    """One-time prep: transpose, combine biases, lane-align gate blocks, stack.
    compute_dtype controls matmul operand dtype; bf16 is MXU-native on
    v5e/v6e/v7x and recommended — state/accumulation always stays f32."""
    lstm = params["lstm"]
    L = len(lstm)
    H = lstm[0]["w_hh"].shape[1]
    D_in = lstm[0]["w_ih"].shape[1]
    Hp = _round_up(H, 128)                   # lane-aligned per-gate width

    def pad_gate_cols(w_t):                  # (K, 4H) -> (K, 4Hp), zero pad cols
        blocks = [jnp.pad(w_t[:, g * H:(g + 1) * H], ((0, 0), (0, Hp - H)))
                  for g in range(4)]
        return jnp.concatenate(blocks, axis=1)

    # Layer 0 keeps K = D_in (don't inflate the x DMA / matmul K).
    wih0 = pad_gate_cols(jnp.transpose(lstm[0]["w_ih"])
                         ).astype(compute_dtype)                  # (D_in, 4Hp)

    # Layers >= 1: K padded H -> Hp with zero rows.
    if L > 1:
        wr = []
        for layer in lstm[1:]:
            w = pad_gate_cols(jnp.transpose(layer["w_ih"]))       # (H, 4Hp)
            wr.append(jnp.pad(w, ((0, Hp - H), (0, 0))))
        wihr = jnp.stack(wr).astype(compute_dtype)                # (L-1, Hp, 4Hp)
    else:
        wihr = jnp.zeros((1, Hp, 4 * Hp), compute_dtype)          # unused dummy

    whh = jnp.stack([
        jnp.pad(pad_gate_cols(jnp.transpose(l["w_hh"])), ((0, Hp - H), (0, 0)))
        for l in lstm]).astype(compute_dtype)                     # (L, Hp, 4Hp)

    def pad_gate_bias(b):                    # (4H,) -> (1, 4Hp), zero pad cols
        blocks = [jnp.pad(b[g * H:(g + 1) * H], (0, Hp - H)) for g in range(4)]
        return jnp.concatenate(blocks).reshape(1, 4 * Hp)

    b = jnp.stack([pad_gate_bias(l["b_ih"] + l["b_hh"]) for l in lstm]
                  ).astype(jnp.float32)                           # (L, 1, 4Hp)

    wd = jnp.pad(jnp.transpose(params["dense"]["w"]),
                 ((0, Hp - H), (0, 0))).astype(compute_dtype)     # (Hp, O)
    bd = params["dense"]["b"].reshape(1, -1).astype(jnp.float32)  # (1, O)

    return {"wih0": wih0, "wihr": wihr, "whh": whh, "b": b, "wd": wd, "bd": bd,
            "dims": {"L": L, "H": H, "Hp": Hp, "D_in": D_in, "O": wd.shape[1]},
            "compute_dtype": compute_dtype}


# --------------------------- full forward (wrapper) ---------------------------
def reccurent_forward(x_btd, prep):
    """Mirrors Reccurent.forward: x (B, T, input_dim) -> (B, output_dim)."""
    dims = prep["dims"]
    L, H, Hp, D_in, O = dims["L"], dims["H"], dims["Hp"], dims["D_in"], dims["O"]
    B, T, D = x_btd.shape
    assert D == D_in, (D, D_in)

    Bp = _round_up(max(B, 1), 8)             # f32 sublane multiple
    cdt = prep["compute_dtype"]
    cbytes = jnp.dtype(cdt).itemsize

    # time-major, pad batch rows (zeros, sliced off later); no input-width pad
    x = jnp.transpose(x_btd, (1, 0, 2))                       # (T, B, D)
    x = jnp.pad(x, ((0, 0), (0, Bp - B), (0, 0)))             # (T, Bp, D)
    x2 = x.reshape(T * Bp, D_in).astype(cdt)                  # (T*Bp, D_in)

    act_rows = T * Bp if L > 1 else 8        # skip real alloc when L == 1

    # VMEM residency (gridless -> single-buffered); 2x + headroom for temps.
    resident = (x2.size * cbytes
                + prep["wih0"].size * cbytes + prep["wihr"].size * cbytes
                + prep["whh"].size * cbytes + prep["b"].size * 4
                + prep["wd"].size * cbytes + prep["bd"].size * 4
                + Bp * O * 4
                + act_rows * Hp * cbytes          # inter-layer activations
                + T * Bp * 4 * Hp * 4)            # hoisted x @ W_ih + b
    vmem_limit = int(min(max(2 * resident + (4 << 20), 32 << 20), 128 << 20))
    # TODO(synk): if `resident` approaches ~48 MiB (v7x has 64 MiB/TC), chunk
    # the time axis instead of raising the limit further.

    time_unroll = True if T <= 32 else 8     # partial unroll for long T

    kernel = functools.partial(
        _fused_lstm_dense_kernel,
        num_layers=L, seq_len=T, batch_p=Bp, hidden_p=Hp,
        time_unroll=time_unroll)

    vmem_spec = pl.BlockSpec(memory_space=pltpu.MemorySpace.VMEM)
    out = pl.pallas_call(
        kernel,
        out_shape=jax.ShapeDtypeStruct((Bp, O), jnp.float32),
        in_specs=[vmem_spec] * 7,
        out_specs=vmem_spec,
        scratch_shapes=[
            pltpu.VMEM((act_rows, Hp), cdt),            # inter-layer activations
            pltpu.VMEM((T * Bp, 4 * Hp), jnp.float32),  # hoisted x @ W_ih + b
        ],
        compiler_params=pltpu.CompilerParams(vmem_limit_bytes=vmem_limit),
    )(x2, prep["wih0"], prep["wihr"], prep["whh"], prep["b"],
      prep["wd"], prep["bd"])

    return out[:B]


# ------------------------------ Reference (JAX) -------------------------------
def reference_forward(x_btd, params):
    B, T, _ = x_btd.shape
    x = x_btd
    for layer in params["lstm"]:
        H = layer["w_hh"].shape[1]
        h = jnp.zeros((B, H), jnp.float32)
        c = jnp.zeros((B, H), jnp.float32)
        outs = []
        for t in range(T):
            gates = (x[:, t, :] @ layer["w_ih"].T + h @ layer["w_hh"].T
                     + layer["b_ih"] + layer["b_hh"])
            i = jax.nn.sigmoid(gates[:, :H])
            f = jax.nn.sigmoid(gates[:, H:2 * H])
            g = jnp.tanh(gates[:, 2 * H:3 * H])
            o = jax.nn.sigmoid(gates[:, 3 * H:4 * H])
            c = f * c + i * g
            h = o * jnp.tanh(c)
            outs.append(h)
        x = jnp.stack(outs, axis=1)
    return x[:, -1, :] @ params["dense"]["w"].T + params["dense"]["b"]


# -------------------------------- Param init ----------------------------------
def init_params(key, input_dim, hidden_dim, output_dim, layer_count):
    params = {"lstm": [], "dense": {}}
    k_lstm = 1.0 / (hidden_dim ** 0.5)
    for l in range(layer_count):
        d_in = input_dim if l == 0 else hidden_dim
        key, k1, k2, k3, k4 = jax.random.split(key, 5)
        params["lstm"].append({
            "w_ih": jax.random.uniform(k1, (4 * hidden_dim, d_in),
                                       jnp.float32, -k_lstm, k_lstm),
            "w_hh": jax.random.uniform(k2, (4 * hidden_dim, hidden_dim),
                                       jnp.float32, -k_lstm, k_lstm),
            "b_ih": jax.random.uniform(k3, (4 * hidden_dim,),
                                       jnp.float32, -k_lstm, k_lstm),
            "b_hh": jax.random.uniform(k4, (4 * hidden_dim,),
                                       jnp.float32, -k_lstm, k_lstm),
        })
    k_lin = 1.0 / (hidden_dim ** 0.5)
    key, k1, k2 = jax.random.split(key, 3)
    params["dense"]["w"] = jax.random.uniform(
        k1, (output_dim, hidden_dim), jnp.float32, -k_lin, k_lin)
    params["dense"]["b"] = jax.random.uniform(
        k2, (output_dim,), jnp.float32, -k_lin, k_lin)
    return params


if __name__ == "__main__":
    B, T = 2, 8
    input_dim, hidden_dim, output_dim, layer_count = 8, 32, 16, 2

    key = jax.random.PRNGKey(0)
    key, kx = jax.random.split(key)
    x = jax.random.normal(kx, (B, T, input_dim), jnp.float32)
    params = init_params(key, input_dim, hidden_dim, output_dim, layer_count)

    ref = jax.block_until_ready(reference_forward(x, params))

    # f32 compute path (exact match with the reference)
    prep32 = prepare_params(params, compute_dtype=jnp.float32)
    out32 = jax.block_until_ready(reccurent_forward(x, prep32))
    assert out32.shape == (B, output_dim), out32.shape
    assert jnp.allclose(out32, ref, atol=1e-4, rtol=1e-4), (
        f"f32 max abs err = {jnp.max(jnp.abs(out32 - ref))}")

    # bf16-weight path (MXU-native on all generations); state stays f32
    prep16 = prepare_params(params, compute_dtype=jnp.bfloat16)
    out16 = jax.block_until_ready(reccurent_forward(x, prep16))
    assert out16.shape == (B, output_dim), out16.shape
    assert jnp.allclose(out16, ref, atol=5e-2, rtol=5e-2), (
        f"bf16 max abs err = {jnp.max(jnp.abs(out16 - ref))}")

    print("KERNEL_OK")
</pallas_src>

<mosaic_0001>
module attributes {stable_mosaic.version = 11 : i64} {
  func.func @_fused_lstm_dense_kernel(%arg0: memref<64x8xf32, #tpu.memory_space<vmem>>, %arg1: memref<8x512xf32, #tpu.memory_space<vmem>>, %arg2: memref<1x128x512xf32, #tpu.memory_space<vmem>>, %arg3: memref<2x128x512xf32, #tpu.memory_space<vmem>>, %arg4: memref<2x1x512xf32, #tpu.memory_space<vmem>>, %arg5: memref<128x16xf32, #tpu.memory_space<vmem>>, %arg6: memref<1x16xf32, #tpu.memory_space<vmem>>, %arg7: memref<8x16xf32, #tpu.memory_space<vmem>>, %arg8: memref<64x128xf32, #tpu.memory_space<vmem>>, %arg9: memref<64x512xf32, #tpu.memory_space<vmem>>) attributes {dimension_semantics = [], scalar_prefetch = 0 : i64, scratch_operands = 2 : i64, tpu.core_type = #tpu.core_type<tc>} {
    %c0 = arith.constant 0 : index
    %c0_0 = arith.constant 0 : index
    %c0_1 = arith.constant 0 : index
    %0 = vector.load %arg4[%c0, %c0_0, %c0_1] : memref<2x1x512xf32, #tpu.memory_space<vmem>>, vector<1x1x512xf32>
    %1 = vector.shape_cast %0 : vector<1x1x512xf32> to vector<1x512xf32>
    %c0_2 = arith.constant 0 : index
    %c0_3 = arith.constant 0 : index
    %2 = vector.load %arg0[%c0_2, %c0_3] : memref<64x8xf32, #tpu.memory_space<vmem>>, vector<64x8xf32>
    %c0_4 = arith.constant 0 : index
    %c0_5 = arith.constant 0 : index
    %3 = vector.load %arg1[%c0_4, %c0_5] : memref<8x512xf32, #tpu.memory_space<vmem>>, vector<8x512xf32>
    %cst = arith.constant dense<0.000000e+00> : vector<64x512xf32>
    %4 = tpu.matmul %2, %3, %cst {dimension_numbers = #tpu.dot_dimension_numbers<[1], [0], [0], [1], [0, 0, 1, 1], [], []>} : vector<64x8xf32>, vector<8x512xf32>, vector<64x512xf32> -> vector<64x512xf32>
    %5 = vector.broadcast %1 : vector<1x512xf32> to vector<64x512xf32>
    %6 = arith.addf %4, %5 : vector<64x512xf32>
    %c0_6 = arith.constant 0 : index
    %c0_7 = arith.constant 0 : index
    %7 = vector.load %arg9[%c0_6, %c0_7] : memref<64x512xf32, #tpu.memory_space<vmem>>, vector<64x512xf32>
    tpu.vector_store %arg9[%c0_6, %c0_7], %6 {strides = array<i32>} : memref<64x512xf32, #tpu.memory_space<vmem>>, vector<64x512xf32>,
    %cst_8 = arith.constant 0.000000e+00 : f32
    %8 = vector.broadcast %cst_8 : f32 to vector<8x128xf32>
    %cst_9 = arith.constant 0.000000e+00 : f32
    %9 = vector.broadcast %cst_9 : f32 to vector<8x128xf32>
    %c0_i32 = arith.constant 0 : i32
    %c8_i32 = arith.constant 8 : i32
    %10 = arith.muli %c0_i32, %c8_i32 : i32
    %11 = tpu.assume_multiple %10, 8 : i32
    %12 = arith.index_cast %11 : i32 to index
    %c0_10 = arith.constant 0 : index
    %13 = vector.load %arg9[%12, %c0_10] : memref<64x512xf32, #tpu.memory_space<vmem>>, vector<8x512xf32>
    %c0_11 = arith.constant 0 : index
    %c0_12 = arith.constant 0 : index
    %c0_13 = arith.constant 0 : index
    %14 = vector.load %arg3[%c0_11, %c0_12, %c0_13] : memref<2x128x512xf32, #tpu.memory_space<vmem>>, vector<1x128x512xf32>
    %15 = vector.shape_cast %14 : vector<1x128x512xf32> to vector<128x512xf32>
    %cst_14 = arith.constant dense<0.000000e+00> : vector<8x512xf32>
    %16 = tpu.matmul %8, %15, %cst_14 {dimension_numbers = #tpu.dot_dimension_numbers<[1], [0], [0], [1], [0, 0, 1, 1], [], []>} : vector<8x128xf32>, vector<128x512xf32>, vector<8x512xf32> -> vector<8x512xf32>
    %17 = arith.addf %13, %16 : vector<8x512xf32>
    %18 = vector.extract_strided_slice %17 {offsets = [0, 0], sizes = [8, 128], strides = [1, 1]} : vector<8x512xf32> to vector<8x128xf32>
    %19 = arith.negf %18 : vector<8x128xf32>
    %20 = math.exp %19 : vector<8x128xf32>
    %cst_15 = arith.constant 1.000000e+00 : f32
    %21 = vector.broadcast %cst_15 : f32 to vector<8x128xf32>
    %22 = arith.addf %21, %20 : vector<8x128xf32>
    %23 = arith.divf %21, %22 : vector<8x128xf32>
    %24 = vector.extract_strided_slice %17 {offsets = [0, 128], sizes = [8, 128], strides = [1, 1]} : vector<8x512xf32> to vector<8x128xf32>
    %25 = arith.negf %24 : vector<8x128xf32>
    %26 = math.exp %25 : vector<8x128xf32>
    %cst_16 = arith.constant 1.000000e+00 : f32
    %27 = vector.broadcast %cst_16 : f32 to vector<8x128xf32>
    %28 = arith.addf %27, %26 : vector<8x128xf32>
    %29 = arith.divf %27, %28 : vector<8x128xf32>
    %30 = vector.extract_strided_slice %17 {offsets = [0, 256], sizes = [8, 128], strides = [1, 1]} : vector<8x512xf32> to vector<8x128xf32>
    %31 = math.tanh %30 : vector<8x128xf32>
    %32 = vector.extract_strided_slice %17 {offsets = [0, 384], sizes = [8, 128], strides = [1, 1]} : vector<8x512xf32> to vector<8x128xf32>
    %33 = arith.negf %32 : vector<8x128xf32>
    %34 = math.exp %33 : vector<8x128xf32>
    %cst_17 = arith.constant 1.000000e+00 : f32
    %35 = vector.broadcast %cst_17 : f32 to vector<8x128xf32>
    %36 = arith.addf %35, %34 : vector<8x128xf32>
    %37 = arith.divf %35, %36 : vector<8x128xf32>
    %38 = arith.mulf %29, %9 : vector<8x128xf32>
    %39 = arith.mulf %23, %31 : vector<8x128xf32>
    %40 = arith.addf %38, %39 : vector<8x128xf32>
    %41 = math.tanh %40 : vector<8x128xf32>
    %42 = arith.mulf %37, %41 : vector<8x128xf32>
    %43 = arith.index_cast %11 : i32 to index
    %c0_18 = arith.constant 0 : index
    %44 = vector.load %arg8[%43, %c0_18] : memref<64x128xf32, #tpu.memory_space<vmem>>, vector<8x128xf32>
    tpu.vector_store %arg8[%43, %c0_18], %42 {strides = array<i32>} : memref<64x128xf32, #tpu.memory_space<vmem>>, vector<8x128xf32>,
    %c1_i32 = arith.constant 1 : i32
    %c8_i32_19 = arith.constant 8 : i32
    %45 = arith.muli %c1_i32, %c8_i32_19 : i32
    %46 = tpu.assume_multiple %45, 8 : i32
    %47 = arith.index_cast %46 : i32 to index
    %c0_20 = arith.constant 0 : index
    %48 = vector.load %arg9[%47, %c0_20] : memref<64x512xf32, #tpu.memory_space<vmem>>, vector<8x512xf32>
    %c0_21 = arith.constant 0 : index
    %c0_22 = arith.constant 0 : index
    %c0_23 = arith.constant 0 : index
    %49 = vector.load %arg3[%c0_21, %c0_22, %c0_23] : memref<2x128x512xf32, #tpu.memory_space<vmem>>, vector<1x128x512xf32>
    %50 = vector.shape_cast %49 : vector<1x128x512xf32> to vector<128x512xf32>
    %cst_24 = arith.constant dense<0.000000e+00> : vector<8x512xf32>
    %51 = tpu.matmul %42, %50, %cst_24 {dimension_numbers = #tpu.dot_dimension_numbers<[1], [0], [0], [1], [0, 0, 1, 1], [], []>} : vector<8x128xf32>, vector<128x512xf32>, vector<8x512xf32> -> vector<8x512xf32>
    %52 = arith.addf %48, %51 : vector<8x512xf32>
    %53 = vector.extract_strided_slice %52 {offsets = [0, 0], sizes = [8, 128], strides = [1, 1]} : vector<8x512xf32> to vector<8x128xf32>
    %54 = arith.negf %53 : vector<8x128xf32>
    %55 = math.exp %54 : vector<8x128xf32>
    %cst_25 = arith.constant 1.000000e+00 : f32
    %56 = vector.broadcast %cst_25 : f32 to vector<8x128xf32>
    %57 = arith.addf %56, %55 : vector<8x128xf32>
    %58 = arith.divf %56, %57 : vector<8x128xf32>
    %59 = vector.extract_strided_slice %52 {offsets = [0, 128], sizes = [8, 128], strides = [1, 1]} : vector<8x512xf32> to vector<8x128xf32>
    %60 = arith.negf %59 : vector<8x128xf32>
    %61 = math.exp %60 : vector<8x128xf32>
    %cst_26 = arith.constant 1.000000e+00 : f32
    %62 = vector.broadcast %cst_26 : f32 to vector<8x128xf32>
    %63 = arith.addf %62, %61 : vector<8x128xf32>
    %64 = arith.divf %62, %63 : vector<8x128xf32>
    %65 = vector.extract_strided_slice %52 {offsets = [0, 256], sizes = [8, 128], strides = [1, 1]} : vector<8x512xf32> to vector<8x128xf32>
    %66 = math.tanh %65 : vector<8x128xf32>
    %67 = vector.extract_strided_slice %52 {offsets = [0, 384], sizes = [8, 128], strides = [1, 1]} : vector<8x512xf32> to vector<8x128xf32>
    %68 = arith.negf %67 : vector<8x128xf32>
    %69 = math.exp %68 : vector<8x128xf32>
    %cst_27 = arith.constant 1.000000e+00 : f32
    %70 = vector.broadcast %cst_27 : f32 to vector<8x128xf32>
    %71 = arith.addf %70, %69 : vector<8x128xf32>
    %72 = arith.divf %70, %71 : vector<8x128xf32>
    %73 = arith.mulf %64, %40 : vector<8x128xf32>
    %74 = arith.mulf %58, %66 : vector<8x128xf32>
    %75 = arith.addf %73, %74 : vector<8x128xf32>
    %76 = math.tanh %75 : vector<8x128xf32>
    %77 = arith.mulf %72, %76 : vector<8x128xf32>
    %78 = arith.index_cast %46 : i32 to index
    %c0_28 = arith.constant 0 : index
    %79 = vector.load %arg8[%78, %c0_28] : memref<64x128xf32, #tpu.memory_space<vmem>>, vector<8x128xf32>
    tpu.vector_store %arg8[%78, %c0_28], %77 {strides = array<i32>} : memref<64x128xf32, #tpu.memory_space<vmem>>, vector<8x128xf32>,
    %c2_i32 = arith.constant 2 : i32
    %c8_i32_29 = arith.constant 8 : i32
    %80 = arith.muli %c2_i32, %c8_i32_29 : i32
    %81 = tpu.assume_multiple %80, 8 : i32
    %82 = arith.index_cast %81 : i32 to index
    %c0_30 = arith.constant 0 : index
    %83 = vector.load %arg9[%82, %c0_30] : memref<64x512xf32, #tpu.memory_space<vmem>>, vector<8x512xf32>
    %c0_31 = arith.constant 0 : index
    %c0_32 = arith.constant 0 : index
    %c0_33 = arith.constant 0 : index
    %84 = vector.load %arg3[%c0_31, %c0_32, %c0_33] : memref<2x128x512xf32, #tpu.memory_space<vmem>>, vector<1x128x512xf32>
    %85 = vector.shape_cast %84 : vector<1x128x512xf32> to vector<128x512xf32>
    %cst_34 = arith.constant dense<0.000000e+00> : vector<8x512xf32>
    %86 = tpu.matmul %77, %85, %cst_34 {dimension_numbers = #tpu.dot_dimension_numbers<[1], [0], [0], [1], [0, 0, 1, 1], [], []>} : vector<8x128xf32>, vector<128x512xf32>, vector<8x512xf32> -> vector<8x512xf32>
    %87 = arith.addf %83, %86 : vector<8x512xf32>
    %88 = vector.extract_strided_slice %87 {offsets = [0, 0], sizes = [8, 128], strides = [1, 1]} : vector<8x512xf32> to vector<8x128xf32>
    %89 = arith.negf %88 : vector<8x128xf32>
    %90 = math.exp %89 : vector<8x128xf32>
    %cst_35 = arith.constant 1.000000e+00 : f32
    %91 = vector.broadcast %cst_35 : f32 to vector<8x128xf32>
    %92 = arith.addf %91, %90 : vector<8x128xf32>
    %93 = arith.divf %91, %92 : vector<8x128xf32>
    %94 = vector.extract_strided_slice %87 {offsets = [0, 128], sizes = [8, 128], strides = [1, 1]} : vector<8x512xf32> to vector<8x128xf32>
    %95 = arith.negf %94 : vector<8x128xf32>
    %96 = math.exp %95 : vector<8x128xf32>
    %cst_36 = arith.constant 1.000000e+00 : f32
    %97 = vector.broadcast %cst_36 : f32 to vector<8x128xf32>
    %98 = arith.addf %97, %96 : vector<8x128xf32>
    %99 = arith.divf %97, %98 : vector<8x128xf32>
    %100 = vector.extract_strided_slice %87 {offsets = [0, 256], sizes = [8, 128], strides = [1, 1]} : vector<8x512xf32> to vector<8x128xf32>
    %101 = math.tanh %100 : vector<8x128xf32>
    %102 = vector.extract_strided_slice %87 {offsets = [0, 384], sizes = [8, 128], strides = [1, 1]} : vector<8x512xf32> to vector<8x128xf32>
    %103 = arith.negf %102 : vector<8x128xf32>
    %104 = math.exp %103 : vector<8x128xf32>
    %cst_37 = arith.constant 1.000000e+00 : f32
    %105 = vector.broadcast %cst_37 : f32 to vector<8x128xf32>
    %106 = arith.addf %105, %104 : vector<8x128xf32>
    %107 = arith.divf %105, %106 : vector<8x128xf32>
    %108 = arith.mulf %99, %75 : vector<8x128xf32>
    %109 = arith.mulf %93, %101 : vector<8x128xf32>
    %110 = arith.addf %108, %109 : vector<8x128xf32>
    %111 = math.tanh %110 : vector<8x128xf32>
    %112 = arith.mulf %107, %111 : vector<8x128xf32>
    %113 = arith.index_cast %81 : i32 to index
    %c0_38 = arith.constant 0 : index
    %114 = vector.load %arg8[%113, %c0_38] : memref<64x128xf32, #tpu.memory_space<vmem>>, vector<8x128xf32>
    tpu.vector_store %arg8[%113, %c0_38], %112 {strides = array<i32>} : memref<64x128xf32, #tpu.memory_space<vmem>>, vector<8x128xf32>,
    %c3_i32 = arith.constant 3 : i32
    %c8_i32_39 = arith.constant 8 : i32
    %115 = arith.muli %c3_i32, %c8_i32_39 : i32
    %116 = tpu.assume_multiple %115, 8 : i32
    %117 = arith.index_cast %116 : i32 to index
    %c0_40 = arith.constant 0 : index
    %118 = vector.load %arg9[%117, %c0_40] : memref<64x512xf32, #tpu.memory_space<vmem>>, vector<8x512xf32>
    %c0_41 = arith.constant 0 : index
    %c0_42 = arith.constant 0 : index
    %c0_43 = arith.constant 0 : index
    %119 = vector.load %arg3[%c0_41, %c0_42, %c0_43] : memref<2x128x512xf32, #tpu.memory_space<vmem>>, vector<1x128x512xf32>
    %120 = vector.shape_cast %119 : vector<1x128x512xf32> to vector<128x512xf32>
    %cst_44 = arith.constant dense<0.000000e+00> : vector<8x512xf32>
    %121 = tpu.matmul %112, %120, %cst_44 {dimension_numbers = #tpu.dot_dimension_numbers<[1], [0], [0], [1], [0, 0, 1, 1], [], []>} : vector<8x128xf32>, vector<128x512xf32>, vector<8x512xf32> -> vector<8x512xf32>
    %122 = arith.addf %118, %121 : vector<8x512xf32>
    %123 = vector.extract_strided_slice %122 {offsets = [0, 0], sizes = [8, 128], strides = [1, 1]} : vector<8x512xf32> to vector<8x128xf32>
    %124 = arith.negf %123 : vector<8x128xf32>
    %125 = math.exp %124 : vector<8x128xf32>
    %cst_45 = arith.constant 1.000000e+00 : f32
    %126 = vector.broadcast %cst_45 : f32 to vector<8x128xf32>
    %127 = arith.addf %126, %125 : vector<8x128xf32>
    %128 = arith.divf %126, %127 : vector<8x128xf32>
    %129 = vector.extract_strided_slice %122 {offsets = [0, 128], sizes = [8, 128], strides = [1, 1]} : vector<8x512xf32> to vector<8x128xf32>
    %130 = arith.negf %129 : vector<8x128xf32>
    %131 = math.exp %130 : vector<8x128xf32>
    %cst_46 = arith.constant 1.000000e+00 : f32
    %132 = vector.broadcast %cst_46 : f32 to vector<8x128xf32>
    %133 = arith.addf %132, %131 : vector<8x128xf32>
    %134 = arith.divf %132, %133 : vector<8x128xf32>
    %135 = vector.extract_strided_slice %122 {offsets = [0, 256], sizes = [8, 128], strides = [1, 1]} : vector<8x512xf32> to vector<8x128xf32>
    %136 = math.tanh %135 : vector<8x128xf32>
    %137 = vector.extract_strided_slice %122 {offsets = [0, 384], sizes = [8, 128], strides = [1, 1]} : vector<8x512xf32> to vector<8x128xf32>
    %138 = arith.negf %137 : vector<8x128xf32>
    %139 = math.exp %138 : vector<8x128xf32>
    %cst_47 = arith.constant 1.000000e+00 : f32
    %140 = vector.broadcast %cst_47 : f32 to vector<8x128xf32>
    %141 = arith.addf %140, %139 : vector<8x128xf32>
    %142 = arith.divf %140, %141 : vector<8x128xf32>
    %143 = arith.mulf %134, %110 : vector<8x128xf32>
    %144 = arith.mulf %128, %136 : vector<8x128xf32>
    %145 = arith.addf %143, %144 : vector<8x128xf32>
    %146 = math.tanh %145 : vector<8x128xf32>
    %147 = arith.mulf %142, %146 : vector<8x128xf32>
    %148 = arith.index_cast %116 : i32 to index
    %c0_48 = arith.constant 0 : index
    %149 = vector.load %arg8[%148, %c0_48] : memref<64x128xf32, #tpu.memory_space<vmem>>, vector<8x128xf32>
    tpu.vector_store %arg8[%148, %c0_48], %147 {strides = array<i32>} : memref<64x128xf32, #tpu.memory_space<vmem>>, vector<8x128xf32>,
    %c4_i32 = arith.constant 4 : i32
    %c8_i32_49 = arith.constant 8 : i32
    %150 = arith.muli %c4_i32, %c8_i32_49 : i32
    %151 = tpu.assume_multiple %150, 8 : i32
    %152 = arith.index_cast %151 : i32 to index
    %c0_50 = arith.constant 0 : index
    %153 = vector.load %arg9[%152, %c0_50] : memref<64x512xf32, #tpu.memory_space<vmem>>, vector<8x512xf32>
    %c0_51 = arith.constant 0 : index
    %c0_52 = arith.constant 0 : index
    %c0_53 = arith.constant 0 : index
    %154 = vector.load %arg3[%c0_51, %c0_52, %c0_53] : memref<2x128x512xf32, #tpu.memory_space<vmem>>, vector<1x128x512xf32>
    %155 = vector.shape_cast %154 : vector<1x128x512xf32> to vector<128x512xf32>
    %cst_54 = arith.constant dense<0.000000e+00> : vector<8x512xf32>
    %156 = tpu.matmul %147, %155, %cst_54 {dimension_numbers = #tpu.dot_dimension_numbers<[1], [0], [0], [1], [0, 0, 1, 1], [], []>} : vector<8x128xf32>, vector<128x512xf32>, vector<8x512xf32> -> vector<8x512xf32>
    %157 = arith.addf %153, %156 : vector<8x512xf32>
    %158 = vector.extract_strided_slice %157 {offsets = [0, 0], sizes = [8, 128], strides = [1, 1]} : vector<8x512xf32> to vector<8x128xf32>
    %159 = arith.negf %158 : vector<8x128xf32>
    %160 = math.exp %159 : vector<8x128xf32>
    %cst_55 = arith.constant 1.000000e+00 : f32
    %161 = vector.broadcast %cst_55 : f32 to vector<8x128xf32>
    %162 = arith.addf %161, %160 : vector<8x128xf32>
    %163 = arith.divf %161, %162 : vector<8x128xf32>
    %164 = vector.extract_strided_slice %157 {offsets = [0, 128], sizes = [8, 128], strides = [1, 1]} : vector<8x512xf32> to vector<8x128xf32>
    %165 = arith.negf %164 : vector<8x128xf32>
    %166 = math.exp %165 : vector<8x128xf32>
    %cst_56 = arith.constant 1.000000e+00 : f32
    %167 = vector.broadcast %cst_56 : f32 to vector<8x128xf32>
    %168 = arith.addf %167, %166 : vector<8x128xf32>
    %169 = arith.divf %167, %168 : vector<8x128xf32>
    %170 = vector.extract_strided_slice %157 {offsets = [0, 256], sizes = [8, 128], strides = [1, 1]} : vector<8x512xf32> to vector<8x128xf32>
    %171 = math.tanh %170 : vector<8x128xf32>
    %172 = vector.extract_strided_slice %157 {offsets = [0, 384], sizes = [8, 128], strides = [1, 1]} : vector<8x512xf32> to vector<8x128xf32>
    %173 = arith.negf %172 : vector<8x128xf32>
    %174 = math.exp %173 : vector<8x128xf32>
    %cst_57 = arith.constant 1.000000e+00 : f32
    %175 = vector.broadcast %cst_57 : f32 to vector<8x128xf32>
    %176 = arith.addf %175, %174 : vector<8x128xf32>
    %177 = arith.divf %175, %176 : vector<8x128xf32>
    %178 = arith.mulf %169, %145 : vector<8x128xf32>
    %179 = arith.mulf %163, %171 : vector<8x128xf32>
    %180 = arith.addf %178, %179 : vector<8x128xf32>
    %181 = math.tanh %180 : vector<8x128xf32>
    %182 = arith.mulf %177, %181 : vector<8x128xf32>
    %183 = arith.index_cast %151 : i32 to index
    %c0_58 = arith.constant 0 : index
    %184 = vector.load %arg8[%183, %c0_58] : memref<64x128xf32, #tpu.memory_space<vmem>>, vector<8x128xf32>
    tpu.vector_store %arg8[%183, %c0_58], %182 {strides = array<i32>} : memref<64x128xf32, #tpu.memory_space<vmem>>, vector<8x128xf32>,
    %c5_i32 = arith.constant 5 : i32
    %c8_i32_59 = arith.constant 8 : i32
    %185 = arith.muli %c5_i32, %c8_i32_59 : i32
    %186 = tpu.assume_multiple %185, 8 : i32
    %187 = arith.index_cast %186 : i32 to index
    %c0_60 = arith.constant 0 : index
    %188 = vector.load %arg9[%187, %c0_60] : memref<64x512xf32, #tpu.memory_space<vmem>>, vector<8x512xf32>
    %c0_61 = arith.constant 0 : index
    %c0_62 = arith.constant 0 : index
    %c0_63 = arith.constant 0 : index
    %189 = vector.load %arg3[%c0_61, %c0_62, %c0_63] : memref<2x128x512xf32, #tpu.memory_space<vmem>>, vector<1x128x512xf32>
    %190 = vector.shape_cast %189 : vector<1x128x512xf32> to vector<128x512xf32>
    %cst_64 = arith.constant dense<0.000000e+00> : vector<8x512xf32>
    %191 = tpu.matmul %182, %190, %cst_64 {dimension_numbers = #tpu.dot_dimension_numbers<[1], [0], [0], [1], [0, 0, 1, 1], [], []>} : vector<8x128xf32>, vector<128x512xf32>, vector<8x512xf32> -> vector<8x512xf32>
    %192 = arith.addf %188, %191 : vector<8x512xf32>
    %193 = vector.extract_strided_slice %192 {offsets = [0, 0], sizes = [8, 128], strides = [1, 1]} : vector<8x512xf32> to vector<8x128xf32>
    %194 = arith.negf %193 : vector<8x128xf32>
    %195 = math.exp %194 : vector<8x128xf32>
    %cst_65 = arith.constant 1.000000e+00 : f32
    %196 = vector.broadcast %cst_65 : f32 to vector<8x128xf32>
    %197 = arith.addf %196, %195 : vector<8x128xf32>
    %198 = arith.divf %196, %197 : vector<8x128xf32>
    %199 = vector.extract_strided_slice %192 {offsets = [0, 128], sizes = [8, 128], strides = [1, 1]} : vector<8x512xf32> to vector<8x128xf32>
    %200 = arith.negf %199 : vector<8x128xf32>
    %201 = math.exp %200 : vector<8x128xf32>
    %cst_66 = arith.constant 1.000000e+00 : f32
    %202 = vector.broadcast %cst_66 : f32 to vector<8x128xf32>
    %203 = arith.addf %202, %201 : vector<8x128xf32>
    %204 = arith.divf %202, %203 : vector<8x128xf32>
    %205 = vector.extract_strided_slice %192 {offsets = [0, 256], sizes = [8, 128], strides = [1, 1]} : vector<8x512xf32> to vector<8x128xf32>
    %206 = math.tanh %205 : vector<8x128xf32>
    %207 = vector.extract_strided_slice %192 {offsets = [0, 384], sizes = [8, 128], strides = [1, 1]} : vector<8x512xf32> to vector<8x128xf32>
    %208 = arith.negf %207 : vector<8x128xf32>
    %209 = math.exp %208 : vector<8x128xf32>
    %cst_67 = arith.constant 1.000000e+00 : f32
    %210 = vector.broadcast %cst_67 : f32 to vector<8x128xf32>
    %211 = arith.addf %210, %209 : vector<8x128xf32>
    %212 = arith.divf %210, %211 : vector<8x128xf32>
    %213 = arith.mulf %204, %180 : vector<8x128xf32>
    %214 = arith.mulf %198, %206 : vector<8x128xf32>
    %215 = arith.addf %213, %214 : vector<8x128xf32>
    %216 = math.tanh %215 : vector<8x128xf32>
    %217 = arith.mulf %212, %216 : vector<8x128xf32>
    %218 = arith.index_cast %186 : i32 to index
    %c0_68 = arith.constant 0 : index
    %219 = vector.load %arg8[%218, %c0_68] : memref<64x128xf32, #tpu.memory_space<vmem>>, vector<8x128xf32>
    tpu.vector_store %arg8[%218, %c0_68], %217 {strides = array<i32>} : memref<64x128xf32, #tpu.memory_space<vmem>>, vector<8x128xf32>,
    %c6_i32 = arith.constant 6 : i32
    %c8_i32_69 = arith.constant 8 : i32
    %220 = arith.muli %c6_i32, %c8_i32_69 : i32
    %221 = tpu.assume_multiple %220, 8 : i32
    %222 = arith.index_cast %221 : i32 to index
    %c0_70 = arith.constant 0 : index
    %223 = vector.load %arg9[%222, %c0_70] : memref<64x512xf32, #tpu.memory_space<vmem>>, vector<8x512xf32>
    %c0_71 = arith.constant 0 : index
    %c0_72 = arith.constant 0 : index
    %c0_73 = arith.constant 0 : index
    %224 = vector.load %arg3[%c0_71, %c0_72, %c0_73] : memref<2x128x512xf32, #tpu.memory_space<vmem>>, vector<1x128x512xf32>
    %225 = vector.shape_cast %224 : vector<1x128x512xf32> to vector<128x512xf32>
    %cst_74 = arith.constant dense<0.000000e+00> : vector<8x512xf32>
    %226 = tpu.matmul %217, %225, %cst_74 {dimension_numbers = #tpu.dot_dimension_numbers<[1], [0], [0], [1], [0, 0, 1, 1], [], []>} : vector<8x128xf32>, vector<128x512xf32>, vector<8x512xf32> -> vector<8x512xf32>
    %227 = arith.addf %223, %226 : vector<8x512xf32>
    %228 = vector.extract_strided_slice %227 {offsets = [0, 0], sizes = [8, 128], strides = [1, 1]} : vector<8x512xf32> to vector<8x128xf32>
    %229 = arith.negf %228 : vector<8x128xf32>
    %230 = math.exp %229 : vector<8x128xf32>
    %cst_75 = arith.constant 1.000000e+00 : f32
    %231 = vector.broadcast %cst_75 : f32 to vector<8x128xf32>
    %232 = arith.addf %231, %230 : vector<8x128xf32>
    %233 = arith.divf %231, %232 : vector<8x128xf32>
    %234 = vector.extract_strided_slice %227 {offsets = [0, 128], sizes = [8, 128], strides = [1, 1]} : vector<8x512xf32> to vector<8x128xf32>
    %235 = arith.negf %234 : vector<8x128xf32>
    %236 = math.exp %235 : vector<8x128xf32>
    %cst_76 = arith.constant 1.000000e+00 : f32
    %237 = vector.broadcast %cst_76 : f32 to vector<8x128xf32>
    %238 = arith.addf %237, %236 : vector<8x128xf32>
    %239 = arith.divf %237, %238 : vector<8x128xf32>
    %240 = vector.extract_strided_slice %227 {offsets = [0, 256], sizes = [8, 128], strides = [1, 1]} : vector<8x512xf32> to vector<8x128xf32>
    %241 = math.tanh %240 : vector<8x128xf32>
    %242 = vector.extract_strided_slice %227 {offsets = [0, 384], sizes = [8, 128], strides = [1, 1]} : vector<8x512xf32> to vector<8x128xf32>
    %243 = arith.negf %242 : vector<8x128xf32>
    %244 = math.exp %243 : vector<8x128xf32>
    %cst_77 = arith.constant 1.000000e+00 : f32
    %245 = vector.broadcast %cst_77 : f32 to vector<8x128xf32>
    %246 = arith.addf %245, %244 : vector<8x128xf32>
    %247 = arith.divf %245, %246 : vector<8x128xf32>
    %248 = arith.mulf %239, %215 : vector<8x128xf32>
    %249 = arith.mulf %233, %241 : vector<8x128xf32>
    %250 = arith.addf %248, %249 : vector<8x128xf32>
    %251 = math.tanh %250 : vector<8x128xf32>
    %252 = arith.mulf %247, %251 : vector<8x128xf32>
    %253 = arith.index_cast %221 : i32 to index
    %c0_78 = arith.constant 0 : index
    %254 = vector.load %arg8[%253, %c0_78] : memref<64x128xf32, #tpu.memory_space<vmem>>, vector<8x128xf32>
    tpu.vector_store %arg8[%253, %c0_78], %252 {strides = array<i32>} : memref<64x128xf32, #tpu.memory_space<vmem>>, vector<8x128xf32>,
    %c7_i32 = arith.constant 7 : i32
    %c8_i32_79 = arith.constant 8 : i32
    %255 = arith.muli %c7_i32, %c8_i32_79 : i32
    %256 = tpu.assume_multiple %255, 8 : i32
    %257 = arith.index_cast %256 : i32 to index
    %c0_80 = arith.constant 0 : index
    %258 = vector.load %arg9[%257, %c0_80] : memref<64x512xf32, #tpu.memory_space<vmem>>, vector<8x512xf32>
    %c0_81 = arith.constant 0 : index
    %c0_82 = arith.constant 0 : index
    %c0_83 = arith.constant 0 : index
    %259 = vector.load %arg3[%c0_81, %c0_82, %c0_83] : memref<2x128x512xf32, #tpu.memory_space<vmem>>, vector<1x128x512xf32>
    %260 = vector.shape_cast %259 : vector<1x128x512xf32> to vector<128x512xf32>
    %cst_84 = arith.constant dense<0.000000e+00> : vector<8x512xf32>
    %261 = tpu.matmul %252, %260, %cst_84 {dimension_numbers = #tpu.dot_dimension_numbers<[1], [0], [0], [1], [0, 0, 1, 1], [], []>} : vector<8x128xf32>, vector<128x512xf32>, vector<8x512xf32> -> vector<8x512xf32>
    %262 = arith.addf %258, %261 : vector<8x512xf32>
    %263 = vector.extract_strided_slice %262 {offsets = [0, 0], sizes = [8, 128], strides = [1, 1]} : vector<8x512xf32> to vector<8x128xf32>
    %264 = arith.negf %263 : vector<8x128xf32>
    %265 = math.exp %264 : vector<8x128xf32>
    %cst_85 = arith.constant 1.000000e+00 : f32
    %266 = vector.broadcast %cst_85 : f32 to vector<8x128xf32>
    %267 = arith.addf %266, %265 : vector<8x128xf32>
    %268 = arith.divf %266, %267 : vector<8x128xf32>
    %269 = vector.extract_strided_slice %262 {offsets = [0, 128], sizes = [8, 128], strides = [1, 1]} : vector<8x512xf32> to vector<8x128xf32>
    %270 = arith.negf %269 : vector<8x128xf32>
    %271 = math.exp %270 : vector<8x128xf32>
    %cst_86 = arith.constant 1.000000e+00 : f32
    %272 = vector.broadcast %cst_86 : f32 to vector<8x128xf32>
    %273 = arith.addf %272, %271 : vector<8x128xf32>
    %274 = arith.divf %272, %273 : vector<8x128xf32>
    %275 = vector.extract_strided_slice %262 {offsets = [0, 256], sizes = [8, 128], strides = [1, 1]} : vector<8x512xf32> to vector<8x128xf32>
    %276 = math.tanh %275 : vector<8x128xf32>
    %277 = vector.extract_strided_slice %262 {offsets = [0, 384], sizes = [8, 128], strides = [1, 1]} : vector<8x512xf32> to vector<8x128xf32>
    %278 = arith.negf %277 : vector<8x128xf32>
    %279 = math.exp %278 : vector<8x128xf32>
    %cst_87 = arith.constant 1.000000e+00 : f32
    %280 = vector.broadcast %cst_87 : f32 to vector<8x128xf32>
    %281 = arith.addf %280, %279 : vector<8x128xf32>
    %282 = arith.divf %280, %281 : vector<8x128xf32>
    %283 = arith.mulf %274, %250 : vector<8x128xf32>
    %284 = arith.mulf %268, %276 : vector<8x128xf32>
    %285 = arith.addf %283, %284 : vector<8x128xf32>
    %286 = math.tanh %285 : vector<8x128xf32>
    %287 = arith.mulf %282, %286 : vector<8x128xf32>
    %288 = arith.index_cast %256 : i32 to index
    %c0_88 = arith.constant 0 : index
    %289 = vector.load %arg8[%288, %c0_88] : memref<64x128xf32, #tpu.memory_space<vmem>>, vector<8x128xf32>
    tpu.vector_store %arg8[%288, %c0_88], %287 {strides = array<i32>} : memref<64x128xf32, #tpu.memory_space<vmem>>, vector<8x128xf32>,
    %c8_i32_89 = arith.constant 8 : i32
    %c1 = arith.constant 1 : index
    %c0_90 = arith.constant 0 : index
    %c0_91 = arith.constant 0 : index
    %290 = vector.load %arg4[%c1, %c0_90, %c0_91] : memref<2x1x512xf32, #tpu.memory_space<vmem>>, vector<1x1x512xf32>
    %291 = vector.shape_cast %290 : vector<1x1x512xf32> to vector<1x512xf32>
    %c0_92 = arith.constant 0 : index
    %c0_93 = arith.constant 0 : index
    %292 = vector.load %arg8[%c0_92, %c0_93] : memref<64x128xf32, #tpu.memory_space<vmem>>, vector<64x128xf32>
    %c0_94 = arith.constant 0 : index
    %c0_95 = arith.constant 0 : index
    %c0_96 = arith.constant 0 : index
    %293 = vector.load %arg2[%c0_94, %c0_95, %c0_96] : memref<1x128x512xf32, #tpu.memory_space<vmem>>, vector<1x128x512xf32>
    %294 = vector.shape_cast %293 : vector<1x128x512xf32> to vector<128x512xf32>
    %cst_97 = arith.constant dense<0.000000e+00> : vector<64x512xf32>
    %295 = tpu.matmul %292, %294, %cst_97 {dimension_numbers = #tpu.dot_dimension_numbers<[1], [0], [0], [1], [0, 0, 1, 1], [], []>} : vector<64x128xf32>, vector<128x512xf32>, vector<64x512xf32> -> vector<64x512xf32>
    %296 = vector.broadcast %291 : vector<1x512xf32> to vector<64x512xf32>
    %297 = arith.addf %295, %296 : vector<64x512xf32>
    %c0_98 = arith.constant 0 : index
    %c0_99 = arith.constant 0 : index
    %298 = vector.load %arg9[%c0_98, %c0_99] : memref<64x512xf32, #tpu.memory_space<vmem>>, vector<64x512xf32>
    tpu.vector_store %arg9[%c0_98, %c0_99], %297 {strides = array<i32>} : memref<64x512xf32, #tpu.memory_space<vmem>>, vector<64x512xf32>,
    %cst_100 = arith.constant 0.000000e+00 : f32
    %299 = vector.broadcast %cst_100 : f32 to vector<8x128xf32>
    %cst_101 = arith.constant 0.000000e+00 : f32
    %300 = vector.broadcast %cst_101 : f32 to vector<8x128xf32>
    %c0_i32_102 = arith.constant 0 : i32
    %c8_i32_103 = arith.constant 8 : i32
    %301 = arith.muli %c0_i32_102, %c8_i32_103 : i32
    %302 = tpu.assume_multiple %301, 8 : i32
    %303 = arith.index_cast %302 : i32 to index
    %c0_104 = arith.constant 0 : index
    %304 = vector.load %arg9[%303, %c0_104] : memref<64x512xf32, #tpu.memory_space<vmem>>, vector<8x512xf32>
    %c1_105 = arith.constant 1 : index
    %c0_106 = arith.constant 0 : index
    %c0_107 = arith.constant 0 : index
    %305 = vector.load %arg3[%c1_105, %c0_106, %c0_107] : memref<2x128x512xf32, #tpu.memory_space<vmem>>, vector<1x128x512xf32>
    %306 = vector.shape_cast %305 : vector<1x128x512xf32> to vector<128x512xf32>
    %cst_108 = arith.constant dense<0.000000e+00> : vector<8x512xf32>
    %307 = tpu.matmul %299, %306, %cst_108 {dimension_numbers = #tpu.dot_dimension_numbers<[1], [0], [0], [1], [0, 0, 1, 1], [], []>} : vector<8x128xf32>, vector<128x512xf32>, vector<8x512xf32> -> vector<8x512xf32>
    %308 = arith.addf %304, %307 : vector<8x512xf32>
    %309 = vector.extract_strided_slice %308 {offsets = [0, 0], sizes = [8, 128], strides = [1, 1]} : vector<8x512xf32> to vector<8x128xf32>
    %310 = arith.negf %309 : vector<8x128xf32>
    %311 = math.exp %310 : vector<8x128xf32>
    %cst_109 = arith.constant 1.000000e+00 : f32
    %312 = vector.broadcast %cst_109 : f32 to vector<8x128xf32>
    %313 = arith.addf %312, %311 : vector<8x128xf32>
    %314 = arith.divf %312, %313 : vector<8x128xf32>
    %315 = vector.extract_strided_slice %308 {offsets = [0, 128], sizes = [8, 128], strides = [1, 1]} : vector<8x512xf32> to vector<8x128xf32>
    %316 = arith.negf %315 : vector<8x128xf32>
    %317 = math.exp %316 : vector<8x128xf32>
    %cst_110 = arith.constant 1.000000e+00 : f32
    %318 = vector.broadcast %cst_110 : f32 to vector<8x128xf32>
    %319 = arith.addf %318, %317 : vector<8x128xf32>
    %320 = arith.divf %318, %319 : vector<8x128xf32>
    %321 = vector.extract_strided_slice %308 {offsets = [0, 256], sizes = [8, 128], strides = [1, 1]} : vector<8x512xf32> to vector<8x128xf32>
    %322 = math.tanh %321 : vector<8x128xf32>
    %323 = vector.extract_strided_slice %308 {offsets = [0, 384], sizes = [8, 128], strides = [1, 1]} : vector<8x512xf32> to vector<8x128xf32>
    %324 = arith.negf %323 : vector<8x128xf32>
    %325 = math.exp %324 : vector<8x128xf32>
    %cst_111 = arith.constant 1.000000e+00 : f32
    %326 = vector.broadcast %cst_111 : f32 to vector<8x128xf32>
    %327 = arith.addf %326, %325 : vector<8x128xf32>
    %328 = arith.divf %326, %327 : vector<8x128xf32>
    %329 = arith.mulf %320, %300 : vector<8x128xf32>
    %330 = arith.mulf %314, %322 : vector<8x128xf32>
    %331 = arith.addf %329, %330 : vector<8x128xf32>
    %332 = math.tanh %331 : vector<8x128xf32>
    %333 = arith.mulf %328, %332 : vector<8x128xf32>
    %c1_i32_112 = arith.constant 1 : i32
    %c8_i32_113 = arith.constant 8 : i32
    %334 = arith.muli %c1_i32_112, %c8_i32_113 : i32
    %335 = tpu.assume_multiple %334, 8 : i32
    %336 = arith.index_cast %335 : i32 to index
    %c0_114 = arith.constant 0 : index
    %337 = vector.load %arg9[%336, %c0_114] : memref<64x512xf32, #tpu.memory_space<vmem>>, vector<8x512xf32>
    %c1_115 = arith.constant 1 : index
    %c0_116 = arith.constant 0 : index
    %c0_117 = arith.constant 0 : index
    %338 = vector.load %arg3[%c1_115, %c0_116, %c0_117] : memref<2x128x512xf32, #tpu.memory_space<vmem>>, vector<1x128x512xf32>
    %339 = vector.shape_cast %338 : vector<1x128x512xf32> to vector<128x512xf32>
    %cst_118 = arith.constant dense<0.000000e+00> : vector<8x512xf32>
    %340 = tpu.matmul %333, %339, %cst_118 {dimension_numbers = #tpu.dot_dimension_numbers<[1], [0], [0], [1], [0, 0, 1, 1], [], []>} : vector<8x128xf32>, vector<128x512xf32>, vector<8x512xf32> -> vector<8x512xf32>
    %341 = arith.addf %337, %340 : vector<8x512xf32>
    %342 = vector.extract_strided_slice %341 {offsets = [0, 0], sizes = [8, 128], strides = [1, 1]} : vector<8x512xf32> to vector<8x128xf32>
    %343 = arith.negf %342 : vector<8x128xf32>
    %344 = math.exp %343 : vector<8x128xf32>
    %cst_119 = arith.constant 1.000000e+00 : f32
    %345 = vector.broadcast %cst_119 : f32 to vector<8x128xf32>
    %346 = arith.addf %345, %344 : vector<8x128xf32>
    %347 = arith.divf %345, %346 : vector<8x128xf32>
    %348 = vector.extract_strided_slice %341 {offsets = [0, 128], sizes = [8, 128], strides = [1, 1]} : vector<8x512xf32> to vector<8x128xf32>
    %349 = arith.negf %348 : vector<8x128xf32>
    %350 = math.exp %349 : vector<8x128xf32>
    %cst_120 = arith.constant 1.000000e+00 : f32
    %351 = vector.broadcast %cst_120 : f32 to vector<8x128xf32>
    %352 = arith.addf %351, %350 : vector<8x128xf32>
    %353 = arith.divf %351, %352 : vector<8x128xf32>
    %354 = vector.extract_strided_slice %341 {offsets = [0, 256], sizes = [8, 128], strides = [1, 1]} : vector<8x512xf32> to vector<8x128xf32>
    %355 = math.tanh %354 : vector<8x128xf32>
    %356 = vector.extract_strided_slice %341 {offsets = [0, 384], sizes = [8, 128], strides = [1, 1]} : vector<8x512xf32> to vector<8x128xf32>
    %357 = arith.negf %356 : vector<8x128xf32>
    %358 = math.exp %357 : vector<8x128xf32>
    %cst_121 = arith.constant 1.000000e+00 : f32
    %359 = vector.broadcast %cst_121 : f32 to vector<8x128xf32>
    %360 = arith.addf %359, %358 : vector<8x128xf32>
    %361 = arith.divf %359, %360 : vector<8x128xf32>
    %362 = arith.mulf %353, %331 : vector<8x128xf32>
    %363 = arith.mulf %347, %355 : vector<8x128xf32>
    %364 = arith.addf %362, %363 : vector<8x128xf32>
    %365 = math.tanh %364 : vector<8x128xf32>
    %366 = arith.mulf %361, %365 : vector<8x128xf32>
    %c2_i32_122 = arith.constant 2 : i32
    %c8_i32_123 = arith.constant 8 : i32
    %367 = arith.muli %c2_i32_122, %c8_i32_123 : i32
    %368 = tpu.assume_multiple %367, 8 : i32
    %369 = arith.index_cast %368 : i32 to index
    %c0_124 = arith.constant 0 : index
    %370 = vector.load %arg9[%369, %c0_124] : memref<64x512xf32, #tpu.memory_space<vmem>>, vector<8x512xf32>
    %c1_125 = arith.constant 1 : index
    %c0_126 = arith.constant 0 : index
    %c0_127 = arith.constant 0 : index
    %371 = vector.load %arg3[%c1_125, %c0_126, %c0_127] : memref<2x128x512xf32, #tpu.memory_space<vmem>>, vector<1x128x512xf32>
    %372 = vector.shape_cast %371 : vector<1x128x512xf32> to vector<128x512xf32>
    %cst_128 = arith.constant dense<0.000000e+00> : vector<8x512xf32>
    %373 = tpu.matmul %366, %372, %cst_128 {dimension_numbers = #tpu.dot_dimension_numbers<[1], [0], [0], [1], [0, 0, 1, 1], [], []>} : vector<8x128xf32>, vector<128x512xf32>, vector<8x512xf32> -> vector<8x512xf32>
    %374 = arith.addf %370, %373 : vector<8x512xf32>
    %375 = vector.extract_strided_slice %374 {offsets = [0, 0], sizes = [8, 128], strides = [1, 1]} : vector<8x512xf32> to vector<8x128xf32>
    %376 = arith.negf %375 : vector<8x128xf32>
    %377 = math.exp %376 : vector<8x128xf32>
    %cst_129 = arith.constant 1.000000e+00 : f32
    %378 = vector.broadcast %cst_129 : f32 to vector<8x128xf32>
    %379 = arith.addf %378, %377 : vector<8x128xf32>
    %380 = arith.divf %378, %379 : vector<8x128xf32>
    %381 = vector.extract_strided_slice %374 {offsets = [0, 128], sizes = [8, 128], strides = [1, 1]} : vector<8x512xf32> to vector<8x128xf32>
    %382 = arith.negf %381 : vector<8x128xf32>
    %383 = math.exp %382 : vector<8x128xf32>
    %cst_130 = arith.constant 1.000000e+00 : f32
    %384 = vector.broadcast %cst_130 : f32 to vector<8x128xf32>
    %385 = arith.addf %384, %383 : vector<8x128xf32>
    %386 = arith.divf %384, %385 : vector<8x128xf32>
    %387 = vector.extract_strided_slice %374 {offsets = [0, 256], sizes = [8, 128], strides = [1, 1]} : vector<8x512xf32> to vector<8x128xf32>
    %388 = math.tanh %387 : vector<8x128xf32>
    %389 = vector.extract_strided_slice %374 {offsets = [0, 384], sizes = [8, 128], strides = [1, 1]} : vector<8x512xf32> to vector<8x128xf32>
    %390 = arith.negf %389 : vector<8x128xf32>
    %391 = math.exp %390 : vector<8x128xf32>
    %cst_131 = arith.constant 1.000000e+00 : f32
    %392 = vector.broadcast %cst_131 : f32 to vector<8x128xf32>
    %393 = arith.addf %392, %391 : vector<8x128xf32>
    %394 = arith.divf %392, %393 : vector<8x128xf32>
    %395 = arith.mulf %386, %364 : vector<8x128xf32>
    %396 = arith.mulf %380, %388 : vector<8x128xf32>
    %397 = arith.addf %395, %396 : vector<8x128xf32>
    %398 = math.tanh %397 : vector<8x128xf32>
    %399 = arith.mulf %394, %398 : vector<8x128xf32>
    %c3_i32_132 = arith.constant 3 : i32
    %c8_i32_133 = arith.constant 8 : i32
    %400 = arith.muli %c3_i32_132, %c8_i32_133 : i32
    %401 = tpu.assume_multiple %400, 8 : i32
    %402 = arith.index_cast %401 : i32 to index
    %c0_134 = arith.constant 0 : index
    %403 = vector.load %arg9[%402, %c0_134] : memref<64x512xf32, #tpu.memory_space<vmem>>, vector<8x512xf32>
    %c1_135 = arith.constant 1 : index
    %c0_136 = arith.constant 0 : index
    %c0_137 = arith.constant 0 : index
    %404 = vector.load %arg3[%c1_135, %c0_136, %c0_137] : memref<2x128x512xf32, #tpu.memory_space<vmem>>, vector<1x128x512xf32>
    %405 = vector.shape_cast %404 : vector<1x128x512xf32> to vector<128x512xf32>
    %cst_138 = arith.constant dense<0.000000e+00> : vector<8x512xf32>
    %406 = tpu.matmul %399, %405, %cst_138 {dimension_numbers = #tpu.dot_dimension_numbers<[1], [0], [0], [1], [0, 0, 1, 1], [], []>} : vector<8x128xf32>, vector<128x512xf32>, vector<8x512xf32> -> vector<8x512xf32>
    %407 = arith.addf %403, %406 : vector<8x512xf32>
    %408 = vector.extract_strided_slice %407 {offsets = [0, 0], sizes = [8, 128], strides = [1, 1]} : vector<8x512xf32> to vector<8x128xf32>
    %409 = arith.negf %408 : vector<8x128xf32>
    %410 = math.exp %409 : vector<8x128xf32>
    %cst_139 = arith.constant 1.000000e+00 : f32
    %411 = vector.broadcast %cst_139 : f32 to vector<8x128xf32>
    %412 = arith.addf %411, %410 : vector<8x128xf32>
    %413 = arith.divf %411, %412 : vector<8x128xf32>
    %414 = vector.extract_strided_slice %407 {offsets = [0, 128], sizes = [8, 128], strides = [1, 1]} : vector<8x512xf32> to vector<8x128xf32>
    %415 = arith.negf %414 : vector<8x128xf32>
    %416 = math.exp %415 : vector<8x128xf32>
    %cst_140 = arith.constant 1.000000e+00 : f32
    %417 = vector.broadcast %cst_140 : f32 to vector<8x128xf32>
    %418 = arith.addf %417, %416 : vector<8x128xf32>
    %419 = arith.divf %417, %418 : vector<8x128xf32>
    %420 = vector.extract_strided_slice %407 {offsets = [0, 256], sizes = [8, 128], strides = [1, 1]} : vector<8x512xf32> to vector<8x128xf32>
    %421 = math.tanh %420 : vector<8x128xf32>
    %422 = vector.extract_strided_slice %407 {offsets = [0, 384], sizes = [8, 128], strides = [1, 1]} : vector<8x512xf32> to vector<8x128xf32>
    %423 = arith.negf %422 : vector<8x128xf32>
    %424 = math.exp %423 : vector<8x128xf32>
    %cst_141 = arith.constant 1.000000e+00 : f32
    %425 = vector.broadcast %cst_141 : f32 to vector<8x128xf32>
    %426 = arith.addf %425, %424 : vector<8x128xf32>
    %427 = arith.divf %425, %426 : vector<8x128xf32>
    %428 = arith.mulf %419, %397 : vector<8x128xf32>
    %429 = arith.mulf %413, %421 : vector<8x128xf32>
    %430 = arith.addf %428, %429 : vector<8x128xf32>
    %431 = math.tanh %430 : vector<8x128xf32>
    %432 = arith.mulf %427, %431 : vector<8x128xf32>
    %c4_i32_142 = arith.constant 4 : i32
    %c8_i32_143 = arith.constant 8 : i32
    %433 = arith.muli %c4_i32_142, %c8_i32_143 : i32
    %434 = tpu.assume_multiple %433, 8 : i32
    %435 = arith.index_cast %434 : i32 to index
    %c0_144 = arith.constant 0 : index
    %436 = vector.load %arg9[%435, %c0_144] : memref<64x512xf32, #tpu.memory_space<vmem>>, vector<8x512xf32>
    %c1_145 = arith.constant 1 : index
    %c0_146 = arith.constant 0 : index
    %c0_147 = arith.constant 0 : index
    %437 = vector.load %arg3[%c1_145, %c0_146, %c0_147] : memref<2x128x512xf32, #tpu.memory_space<vmem>>, vector<1x128x512xf32>
    %438 = vector.shape_cast %437 : vector<1x128x512xf32> to vector<128x512xf32>
    %cst_148 = arith.constant dense<0.000000e+00> : vector<8x512xf32>
    %439 = tpu.matmul %432, %438, %cst_148 {dimension_numbers = #tpu.dot_dimension_numbers<[1], [0], [0], [1], [0, 0, 1, 1], [], []>} : vector<8x128xf32>, vector<128x512xf32>, vector<8x512xf32> -> vector<8x512xf32>
    %440 = arith.addf %436, %439 : vector<8x512xf32>
    %441 = vector.extract_strided_slice %440 {offsets = [0, 0], sizes = [8, 128], strides = [1, 1]} : vector<8x512xf32> to vector<8x128xf32>
    %442 = arith.negf %441 : vector<8x128xf32>
    %443 = math.exp %442 : vector<8x128xf32>
    %cst_149 = arith.constant 1.000000e+00 : f32
    %444 = vector.broadcast %cst_149 : f32 to vector<8x128xf32>
    %445 = arith.addf %444, %443 : vector<8x128xf32>
    %446 = arith.divf %444, %445 : vector<8x128xf32>
    %447 = vector.extract_strided_slice %440 {offsets = [0, 128], sizes = [8, 128], strides = [1, 1]} : vector<8x512xf32> to vector<8x128xf32>
    %448 = arith.negf %447 : vector<8x128xf32>
    %449 = math.exp %448 : vector<8x128xf32>
    %cst_150 = arith.constant 1.000000e+00 : f32
    %450 = vector.broadcast %cst_150 : f32 to vector<8x128xf32>
    %451 = arith.addf %450, %449 : vector<8x128xf32>
    %452 = arith.divf %450, %451 : vector<8x128xf32>
    %453 = vector.extract_strided_slice %440 {offsets = [0, 256], sizes = [8, 128], strides = [1, 1]} : vector<8x512xf32> to vector<8x128xf32>
    %454 = math.tanh %453 : vector<8x128xf32>
    %455 = vector.extract_strided_slice %440 {offsets = [0, 384], sizes = [8, 128], strides = [1, 1]} : vector<8x512xf32> to vector<8x128xf32>
    %456 = arith.negf %455 : vector<8x128xf32>
    %457 = math.exp %456 : vector<8x128xf32>
    %cst_151 = arith.constant 1.000000e+00 : f32
    %458 = vector.broadcast %cst_151 : f32 to vector<8x128xf32>
    %459 = arith.addf %458, %457 : vector<8x128xf32>
    %460 = arith.divf %458, %459 : vector<8x128xf32>
    %461 = arith.mulf %452, %430 : vector<8x128xf32>
    %462 = arith.mulf %446, %454 : vector<8x128xf32>
    %463 = arith.addf %461, %462 : vector<8x128xf32>
    %464 = math.tanh %463 : vector<8x128xf32>
    %465 = arith.mulf %460, %464 : vector<8x128xf32>
    %c5_i32_152 = arith.constant 5 : i32
    %c8_i32_153 = arith.constant 8 : i32
    %466 = arith.muli %c5_i32_152, %c8_i32_153 : i32
    %467 = tpu.assume_multiple %466, 8 : i32
    %468 = arith.index_cast %467 : i32 to index
    %c0_154 = arith.constant 0 : index
    %469 = vector.load %arg9[%468, %c0_154] : memref<64x512xf32, #tpu.memory_space<vmem>>, vector<8x512xf32>
    %c1_155 = arith.constant 1 : index
    %c0_156 = arith.constant 0 : index
    %c0_157 = arith.constant 0 : index
    %470 = vector.load %arg3[%c1_155, %c0_156, %c0_157] : memref<2x128x512xf32, #tpu.memory_space<vmem>>, vector<1x128x512xf32>
    %471 = vector.shape_cast %470 : vector<1x128x512xf32> to vector<128x512xf32>
    %cst_158 = arith.constant dense<0.000000e+00> : vector<8x512xf32>
    %472 = tpu.matmul %465, %471, %cst_158 {dimension_numbers = #tpu.dot_dimension_numbers<[1], [0], [0], [1], [0, 0, 1, 1], [], []>} : vector<8x128xf32>, vector<128x512xf32>, vector<8x512xf32> -> vector<8x512xf32>
    %473 = arith.addf %469, %472 : vector<8x512xf32>
    %474 = vector.extract_strided_slice %473 {offsets = [0, 0], sizes = [8, 128], strides = [1, 1]} : vector<8x512xf32> to vector<8x128xf32>
    %475 = arith.negf %474 : vector<8x128xf32>
    %476 = math.exp %475 : vector<8x128xf32>
    %cst_159 = arith.constant 1.000000e+00 : f32
    %477 = vector.broadcast %cst_159 : f32 to vector<8x128xf32>
    %478 = arith.addf %477, %476 : vector<8x128xf32>
    %479 = arith.divf %477, %478 : vector<8x128xf32>
    %480 = vector.extract_strided_slice %473 {offsets = [0, 128], sizes = [8, 128], strides = [1, 1]} : vector<8x512xf32> to vector<8x128xf32>
    %481 = arith.negf %480 : vector<8x128xf32>
    %482 = math.exp %481 : vector<8x128xf32>
    %cst_160 = arith.constant 1.000000e+00 : f32
    %483 = vector.broadcast %cst_160 : f32 to vector<8x128xf32>
    %484 = arith.addf %483, %482 : vector<8x128xf32>
    %485 = arith.divf %483, %484 : vector<8x128xf32>
    %486 = vector.extract_strided_slice %473 {offsets = [0, 256], sizes = [8, 128], strides = [1, 1]} : vector<8x512xf32> to vector<8x128xf32>
    %487 = math.tanh %486 : vector<8x128xf32>
    %488 = vector.extract_strided_slice %473 {offsets = [0, 384], sizes = [8, 128], strides = [1, 1]} : vector<8x512xf32> to vector<8x128xf32>
    %489 = arith.negf %488 : vector<8x128xf32>
    %490 = math.exp %489 : vector<8x128xf32>
    %cst_161 = arith.constant 1.000000e+00 : f32
    %491 = vector.broadcast %cst_161 : f32 to vector<8x128xf32>
    %492 = arith.addf %491, %490 : vector<8x128xf32>
    %493 = arith.divf %491, %492 : vector<8x128xf32>
    %494 = arith.mulf %485, %463 : vector<8x128xf32>
    %495 = arith.mulf %479, %487 : vector<8x128xf32>
    %496 = arith.addf %494, %495 : vector<8x128xf32>
    %497 = math.tanh %496 : vector<8x128xf32>
    %498 = arith.mulf %493, %497 : vector<8x128xf32>
    %c6_i32_162 = arith.constant 6 : i32
    %c8_i32_163 = arith.constant 8 : i32
    %499 = arith.muli %c6_i32_162, %c8_i32_163 : i32
    %500 = tpu.assume_multiple %499, 8 : i32
    %501 = arith.index_cast %500 : i32 to index
    %c0_164 = arith.constant 0 : index
    %502 = vector.load %arg9[%501, %c0_164] : memref<64x512xf32, #tpu.memory_space<vmem>>, vector<8x512xf32>
    %c1_165 = arith.constant 1 : index
    %c0_166 = arith.constant 0 : index
    %c0_167 = arith.constant 0 : index
    %503 = vector.load %arg3[%c1_165, %c0_166, %c0_167] : memref<2x128x512xf32, #tpu.memory_space<vmem>>, vector<1x128x512xf32>
    %504 = vector.shape_cast %503 : vector<1x128x512xf32> to vector<128x512xf32>
    %cst_168 = arith.constant dense<0.000000e+00> : vector<8x512xf32>
    %505 = tpu.matmul %498, %504, %cst_168 {dimension_numbers = #tpu.dot_dimension_numbers<[1], [0], [0], [1], [0, 0, 1, 1], [], []>} : vector<8x128xf32>, vector<128x512xf32>, vector<8x512xf32> -> vector<8x512xf32>
    %506 = arith.addf %502, %505 : vector<8x512xf32>
    %507 = vector.extract_strided_slice %506 {offsets = [0, 0], sizes = [8, 128], strides = [1, 1]} : vector<8x512xf32> to vector<8x128xf32>
    %508 = arith.negf %507 : vector<8x128xf32>
    %509 = math.exp %508 : vector<8x128xf32>
    %cst_169 = arith.constant 1.000000e+00 : f32
    %510 = vector.broadcast %cst_169 : f32 to vector<8x128xf32>
    %511 = arith.addf %510, %509 : vector<8x128xf32>
    %512 = arith.divf %510, %511 : vector<8x128xf32>
    %513 = vector.extract_strided_slice %506 {offsets = [0, 128], sizes = [8, 128], strides = [1, 1]} : vector<8x512xf32> to vector<8x128xf32>
    %514 = arith.negf %513 : vector<8x128xf32>
    %515 = math.exp %514 : vector<8x128xf32>
    %cst_170 = arith.constant 1.000000e+00 : f32
    %516 = vector.broadcast %cst_170 : f32 to vector<8x128xf32>
    %517 = arith.addf %516, %515 : vector<8x128xf32>
    %518 = arith.divf %516, %517 : vector<8x128xf32>
    %519 = vector.extract_strided_slice %506 {offsets = [0, 256], sizes = [8, 128], strides = [1, 1]} : vector<8x512xf32> to vector<8x128xf32>
    %520 = math.tanh %519 : vector<8x128xf32>
    %521 = vector.extract_strided_slice %506 {offsets = [0, 384], sizes = [8, 128], strides = [1, 1]} : vector<8x512xf32> to vector<8x128xf32>
    %522 = arith.negf %521 : vector<8x128xf32>
    %523 = math.exp %522 : vector<8x128xf32>
    %cst_171 = arith.constant 1.000000e+00 : f32
    %524 = vector.broadcast %cst_171 : f32 to vector<8x128xf32>
    %525 = arith.addf %524, %523 : vector<8x128xf32>
    %526 = arith.divf %524, %525 : vector<8x128xf32>
    %527 = arith.mulf %518, %496 : vector<8x128xf32>
    %528 = arith.mulf %512, %520 : vector<8x128xf32>
    %529 = arith.addf %527, %528 : vector<8x128xf32>
    %530 = math.tanh %529 : vector<8x128xf32>
    %531 = arith.mulf %526, %530 : vector<8x128xf32>
    %c7_i32_172 = arith.constant 7 : i32
    %c8_i32_173 = arith.constant 8 : i32
    %532 = arith.muli %c7_i32_172, %c8_i32_173 : i32
    %533 = tpu.assume_multiple %532, 8 : i32
    %534 = arith.index_cast %533 : i32 to index
    %c0_174 = arith.constant 0 : index
    %535 = vector.load %arg9[%534, %c0_174] : memref<64x512xf32, #tpu.memory_space<vmem>>, vector<8x512xf32>
    %c1_175 = arith.constant 1 : index
    %c0_176 = arith.constant 0 : index
    %c0_177 = arith.constant 0 : index
    %536 = vector.load %arg3[%c1_175, %c0_176, %c0_177] : memref<2x128x512xf32, #tpu.memory_space<vmem>>, vector<1x128x512xf32>
    %537 = vector.shape_cast %536 : vector<1x128x512xf32> to vector<128x512xf32>
    %cst_178 = arith.constant dense<0.000000e+00> : vector<8x512xf32>
    %538 = tpu.matmul %531, %537, %cst_178 {dimension_numbers = #tpu.dot_dimension_numbers<[1], [0], [0], [1], [0, 0, 1, 1], [], []>} : vector<8x128xf32>, vector<128x512xf32>, vector<8x512xf32> -> vector<8x512xf32>
    %539 = arith.addf %535, %538 : vector<8x512xf32>
    %540 = vector.extract_strided_slice %539 {offsets = [0, 0], sizes = [8, 128], strides = [1, 1]} : vector<8x512xf32> to vector<8x128xf32>
    %541 = arith.negf %540 : vector<8x128xf32>
    %542 = math.exp %541 : vector<8x128xf32>
    %cst_179 = arith.constant 1.000000e+00 : f32
    %543 = vector.broadcast %cst_179 : f32 to vector<8x128xf32>
    %544 = arith.addf %543, %542 : vector<8x128xf32>
    %545 = arith.divf %543, %544 : vector<8x128xf32>
    %546 = vector.extract_strided_slice %539 {offsets = [0, 128], sizes = [8, 128], strides = [1, 1]} : vector<8x512xf32> to vector<8x128xf32>
    %547 = arith.negf %546 : vector<8x128xf32>
    %548 = math.exp %547 : vector<8x128xf32>
    %cst_180 = arith.constant 1.000000e+00 : f32
    %549 = vector.broadcast %cst_180 : f32 to vector<8x128xf32>
    %550 = arith.addf %549, %548 : vector<8x128xf32>
    %551 = arith.divf %549, %550 : vector<8x128xf32>
    %552 = vector.extract_strided_slice %539 {offsets = [0, 256], sizes = [8, 128], strides = [1, 1]} : vector<8x512xf32> to vector<8x128xf32>
    %553 = math.tanh %552 : vector<8x128xf32>
    %554 = vector.extract_strided_slice %539 {offsets = [0, 384], sizes = [8, 128], strides = [1, 1]} : vector<8x512xf32> to vector<8x128xf32>
    %555 = arith.negf %554 : vector<8x128xf32>
    %556 = math.exp %555 : vector<8x128xf32>
    %cst_181 = arith.constant 1.000000e+00 : f32
    %557 = vector.broadcast %cst_181 : f32 to vector<8x128xf32>
    %558 = arith.addf %557, %556 : vector<8x128xf32>
    %559 = arith.divf %557, %558 : vector<8x128xf32>
    %560 = arith.mulf %551, %529 : vector<8x128xf32>
    %561 = arith.mulf %545, %553 : vector<8x128xf32>
    %562 = arith.addf %560, %561 : vector<8x128xf32>
    %563 = math.tanh %562 : vector<8x128xf32>
    %564 = arith.mulf %559, %563 : vector<8x128xf32>
    %c8_i32_182 = arith.constant 8 : i32
    %c0_183 = arith.constant 0 : index
    %c0_184 = arith.constant 0 : index
    %565 = vector.load %arg5[%c0_183, %c0_184] : memref<128x16xf32, #tpu.memory_space<vmem>>, vector<128x16xf32>
    %cst_185 = arith.constant dense<0.000000e+00> : vector<8x16xf32>
    %566 = tpu.matmul %564, %565, %cst_185 {dimension_numbers = #tpu.dot_dimension_numbers<[1], [0], [0], [1], [0, 0, 1, 1], [], []>} : vector<8x128xf32>, vector<128x16xf32>, vector<8x16xf32> -> vector<8x16xf32>
    %c0_186 = arith.constant 0 : index
    %c0_187 = arith.constant 0 : index
    %567 = vector.load %arg6[%c0_186, %c0_187] : memref<1x16xf32, #tpu.memory_space<vmem>>, vector<1x16xf32>
    %568 = vector.broadcast %567 : vector<1x16xf32> to vector<8x16xf32>
    %569 = arith.addf %566, %568 : vector<8x16xf32>
    %c0_188 = arith.constant 0 : index
    %c0_189 = arith.constant 0 : index
    %570 = vector.load %arg7[%c0_188, %c0_189] : memref<8x16xf32, #tpu.memory_space<vmem>>, vector<8x16xf32>
    tpu.vector_store %arg7[%c0_188, %c0_189], %569 {strides = array<i32>} : memref<8x16xf32, #tpu.memory_space<vmem>>, vector<8x16xf32>,
    return
  }
}

</mosaic_0001>

<llo_original>
// kernel: tpu_custom_call.1
$region0: #{tpu_custom_call.1}
  #allocation0 [shape = 'u32[]', space=smem, size = 0x4, offset = 0x4, fixed_abs, tag = 'smem constant byte address 0x4 - core index']
  #allocation1 [shape = 'u32[144,128]{1,0:T(1,128)}', space=vmem, size = 0x12000, scoped, tag = 'internal scratch']
  #allocation2 [shape = 'f32[64,128]{1,0:T(8,128)}', space=vmem, size = 0x8000, scoped, tag = 'scratch operand']
  #allocation3 [shape = 'f32[64,512]{1,0:T(8,128)}', space=vmem, size = 0x20000, scoped, tag = 'scratch operand']
  %s0 = inlined_call_operand.vmem [shape: f32[64,8], index: 0, kind: input, shape index: {}]
  %s1 = inlined_call_operand.vmem [shape: f32[8,512], index: 1, kind: input, shape index: {}]
  %s2 = inlined_call_operand.hbm [shape: f32[1,128,512], index: 2, kind: input, shape index: {}]
  %s3 = inlined_call_operand.hbm [shape: f32[2,128,512], index: 3, kind: input, shape index: {}]
  %s4 = inlined_call_operand.vmem [shape: f32[2,1,512], index: 4, kind: input, shape index: {}]
  %s5 = inlined_call_operand.vmem [shape: f32[128,16], index: 5, kind: input, shape index: {}]
  %s6 = inlined_call_operand.vmem [shape: f32[1,16], index: 6, kind: input, shape index: {}]
  %s7 = inlined_call_operand.hbm [shape: f32[8,16], index: 7, kind: output, shape index: {}]
  %s8 = sld [smem:[#allocation0]]
  $region46: #{tpu_custom_call.1} parent=0
    _
  %s10 = ssub.s32 1, %s8
  %s11 = scalar_select 0, %s10, %s8
  $region1: #{tpu_custom_call.1} parent=0
    #allocation4 [shape = 'u8[262144]{0}', space=vmem, size = 0x40000, scoped, tag = 'input window, operand 2, single buffered']
    #allocation5 [shape = 's32[1]{0}', space=sflag, size = 0x4, scoped, tag = 'scoped memory for tpu_custom_call.1']
    #allocation6 [shape = 's32[1]{0}', space=sflag, size = 0x4, scoped, tag = 'scoped memory for tpu_custom_call.1']
    #allocation7 [shape = 'u8[524288]{0}', space=vmem, size = 0x80000, scoped, tag = 'input window, operand 3, single buffered']
    #allocation8 [shape = 's32[1]{0}', space=sflag, size = 0x4, scoped, tag = 'scoped memory for tpu_custom_call.1']
    #allocation9 [shape = 'u8[4096]{0}', space=vmem, size = 0x1000, scoped, tag = 'output window, operand 0, single buffered']
    %12 = vsyncpa [#allocation5], 0
    %13 = vsyncpa [#allocation8], 0
    %14 = vsyncpa [#allocation6], 0
    // Predicated region
    $region2: #{tpu_custom_call.1} parent=1 // pred_check
      _
    $region3: #{tpu_custom_call.1} parent=1 // pred_check_branch
      %16 = sbr.rel (0) target = $region5
    $region4: #{tpu_custom_call.1} parent=1 // pred_region
      _
    $region5: #{tpu_custom_call.1} parent=1 // pred_fallthru
      _
    // Predicated region
    $region6: #{tpu_custom_call.1} parent=1 // pred_check
      _
    $region7: #{tpu_custom_call.1} parent=1 // pred_check_branch
      %18 = sbr.rel (0) target = $region9
    $region8: #{tpu_custom_call.1} parent=1 // pred_region
      _
    $region9: #{tpu_custom_call.1} parent=1 // pred_fallthru
      _
    // Predicated region
    $region10: #{tpu_custom_call.1} parent=1 // pred_check
      _
    $region11: #{tpu_custom_call.1} parent=1 // pred_check_branch
      %20 = sbr.rel (0) target = $region13
    $region12: #{tpu_custom_call.1} parent=1 // pred_region
      %s22 = ssub.s32 8192, 8192
      %23 = vsyncadd [#allocation5], %s22
      %s24 = sshll.u32 [#allocation4], 4
      %s25 = int_to_ptr.vmem [resolvable:$true] %s24
      %30 = dma.hbm_to_vmem [thread:$0]  %s2, 8192, %s25, [#allocation5], 512, 512, 32
    $region13: #{tpu_custom_call.1} parent=1 // pred_fallthru
      _
    // Predicated region
    $region14: #{tpu_custom_call.1} parent=1 // pred_check
      _
    $region15: #{tpu_custom_call.1} parent=1 // pred_check_branch
      %32 = sbr.rel (0) target = $region17
    $region16: #{tpu_custom_call.1} parent=1 // pred_region
      %s34 = ssub.s32 16384, 16384
      %35 = vsyncadd [#allocation8], %s34
      %s36 = sshll.u32 [#allocation7], 4
      %s37 = int_to_ptr.vmem [resolvable:$true] %s36
      %42 = dma.hbm_to_vmem [thread:$0]  %s3, 16384, %s37, [#allocation8], 512, 512, 32
    $region17: #{tpu_custom_call.1} parent=1 // pred_fallthru
      _
    // Predicated region
    $region18: #{tpu_custom_call.1} parent=1 // pred_check
      _
    $region19: #{tpu_custom_call.1} parent=1 // pred_check_branch
      %44 = sbr.rel (0) target = $region21
    $region20: #{tpu_custom_call.1} parent=1 // pred_region
      _
    $region21: #{tpu_custom_call.1} parent=1 // pred_fallthru
      _
    // Predicated region
    $region22: #{tpu_custom_call.1} parent=1 // pred_check
      _
    $region23: #{tpu_custom_call.1} parent=1 // pred_check_branch
      %46 = sbr.rel (0) target = $region25
    $region24: #{tpu_custom_call.1} parent=1 // pred_region
      _
    $region25: #{tpu_custom_call.1} parent=1 // pred_fallthru
      _
    // Predicated region
    $region26: #{tpu_custom_call.1} parent=1 // pred_check
      _
    $region27: #{tpu_custom_call.1} parent=1 // pred_check_branch
      %48 = sbr.rel (0) target = $region29
    $region28: #{tpu_custom_call.1} parent=1 // pred_region
      _
    $region29: #{tpu_custom_call.1} parent=1 // pred_fallthru
      _
    // Predicated region
    $region30: #{tpu_custom_call.1} parent=1 // pred_check
      _
    $region31: #{tpu_custom_call.1} parent=1 // pred_check_branch
      %50 = sbr.rel (0) target = $region33
    $region32: #{tpu_custom_call.1} parent=1 // pred_region
      %51 = dma.done [#allocation5], 8192
    $region33: #{tpu_custom_call.1} parent=1 // pred_fallthru
      _
    // Predicated region
    $region34: #{tpu_custom_call.1} parent=1 // pred_check
      _
    $region35: #{tpu_custom_call.1} parent=1 // pred_check_branch
      %53 = sbr.rel (0) target = $region37
    $region36: #{tpu_custom_call.1} parent=1 // pred_region
      %54 = dma.done [#allocation8], 16384
    $region37: #{tpu_custom_call.1} parent=1 // pred_fallthru
      _
    %v55 = vld [vmem:[%s4] sm:$0xf]
    %v56 = vld [vmem:[%s0] sm:$0xff]
    %v57 = vld [vmem:[%s0 + $0x8] sm:$0xff]
    %v58 = vld [vmem:[%s0 + $0x10] sm:$0xff]
    %v59 = vld [vmem:[%s0 + $0x18] sm:$0xff]
    %v60 = vld [vmem:[%s0 + $0x20] sm:$0xff]
    %v61 = vld [vmem:[%s0 + $0x28] sm:$0xff]
    %v62 = vld [vmem:[%s0 + $0x30] sm:$0xff]
    %v63 = vld [vmem:[%s0 + $0x38] sm:$0xff]
    %v64 = vld [vmem:[%s1] sm:$0xff]
    %v65 = vld [vmem:[%s1 + $0x8] sm:$0xff]
    %v66 = vld [vmem:[%s1 + $0x10] sm:$0xff]
    %v67 = vld [vmem:[%s1 + $0x18] sm:$0xff]
    %v69 = vlaneseq
    %v70 = vshrl.u32 %v69, 7
    %v71 = vsub.s32 0, %v70
    %v72 = vrot.slane %v55, %v71
    %v73 = vlaneseq
    %v74 = vshrl.u32 %v73, 7
    %v75 = vsub.s32 1, %v74
    %v76 = vrot.slane %v55, %v75
    %v77 = vlaneseq
    %v78 = vshrl.u32 %v77, 7
    %v79 = vsub.s32 2, %v78
    %v80 = vrot.slane %v55, %v79
    %v81 = vlaneseq
    %v82 = vshrl.u32 %v81, 7
    %v83 = vsub.s32 3, %v82
    %v84 = vrot.slane %v55, %v83
    %vm89 = vcmask 64512
    %v91 = vsel %vm89, %v56, 0
    %v94 = vsel %vm89, %v57, 0
    %v97 = vsel %vm89, %v58, 0
    %v100 = vsel %vm89, %v59, 0
    %v103 = vsel %vm89, %v60, 0
    %v106 = vsel %vm89, %v61, 0
    %v109 = vsel %vm89, %v62, 0
    %v112 = vsel %vm89, %v63, 0
    %114 = vmatprep.subr.mxu0 %v65
    %115 = vmatpush1.msra.mxu0 %v64
    %116 = vmatprep.subr.mxu0 0.0
    %117 = vmatpush1.msra.mxu0 0.0
    %118 = vmatprep.subr.mxu0 0.0
    %119 = vmatpush1.msra.mxu0 0.0
    %120 = vmatprep.subr.mxu0 0.0
    %121 = vmatpush1.msra.mxu0 0.0
    %122 = vmatprep.subr.mxu0 0.0
    %123 = vmatpush1.msra.mxu0 0.0
    %124 = vmatprep.subr.mxu0 0.0
    %125 = vmatpush1.msra.mxu0 0.0
    %126 = vmatprep.subr.mxu0 0.0
    %127 = vmatpush1.msra.mxu0 0.0
    %128 = vmatprep.subr.mxu0 0.0
    %129 = vmatpush1.msra.mxu0 0.0
    %130 = vmatprep.subr.mxu0 0.0
    %131 = vmatpush1.msra.mxu0 0.0
    %132 = vmatprep.subr.mxu0 0.0
    %133 = vmatpush1.msra.mxu0 0.0
    %134 = vmatprep.subr.mxu0 0.0
    %135 = vmatpush1.msra.mxu0 0.0
    %136 = vmatprep.subr.mxu0 0.0
    %137 = vmatpush1.msra.mxu0 0.0
    %138 = vmatprep.subr.mxu0 0.0
    %139 = vmatpush1.msra.mxu0 0.0
    %140 = vmatprep.subr.mxu0 0.0
    %141 = vmatpush1.msra.mxu0 0.0
    %142 = vmatprep.subr.mxu0 0.0
    %143 = vmatpush1.msra.mxu0 0.0
    %144 = vmatprep.subr.mxu0 0.0
    %145 = vmatpush1.msra.mxu0 0.0
    %146 = vmatprep.subr.mxu0 0.0
    %147 = vmatpush1.msra.mxu0 0.0
    %148 = vmatprep.subr.mxu0 0.0
    %149 = vmatpush1.msra.mxu0 0.0
    %150 = vmatprep.subr.mxu0 0.0
    %151 = vmatpush1.msra.mxu0 0.0
    %152 = vmatprep.subr.mxu0 0.0
    %153 = vmatpush1.msra.mxu0 0.0
    %154 = vmatprep.subr.mxu0 0.0
    %155 = vmatpush1.msra.mxu0 0.0
    %156 = vmatprep.subr.mxu0 0.0
    %157 = vmatpush1.msra.mxu0 0.0
    %158 = vmatprep.subr.mxu0 0.0
    %159 = vmatpush1.msra.mxu0 0.0
    %160 = vmatprep.subr.mxu0 0.0
    %161 = vmatpush1.msra.mxu0 0.0
    %162 = vmatprep.subr.mxu0 0.0
    %163 = vmatpush1.msra.mxu0 0.0
    %164 = vmatprep.subr.mxu0 0.0
    %165 = vmatpush1.msra.mxu0 0.0
    %166 = vmatprep.subr.mxu0 0.0
    %167 = vmatpush1.msra.mxu0 0.0
    %168 = vmatprep.subr.mxu0 0.0
    %169 = vmatpush1.msra.mxu0 0.0
    %170 = vmatprep.subr.mxu0 0.0
    %171 = vmatpush1.msra.mxu0 0.0
    %172 = vmatprep.subr.mxu0 0.0
    %173 = vmatpush1.msra.mxu0 0.0
    %174 = vmatprep.subr.mxu0 0.0
    %175 = vmatpush1.msra.mxu0 0.0
    %176 = vmatprep.subr.mxu0 0.0
    %177 = vmatpush1.msra.mxu0 0.0
    %178 = vmatprep.mubr.f32.mxu0 0.0
    %179 = vmatmul.mubr.f32.gmra.mrb[0].mxu0 %v91
    %v180 = vpop.f32.mrb[0].mxu0
    %v181 = vadd.f32 %v72, %v180
    %v182 = vpop.f32.mrb[0].mxu0
    %v183 = vadd.f32 %v76, %v182
    %184 = vmatprep.mubr.f32.mxu0 0.0
    %185 = vmatmul.mubr.f32.gmra.mrb[0].mxu0 %v94
    %v186 = vpop.f32.mrb[0].mxu0
    %v187 = vadd.f32 %v72, %v186
    %v188 = vpop.f32.mrb[0].mxu0
    %v189 = vadd.f32 %v76, %v188
    %190 = vmatprep.mubr.f32.mxu0 0.0
    %191 = vmatmul.mubr.f32.gmra.mrb[0].mxu0 %v97
    %v192 = vpop.f32.mrb[0].mxu0
    %v193 = vadd.f32 %v72, %v192
    %v194 = vpop.f32.mrb[0].mxu0
    %v195 = vadd.f32 %v76, %v194
    %196 = vmatprep.mubr.f32.mxu0 0.0
    %197 = vmatmul.mubr.f32.gmra.mrb[0].mxu0 %v100
    %v198 = vpop.f32.mrb[0].mxu0
    %v199 = vadd.f32 %v72, %v198
    %v200 = vpop.f32.mrb[0].mxu0
    %v201 = vadd.f32 %v76, %v200
    %202 = vmatprep.mubr.f32.mxu0 0.0
    %203 = vmatmul.mubr.f32.gmra.mrb[0].mxu0 %v103
    %v204 = vpop.f32.mrb[0].mxu0
    %v205 = vadd.f32 %v72, %v204
    %v206 = vpop.f32.mrb[0].mxu0
    %v207 = vadd.f32 %v76, %v206
    %208 = vmatprep.mubr.f32.mxu0 0.0
    %209 = vmatmul.mubr.f32.gmra.mrb[0].mxu0 %v106
    %v210 = vpop.f32.mrb[0].mxu0
    %v211 = vadd.f32 %v72, %v210
    %v212 = vpop.f32.mrb[0].mxu0
    %v213 = vadd.f32 %v76, %v212
    %214 = vmatprep.mubr.f32.mxu0 0.0
    %215 = vmatmul.mubr.f32.gmra.mrb[0].mxu0 %v109
    %v216 = vpop.f32.mrb[0].mxu0
    %v217 = vadd.f32 %v72, %v216
    %v218 = vpop.f32.mrb[0].mxu0
    %v219 = vadd.f32 %v76, %v218
    %220 = vmatprep.mubr.f32.mxu0 0.0
    %221 = vmatmul.mubr.f32.gmra.mrb[0].mxu0 %v112
    %v222 = vpop.f32.mrb[0].mxu0
    %v223 = vadd.f32 %v72, %v222
    %v224 = vpop.f32.mrb[0].mxu0
    %v225 = vadd.f32 %v76, %v224
    %226 = vdwg.mxu0
    %227 = vmatprep.subr.mxu0 %v67
    %228 = vmatpush1.msra.mxu0 %v66
    %229 = vmatprep.subr.mxu0 0.0
    %230 = vmatpush1.msra.mxu0 0.0
    %231 = vmatprep.subr.mxu0 0.0
    %232 = vmatpush1.msra.mxu0 0.0
    %233 = vmatprep.subr.mxu0 0.0
    %234 = vmatpush1.msra.mxu0 0.0
    %235 = vmatprep.subr.mxu0 0.0
    %236 = vmatpush1.msra.mxu0 0.0
    %237 = vmatprep.subr.mxu0 0.0
    %238 = vmatpush1.msra.mxu0 0.0
    %239 = vmatprep.subr.mxu0 0.0
    %240 = vmatpush1.msra.mxu0 0.0
    %241 = vmatprep.subr.mxu0 0.0
    %242 = vmatpush1.msra.mxu0 0.0
    %243 = vmatprep.subr.mxu0 0.0
    %244 = vmatpush1.msra.mxu0 0.0
    %245 = vmatprep.subr.mxu0 0.0
    %246 = vmatpush1.msra.mxu0 0.0
    %247 = vmatprep.subr.mxu0 0.0
    %248 = vmatpush1.msra.mxu0 0.0
    %249 = vmatprep.subr.mxu0 0.0
    %250 = vmatpush1.msra.mxu0 0.0
    %251 = vmatprep.subr.mxu0 0.0
    %252 = vmatpush1.msra.mxu0 0.0
    %253 = vmatprep.subr.mxu0 0.0
    %254 = vmatpush1.msra.mxu0 0.0
    %255 = vmatprep.subr.mxu0 0.0
    %256 = vmatpush1.msra.mxu0 0.0
    %257 = vmatprep.subr.mxu0 0.0
    %258 = vmatpush1.msra.mxu0 0.0
    %259 = vmatprep.subr.mxu0 0.0
    %260 = vmatpush1.msra.mxu0 0.0
    %261 = vmatprep.subr.mxu0 0.0
    %262 = vmatpush1.msra.mxu0 0.0
    %263 = vmatprep.subr.mxu0 0.0
    %264 = vmatpush1.msra.mxu0 0.0
    %265 = vmatprep.subr.mxu0 0.0
    %266 = vmatpush1.msra.mxu0 0.0
    %267 = vmatprep.subr.mxu0 0.0
    %268 = vmatpush1.msra.mxu0 0.0
    %269 = vmatprep.subr.mxu0 0.0
    %270 = vmatpush1.msra.mxu0 0.0
    %271 = vmatprep.subr.mxu0 0.0
    %272 = vmatpush1.msra.mxu0 0.0
    %273 = vmatprep.subr.mxu0 0.0
    %274 = vmatpush1.msra.mxu0 0.0
    %275 = vmatprep.subr.mxu0 0.0
    %276 = vmatpush1.msra.mxu0 0.0
    %277 = vmatprep.subr.mxu0 0.0
    %278 = vmatpush1.msra.mxu0 0.0
    %279 = vmatprep.subr.mxu0 0.0
    %280 = vmatpush1.msra.mxu0 0.0
    %281 = vmatprep.subr.mxu0 0.0
    %282 = vmatpush1.msra.mxu0 0.0
    %283 = vmatprep.subr.mxu0 0.0
    %284 = vmatpush1.msra.mxu0 0.0
    %285 = vmatprep.subr.mxu0 0.0
    %286 = vmatpush1.msra.mxu0 0.0
    %287 = vmatprep.subr.mxu0 0.0
    %288 = vmatpush1.msra.mxu0 0.0
    %289 = vmatprep.subr.mxu0 0.0
    %290 = vmatpush1.msra.mxu0 0.0
    %291 = vmatprep.mubr.f32.mxu0 0.0
    %292 = vmatmul.mubr.f32.gmra.mrb[0].mxu0 %v91
    %v293 = vpop.f32.mrb[0].mxu0
    %v294 = vadd.f32 %v80, %v293
    %v295 = vpop.f32.mrb[0].mxu0
    %v296 = vadd.f32 %v84, %v295
    %297 = vmatprep.mubr.f32.mxu0 0.0
    %298 = vmatmul.mubr.f32.gmra.mrb[0].mxu0 %v94
    %v299 = vpop.f32.mrb[0].mxu0
    %v300 = vadd.f32 %v80, %v299
    %v301 = vpop.f32.mrb[0].mxu0
    %v302 = vadd.f32 %v84, %v301
    %303 = vmatprep.mubr.f32.mxu0 0.0
    %304 = vmatmul.mubr.f32.gmra.mrb[0].mxu0 %v97
    %v305 = vpop.f32.mrb[0].mxu0
    %v306 = vadd.f32 %v80, %v305
    %v307 = vpop.f32.mrb[0].mxu0
    %v308 = vadd.f32 %v84, %v307
    %309 = vmatprep.mubr.f32.mxu0 0.0
    %310 = vmatmul.mubr.f32.gmra.mrb[0].mxu0 %v100
    %v311 = vpop.f32.mrb[0].mxu0
    %v312 = vadd.f32 %v80, %v311
    %v313 = vpop.f32.mrb[0].mxu0
    %v314 = vadd.f32 %v84, %v313
    %315 = vmatprep.mubr.f32.mxu0 0.0
    %316 = vmatmul.mubr.f32.gmra.mrb[0].mxu0 %v103
    %v317 = vpop.f32.mrb[0].mxu0
    %v318 = vadd.f32 %v80, %v317
    %v319 = vpop.f32.mrb[0].mxu0
    %v320 = vadd.f32 %v84, %v319
    %321 = vmatprep.mubr.f32.mxu0 0.0
    %322 = vmatmul.mubr.f32.gmra.mrb[0].mxu0 %v106
    %v323 = vpop.f32.mrb[0].mxu0
    %v324 = vadd.f32 %v80, %v323
    %v325 = vpop.f32.mrb[0].mxu0
    %v326 = vadd.f32 %v84, %v325
    %327 = vmatprep.mubr.f32.mxu0 0.0
    %328 = vmatmul.mubr.f32.gmra.mrb[0].mxu0 %v109
    %v329 = vpop.f32.mrb[0].mxu0
    %v330 = vadd.f32 %v80, %v329
    %v331 = vpop.f32.mrb[0].mxu0
    %v332 = vadd.f32 %v84, %v331
    %333 = vmatprep.mubr.f32.mxu0 0.0
    %334 = vmatmul.mubr.f32.gmra.mrb[0].mxu0 %v112
    %v335 = vpop.f32.mrb[0].mxu0
    %v336 = vadd.f32 %v80, %v335
    %v337 = vpop.f32.mrb[0].mxu0
    %v338 = vadd.f32 %v84, %v337
    %339 = vdwg.mxu0
    %340 = vst [vmem:[#allocation3] sm:$0xff] %v181
    %341 = vst [vmem:[#allocation3 + $0x8] sm:$0xff] %v183
    %342 = vst [vmem:[#allocation3 + $0x10] sm:$0xff] %v294
    %343 = vst [vmem:[#allocation3 + $0x18] sm:$0xff] %v296
    %344 = vst [vmem:[#allocation3 + $0x20] sm:$0xff] %v187
    %345 = vst [vmem:[#allocation3 + $0x28] sm:$0xff] %v189
    %346 = vst [vmem:[#allocation3 + $0x30] sm:$0xff] %v300
    %347 = vst [vmem:[#allocation3 + $0x38] sm:$0xff] %v302
    %348 = vst [vmem:[#allocation3 + $0x40] sm:$0xff] %v193
    %349 = vst [vmem:[#allocation3 + $0x48] sm:$0xff] %v195
    %350 = vst [vmem:[#allocation3 + $0x50] sm:$0xff] %v306
    %351 = vst [vmem:[#allocation3 + $0x58] sm:$0xff] %v308
    %352 = vst [vmem:[#allocation3 + $0x60] sm:$0xff] %v199
    %353 = vst [vmem:[#allocation3 + $0x68] sm:$0xff] %v201
    %354 = vst [vmem:[#allocation3 + $0x70] sm:$0xff] %v312
    %355 = vst [vmem:[#allocation3 + $0x78] sm:$0xff] %v314
    %356 = vst [vmem:[#allocation3 + $0x80] sm:$0xff] %v205
    %357 = vst [vmem:[#allocation3 + $0x88] sm:$0xff] %v207
    %358 = vst [vmem:[#allocation3 + $0x90] sm:$0xff] %v318
    %359 = vst [vmem:[#allocation3 + $0x98] sm:$0xff] %v320
    %360 = vst [vmem:[#allocation3 + $0xa0] sm:$0xff] %v211
    %361 = vst [vmem:[#allocation3 + $0xa8] sm:$0xff] %v213
    %362 = vst [vmem:[#allocation3 + $0xb0] sm:$0xff] %v324
    %363 = vst [vmem:[#allocation3 + $0xb8] sm:$0xff] %v326
    %364 = vst [vmem:[#allocation3 + $0xc0] sm:$0xff] %v217
    %365 = vst [vmem:[#allocation3 + $0xc8] sm:$0xff] %v219
    %366 = vst [vmem:[#allocation3 + $0xd0] sm:$0xff] %v330
    %367 = vst [vmem:[#allocation3 + $0xd8] sm:$0xff] %v332
    %368 = vst [vmem:[#allocation3 + $0xe0] sm:$0xff] %v223
    %369 = vst [vmem:[#allocation3 + $0xe8] sm:$0xff] %v225
    %370 = vst [vmem:[#allocation3 + $0xf0] sm:$0xff] %v336
    %371 = vst [vmem:[#allocation3 + $0xf8] sm:$0xff] %v338
    %s372 = smul.u32 0, 4
    %s373 = smul.addr %s372, 8
    %s374 = scalar_lea.vmem [#allocation3], %s373
    %v375 = vld [vmem:[%s374] sm:$0xff]
    %v376 = vld [vmem:[%s374 + $0x8] sm:$0xff]
    %v377 = vld [vmem:[%s374 + $0x10] sm:$0xff]
    %v378 = vld [vmem:[%s374 + $0x18] sm:$0xff]
    %v379 = vld [vmem:[#allocation7] sm:$0xff]
    %v380 = vld [vmem:[#allocation7 + $0x8] sm:$0xff]
    %v381 = vld [vmem:[#allocation7 + $0x10] sm:$0xff]
    %v382 = vld [vmem:[#allocation7 + $0x18] sm:$0xff]
    %v383 = vld [vmem:[#allocation7 + $0x20] sm:$0xff]
    %v384 = vld [vmem:[#allocation7 + $0x28] sm:$0xff]
    %v385 = vld [vmem:[#allocation7 + $0x30] sm:$0xff]
    %v386 = vld [vmem:[#allocation7 + $0x38] sm:$0xff]
    %v387 = vld [vmem:[#allocation7 + $0x40] sm:$0xff]
    %v388 = vld [vmem:[#allocation7 + $0x48] sm:$0xff]
    %v389 = vld [vmem:[#allocation7 + $0x50] sm:$0xff]
    %v390 = vld [vmem:[#allocation7 + $0x58] sm:$0xff]
    %v391 = vld [vmem:[#allocation7 + $0x60] sm:$0xff]
    %v392 = vld [vmem:[#allocation7 + $0x68] sm:$0xff]
    %v393 = vld [vmem:[#allocation7 + $0x70] sm:$0xff]
    %v394 = vld [vmem:[#allocation7 + $0x78] sm:$0xff]
    %v395 = vld [vmem:[#allocation7 + $0x80] sm:$0xff]
    %v396 = vld [vmem:[#allocation7 + $0x88] sm:$0xff]
    %v397 = vld [vmem:[#allocation7 + $0x90] sm:$0xff]
    %v398 = vld [vmem:[#allocation7 + $0x98] sm:$0xff]
    %v399 = vld [vmem:[#allocation7 + $0xa0] sm:$0xff]
    %v400 = vld [vmem:[#allocation7 + $0xa8] sm:$0xff]
    %v401 = vld [vmem:[#allocation7 + $0xb0] sm:$0xff]
    %v402 = vld [vmem:[#allocation7 + $0xb8] sm:$0xff]
    %v403 = vld [vmem:[#allocation7 + $0xc0] sm:$0xff]
    %v404 = vld [vmem:[#allocation7 + $0xc8] sm:$0xff]
    %v405 = vld [vmem:[#allocation7 + $0xd0] sm:$0xff]
    %v406 = vld [vmem:[#allocation7 + $0xd8] sm:$0xff]
    %v407 = vld [vmem:[#allocation7 + $0xe0] sm:$0xff]
    %v408 = vld [vmem:[#allocation7 + $0xe8] sm:$0xff]
    %v409 = vld [vmem:[#allocation7 + $0xf0] sm:$0xff]
    %v410 = vld [vmem:[#allocation7 + $0xf8] sm:$0xff]
    %v411 = vld [vmem:[#allocation7 + $0x100] sm:$0xff]
    %v412 = vld [vmem:[#allocation7 + $0x108] sm:$0xff]
    %v413 = vld [vmem:[#allocation7 + $0x110] sm:$0xff]
    %v414 = vld [vmem:[#allocation7 + $0x118] sm:$0xff]
    %v415 = vld [vmem:[#allocation7 + $0x120] sm:$0xff]
    %v416 = vld [vmem:[#allocation7 + $0x128] sm:$0xff]
    %v417 = vld [vmem:[#allocation7 + $0x130] sm:$0xff]
    %v418 = vld [vmem:[#allocation7 + $0x138] sm:$0xff]
    %v419 = vld [vmem:[#allocation7 + $0x140] sm:$0xff]
    %v420 = vld [vmem:[#allocation7 + $0x148] sm:$0xff]
    %v421 = vld [vmem:[#allocation7 + $0x150] sm:$0xff]
    %v422 = vld [vmem:[#allocation7 + $0x158] sm:$0xff]
    %v423 = vld [vmem:[#allocation7 + $0x160] sm:$0xff]
    %v424 = vld [vmem:[#allocation7 + $0x168] sm:$0xff]
    %v425 = vld [vmem:[#allocation7 + $0x170] sm:$0xff]
    %v426 = vld [vmem:[#allocation7 + $0x178] sm:$0xff]
    %v427 = vld [vmem:[#allocation7 + $0x180] sm:$0xff]
    %v428 = vld [vmem:[#allocation7 + $0x188] sm:$0xff]
    %v429 = vld [vmem:[#allocation7 + $0x190] sm:$0xff]
    %v430 = vld [vmem:[#allocation7 + $0x198] sm:$0xff]
    %v431 = vld [vmem:[#allocation7 + $0x1a0] sm:$0xff]
    %v432 = vld [vmem:[#allocation7 + $0x1a8] sm:$0xff]
    %v433 = vld [vmem:[#allocation7 + $0x1b0] sm:$0xff]
    %v434 = vld [vmem:[#allocation7 + $0x1b8] sm:$0xff]
    %v435 = vld [vmem:[#allocation7 + $0x1c0] sm:$0xff]
    %v436 = vld [vmem:[#allocation7 + $0x1c8] sm:$0xff]
    %v437 = vld [vmem:[#allocation7 + $0x1d0] sm:$0xff]
    %v438 = vld [vmem:[#allocation7 + $0x1d8] sm:$0xff]
    %v439 = vld [vmem:[#allocation7 + $0x1e0] sm:$0xff]
    %v440 = vld [vmem:[#allocation7 + $0x1e8] sm:$0xff]
    %v441 = vld [vmem:[#allocation7 + $0x1f0] sm:$0xff]
    %v442 = vld [vmem:[#allocation7 + $0x1f8] sm:$0xff]
    %443 = vmatprep.subr.mxu0 %v380
    %444 = vmatpush1.msra.mxu0 %v379
    %445 = vmatprep.subr.mxu0 %v384
    %446 = vmatpush1.msra.mxu0 %v383
    %447 = vmatprep.subr.mxu0 %v388
    %448 = vmatpush1.msra.mxu0 %v387
    %449 = vmatprep.subr.mxu0 %v392
    %450 = vmatpush1.msra.mxu0 %v391
    %451 = vmatprep.subr.mxu0 %v396
    %452 = vmatpush1.msra.mxu0 %v395
    %453 = vmatprep.subr.mxu0 %v400
    %454 = vmatpush1.msra.mxu0 %v399
    %455 = vmatprep.subr.mxu0 %v404
    %456 = vmatpush1.msra.mxu0 %v403
    %457 = vmatprep.subr.mxu0 %v408
    %458 = vmatpush1.msra.mxu0 %v407
    %459 = vmatprep.subr.mxu0 %v412
    %460 = vmatpush1.msra.mxu0 %v411
    %461 = vmatprep.subr.mxu0 %v416
    %462 = vmatpush1.msra.mxu0 %v415
    %463 = vmatprep.subr.mxu0 %v420
    %464 = vmatpush1.msra.mxu0 %v419
    %465 = vmatprep.subr.mxu0 %v424
    %466 = vmatpush1.msra.mxu0 %v423
    %467 = vmatprep.subr.mxu0 %v428
    %468 = vmatpush1.msra.mxu0 %v427
    %469 = vmatprep.subr.mxu0 %v432
    %470 = vmatpush1.msra.mxu0 %v431
    %471 = vmatprep.subr.mxu0 %v436
    %472 = vmatpush1.msra.mxu0 %v435
    %473 = vmatprep.subr.mxu0 %v440
    %474 = vmatpush1.msra.mxu0 %v439
    %475 = vmatprep.subr.mxu0 0.0
    %476 = vmatpush1.msra.mxu0 0.0
    %477 = vmatprep.subr.mxu0 0.0
    %478 = vmatpush1.msra.mxu0 0.0
    %479 = vmatprep.subr.mxu0 0.0
    %480 = vmatpush1.msra.mxu0 0.0
    %481 = vmatprep.subr.mxu0 0.0
    %482 = vmatpush1.msra.mxu0 0.0
    %483 = vmatprep.subr.mxu0 0.0
    %484 = vmatpush1.msra.mxu0 0.0
    %485 = vmatprep.subr.mxu0 0.0
    %486 = vmatpush1.msra.mxu0 0.0
    %487 = vmatprep.subr.mxu0 0.0
    %488 = vmatpush1.msra.mxu0 0.0
    %489 = vmatprep.subr.mxu0 0.0
    %490 = vmatpush1.msra.mxu0 0.0
    %491 = vmatprep.subr.mxu0 0.0
    %492 = vmatpush1.msra.mxu0 0.0
    %493 = vmatprep.subr.mxu0 0.0
    %494 = vmatpush1.msra.mxu0 0.0
    %495 = vmatprep.subr.mxu0 0.0
    %496 = vmatpush1.msra.mxu0 0.0
    %497 = vmatprep.subr.mxu0 0.0
    %498 = vmatpush1.msra.mxu0 0.0
    %499 = vmatprep.subr.mxu0 0.0
    %500 = vmatpush1.msra.mxu0 0.0
    %501 = vmatprep.subr.mxu0 0.0
    %502 = vmatpush1.msra.mxu0 0.0
    %503 = vmatprep.subr.mxu0 0.0
    %504 = vmatpush1.msra.mxu0 0.0
    %505 = vmatprep.subr.mxu0 0.0
    %506 = vmatpush1.msra.mxu0 0.0
    %507 = vmatprep.mubr.f32.mxu0 0.0
    %508 = vmatmul.mubr.f32.gmra.mrb[0].mxu0 0.0
    %v509 = vpop.f32.mrb[0].mxu0
    %v510 = vadd.f32 0.0, %v509
    %v511 = vpop.f32.mrb[0].mxu0
    %v512 = vadd.f32 0.0, %v511
    %513 = vdwg.mxu0
    %514 = vmatprep.subr.mxu0 %v382
    %515 = vmatpush1.msra.mxu0 %v381
    %516 = vmatprep.subr.mxu0 %v386
    %517 = vmatpush1.msra.mxu0 %v385
    %518 = vmatprep.subr.mxu0 %v390
    %519 = vmatpush1.msra.mxu0 %v389
    %520 = vmatprep.subr.mxu0 %v394
    %521 = vmatpush1.msra.mxu0 %v393
    %522 = vmatprep.subr.mxu0 %v398
    %523 = vmatpush1.msra.mxu0 %v397
    %524 = vmatprep.subr.mxu0 %v402
    %525 = vmatpush1.msra.mxu0 %v401
    %526 = vmatprep.subr.mxu0 %v406
    %527 = vmatpush1.msra.mxu0 %v405
    %528 = vmatprep.subr.mxu0 %v410
    %529 = vmatpush1.msra.mxu0 %v409
    %530 = vmatprep.subr.mxu0 %v414
    %531 = vmatpush1.msra.mxu0 %v413
    %532 = vmatprep.subr.mxu0 %v418
    %533 = vmatpush1.msra.mxu0 %v417
    %534 = vmatprep.subr.mxu0 %v422
    %535 = vmatpush1.msra.mxu0 %v421
    %536 = vmatprep.subr.mxu0 %v426
    %537 = vmatpush1.msra.mxu0 %v425
    %538 = vmatprep.subr.mxu0 %v430
    %539 = vmatpush1.msra.mxu0 %v429
    %540 = vmatprep.subr.mxu0 %v434
    %541 = vmatpush1.msra.mxu0 %v433
    %542 = vmatprep.subr.mxu0 %v438
    %543 = vmatpush1.msra.mxu0 %v437
    %544 = vmatprep.subr.mxu0 %v442
    %545 = vmatpush1.msra.mxu0 %v441
    %546 = vmatprep.subr.mxu0 0.0
    %547 = vmatpush1.msra.mxu0 0.0
    %548 = vmatprep.subr.mxu0 0.0
    %549 = vmatpush1.msra.mxu0 0.0
    %550 = vmatprep.subr.mxu0 0.0
    %551 = vmatpush1.msra.mxu0 0.0
    %552 = vmatprep.subr.mxu0 0.0
    %553 = vmatpush1.msra.mxu0 0.0
    %554 = vmatprep.subr.mxu0 0.0
    %555 = vmatpush1.msra.mxu0 0.0
    %556 = vmatprep.subr.mxu0 0.0
    %557 = vmatpush1.msra.mxu0 0.0
    %558 = vmatprep.subr.mxu0 0.0
    %559 = vmatpush1.msra.mxu0 0.0
    %560 = vmatprep.subr.mxu0 0.0
    %561 = vmatpush1.msra.mxu0 0.0
    %562 = vmatprep.subr.mxu0 0.0
    %563 = vmatpush1.msra.mxu0 0.0
    %564 = vmatprep.subr.mxu0 0.0
    %565 = vmatpush1.msra.mxu0 0.0
    %566 = vmatprep.subr.mxu0 0.0
    %567 = vmatpush1.msra.mxu0 0.0
    %568 = vmatprep.subr.mxu0 0.0
    %569 = vmatpush1.msra.mxu0 0.0
    %570 = vmatprep.subr.mxu0 0.0
    %571 = vmatpush1.msra.mxu0 0.0
    %572 = vmatprep.subr.mxu0 0.0
    %573 = vmatpush1.msra.mxu0 0.0
    %574 = vmatprep.subr.mxu0 0.0
    %575 = vmatpush1.msra.mxu0 0.0
    %576 = vmatprep.subr.mxu0 0.0
    %577 = vmatpush1.msra.mxu0 0.0
    %578 = vmatprep.mubr.f32.mxu0 0.0
    %579 = vmatmul.mubr.f32.gmra.mrb[0].mxu0 0.0
    %v580 = vpop.f32.mrb[0].mxu0
    %v581 = vadd.f32 0.0, %v580
    %v582 = vpop.f32.mrb[0].mxu0
    %v583 = vadd.f32 0.0, %v582
    %584 = vdwg.mxu0
    %v585 = vadd.f32 %v375, %v510
    %v586 = vadd.f32 %v376, %v512
    %v587 = vadd.f32 %v377, %v581
    %v588 = vadd.f32 %v378, %v583
    %v589 = vxor.u32 %v585, 2147483648
    %v590 = vmul.f32 %v589, 1.442695
    %v591 = vpow.pop %v590
    %v592 = vadd.f32 %v591, 1.0
    %v593 = vrcp.pop %v592
    %v594 = vmul.f32 1.0, %v593
    %v595 = vxor.u32 %v586, 2147483648
    %v596 = vmul.f32 %v595, 1.442695
    %v597 = vpow.pop %v596
    %v598 = vadd.f32 %v597, 1.0
    %v599 = vrcp.pop %v598
    %v600 = vmul.f32 1.0, %v599
    %v601 = vtanh.pop %v587
    %v602 = vxor.u32 %v588, 2147483648
    %v603 = vmul.f32 %v602, 1.442695
    %v604 = vpow.pop %v603
    %v605 = vadd.f32 %v604, 1.0
    %v606 = vrcp.pop %v605
    %v607 = vmul.f32 1.0, %v606
    %v608 = vmul.f32 %v600, 0.0
    %v609 = vmul.f32 %v594, %v601
    %v610 = vadd.f32 %v608, %v609
    %v611 = vtanh.pop %v610
    %v612 = vmul.f32 %v607, %v611
    %613 = vst [vmem:[#allocation2] sm:$0xff] %v612
    %s614 = smul.u32 1, 4
    %s615 = smul.addr %s614, 8
    %s616 = scalar_lea.vmem [#allocation3], %s615
    %v617 = vld [vmem:[%s616] sm:$0xff]
    %v618 = vld [vmem:[%s616 + $0x8] sm:$0xff]
    %v619 = vld [vmem:[%s616 + $0x10] sm:$0xff]
    %v620 = vld [vmem:[%s616 + $0x18] sm:$0xff]
    %v621 = vld [vmem:[#allocation7] sm:$0xff]
    %v622 = vld [vmem:[#allocation7 + $0x8] sm:$0xff]
    %v623 = vld [vmem:[#allocation7 + $0x10] sm:$0xff]
    %v624 = vld [vmem:[#allocation7 + $0x18] sm:$0xff]
    %v625 = vld [vmem:[#allocation7 + $0x20] sm:$0xff]
    %v626 = vld [vmem:[#allocation7 + $0x28] sm:$0xff]
    %v627 = vld [vmem:[#allocation7 + $0x30] sm:$0xff]
    %v628 = vld [vmem:[#allocation7 + $0x38] sm:$0xff]
    %v629 = vld [vmem:[#allocation7 + $0x40] sm:$0xff]
    %v630 = vld [vmem:[#allocation7 + $0x48] sm:$0xff]
    %v631 = vld [vmem:[#allocation7 + $0x50] sm:$0xff]
    %v632 = vld [vmem:[#allocation7 + $0x58] sm:$0xff]
    %v633 = vld [vmem:[#allocation7 + $0x60] sm:$0xff]
    %v634 = vld [vmem:[#allocation7 + $0x68] sm:$0xff]
    %v635 = vld [vmem:[#allocation7 + $0x70] sm:$0xff]
    %v636 = vld [vmem:[#allocation7 + $0x78] sm:$0xff]
    %v637 = vld [vmem:[#allocation7 + $0x80] sm:$0xff]
    %v638 = vld [vmem:[#allocation7 + $0x88] sm:$0xff]
    %v639 = vld [vmem:[#allocation7 + $0x90] sm:$0xff]
    %v640 = vld [vmem:[#allocation7 + $0x98] sm:$0xff]
    %v641 = vld [vmem:[#allocation7 + $0xa0] sm:$0xff]
    %v642 = vld [vmem:[#allocation7 + $0xa8] sm:$0xff]
    %v643 = vld [vmem:[#allocation7 + $0xb0] sm:$0xff]
    %v644 = vld [vmem:[#allocation7 + $0xb8] sm:$0xff]
    %v645 = vld [vmem:[#allocation7 + $0xc0] sm:$0xff]
    %v646 = vld [vmem:[#allocation7 + $0xc8] sm:$0xff]
    %v647 = vld [vmem:[#allocation7 + $0xd0] sm:$0xff]
    %v648 = vld [vmem:[#allocation7 + $0xd8] sm:$0xff]
    %v649 = vld [vmem:[#allocation7 + $0xe0] sm:$0xff]
    %v650 = vld [vmem:[#allocation7 + $0xe8] sm:$0xff]
    %v651 = vld [vmem:[#allocation7 + $0xf0] sm:$0xff]
    %v652 = vld [vmem:[#allocation7 + $0xf8] sm:$0xff]
    %v653 = vld [vmem:[#allocation7 + $0x100] sm:$0xff]
    %v654 = vld [vmem:[#allocation7 + $0x108] sm:$0xff]
    %v655 = vld [vmem:[#allocation7 + $0x110] sm:$0xff]
    %v656 = vld [vmem:[#allocation7 + $0x118] sm:$0xff]
    %v657 = vld [vmem:[#allocation7 + $0x120] sm:$0xff]
    %v658 = vld [vmem:[#allocation7 + $0x128] sm:$0xff]
    %v659 = vld [vmem:[#allocation7 + $0x130] sm:$0xff]
    %v660 = vld [vmem:[#allocation7 + $0x138] sm:$0xff]
    %v661 = vld [vmem:[#allocation7 + $0x140] sm:$0xff]
    %v662 = vld [vmem:[#allocation7 + $0x148] sm:$0xff]
    %v663 = vld [vmem:[#allocation7 + $0x150] sm:$0xff]
    %v664 = vld [vmem:[#allocation7 + $0x158] sm:$0xff]
    %v665 = vld [vmem:[#allocation7 + $0x160] sm:$0xff]
    %v666 = vld [vmem:[#allocation7 + $0x168] sm:$0xff]
    %v667 = vld [vmem:[#allocation7 + $0x170] sm:$0xff]
    %v668 = vld [vmem:[#allocation7 + $0x178] sm:$0xff]
    %v669 = vld [vmem:[#allocation7 + $0x180] sm:$0xff]
    %v670 = vld [vmem:[#allocation7 + $0x188] sm:$0xff]
    %v671 = vld [vmem:[#allocation7 + $0x190] sm:$0xff]
    %v672 = vld [vmem:[#allocation7 + $0x198] sm:$0xff]
    %v673 = vld [vmem:[#allocation7 + $0x1a0] sm:$0xff]
    %v674 = vld [vmem:[#allocation7 + $0x1a8] sm:$0xff]
    %v675 = vld [vmem:[#allocation7 + $0x1b0] sm:$0xff]
    %v676 = vld [vmem:[#allocation7 + $0x1b8] sm:$0xff]
    %v677 = vld [vmem:[#allocation7 + $0x1c0] sm:$0xff]
    %v678 = vld [vmem:[#allocation7 + $0x1c8] sm:$0xff]
    %v679 = vld [vmem:[#allocation7 + $0x1d0] sm:$0xff]
    %v680 = vld [vmem:[#allocation7 + $0x1d8] sm:$0xff]
    %v681 = vld [vmem:[#allocation7 + $0x1e0] sm:$0xff]
    %v682 = vld [vmem:[#allocation7 + $0x1e8] sm:$0xff]
    %v683 = vld [vmem:[#allocation7 + $0x1f0] sm:$0xff]
    %v684 = vld [vmem:[#allocation7 + $0x1f8] sm:$0xff]
    %685 = vmatprep.subr.mxu0 %v622
    %686 = vmatpush1.msra.mxu0 %v621
    %687 = vmatprep.subr.mxu0 %v626
    %688 = vmatpush1.msra.mxu0 %v625
    %689 = vmatprep.subr.mxu0 %v630
    %690 = vmatpush1.msra.mxu0 %v629
    %691 = vmatprep.subr.mxu0 %v634
    %692 = vmatpush1.msra.mxu0 %v633
    %693 = vmatprep.subr.mxu0 %v638
    %694 = vmatpush1.msra.mxu0 %v637
    %695 = vmatprep.subr.mxu0 %v642
    %696 = vmatpush1.msra.mxu0 %v641
    %697 = vmatprep.subr.mxu0 %v646
    %698 = vmatpush1.msra.mxu0 %v645
    %699 = vmatprep.subr.mxu0 %v650
    %700 = vmatpush1.msra.mxu0 %v649
    %701 = vmatprep.subr.mxu0 %v654
    %702 = vmatpush1.msra.mxu0 %v653
    %703 = vmatprep.subr.mxu0 %v658
    %704 = vmatpush1.msra.mxu0 %v657
    %705 = vmatprep.subr.mxu0 %v662
    %706 = vmatpush1.msra.mxu0 %v661
    %707 = vmatprep.subr.mxu0 %v666
    %708 = vmatpush1.msra.mxu0 %v665
    %709 = vmatprep.subr.mxu0 %v670
    %710 = vmatpush1.msra.mxu0 %v669
    %711 = vmatprep.subr.mxu0 %v674
    %712 = vmatpush1.msra.mxu0 %v673
    %713 = vmatprep.subr.mxu0 %v678
    %714 = vmatpush1.msra.mxu0 %v677
    %715 = vmatprep.subr.mxu0 %v682
    %716 = vmatpush1.msra.mxu0 %v681
    %717 = vmatprep.subr.mxu0 0.0
    %718 = vmatpush1.msra.mxu0 0.0
    %719 = vmatprep.subr.mxu0 0.0
    %720 = vmatpush1.msra.mxu0 0.0
    %721 = vmatprep.subr.mxu0 0.0
    %722 = vmatpush1.msra.mxu0 0.0
    %723 = vmatprep.subr.mxu0 0.0
    %724 = vmatpush1.msra.mxu0 0.0
    %725 = vmatprep.subr.mxu0 0.0
    %726 = vmatpush1.msra.mxu0 0.0
    %727 = vmatprep.subr.mxu0 0.0
    %728 = vmatpush1.msra.mxu0 0.0
    %729 = vmatprep.subr.mxu0 0.0
    %730 = vmatpush1.msra.mxu0 0.0
    %731 = vmatprep.subr.mxu0 0.0
    %732 = vmatpush1.msra.mxu0 0.0
    %733 = vmatprep.subr.mxu0 0.0
    %734 = vmatpush1.msra.mxu0 0.0
    %735 = vmatprep.subr.mxu0 0.0
    %736 = vmatpush1.msra.mxu0 0.0
    %737 = vmatprep.subr.mxu0 0.0
    %738 = vmatpush1.msra.mxu0 0.0
    %739 = vmatprep.subr.mxu0 0.0
    %740 = vmatpush1.msra.mxu0 0.0
    %741 = vmatprep.subr.mxu0 0.0
    %742 = vmatpush1.msra.mxu0 0.0
    %743 = vmatprep.subr.mxu0 0.0
    %744 = vmatpush1.msra.mxu0 0.0
    %745 = vmatprep.subr.mxu0 0.0
    %746 = vmatpush1.msra.mxu0 0.0
    %747 = vmatprep.subr.mxu0 0.0
    %748 = vmatpush1.msra.mxu0 0.0
    %749 = vmatprep.mubr.f32.mxu0 0.0
    %750 = vmatmul.mubr.f32.gmra.mrb[0].mxu0 %v612
    %v751 = vpop.f32.mrb[0].mxu0
    %v752 = vadd.f32 0.0, %v751
    %v753 = vpop.f32.mrb[0].mxu0
    %v754 = vadd.f32 0.0, %v753
    %755 = vdwg.mxu0
    %756 = vmatprep.subr.mxu0 %v624
    %757 = vmatpush1.msra.mxu0 %v623
    %758 = vmatprep.subr.mxu0 %v628
    %759 = vmatpush1.msra.mxu0 %v627
    %760 = vmatprep.subr.mxu0 %v632
    %761 = vmatpush1.msra.mxu0 %v631
    %762 = vmatprep.subr.mxu0 %v636
    %763 = vmatpush1.msra.mxu0 %v635
    %764 = vmatprep.subr.mxu0 %v640
    %765 = vmatpush1.msra.mxu0 %v639
    %766 = vmatprep.subr.mxu0 %v644
    %767 = vmatpush1.msra.mxu0 %v643
    %768 = vmatprep.subr.mxu0 %v648
    %769 = vmatpush1.msra.mxu0 %v647
    %770 = vmatprep.subr.mxu0 %v652
    %771 = vmatpush1.msra.mxu0 %v651
    %772 = vmatprep.subr.mxu0 %v656
    %773 = vmatpush1.msra.mxu0 %v655
    %774 = vmatprep.subr.mxu0 %v660
    %775 = vmatpush1.msra.mxu0 %v659
    %776 = vmatprep.subr.mxu0 %v664
    %777 = vmatpush1.msra.mxu0 %v663
    %778 = vmatprep.subr.mxu0 %v668
    %779 = vmatpush1.msra.mxu0 %v667
    %780 = vmatprep.subr.mxu0 %v672
    %781 = vmatpush1.msra.mxu0 %v671
    %782 = vmatprep.subr.mxu0 %v676
    %783 = vmatpush1.msra.mxu0 %v675
    %784 = vmatprep.subr.mxu0 %v680
    %785 = vmatpush1.msra.mxu0 %v679
    %786 = vmatprep.subr.mxu0 %v684
    %787 = vmatpush1.msra.mxu0 %v683
    %788 = vmatprep.subr.mxu0 0.0
    %789 = vmatpush1.msra.mxu0 0.0
    %790 = vmatprep.subr.mxu0 0.0
    %791 = vmatpush1.msra.mxu0 0.0
    %792 = vmatprep.subr.mxu0 0.0
    %793 = vmatpush1.msra.mxu0 0.0
    %794 = vmatprep.subr.mxu0 0.0
    %795 = vmatpush1.msra.mxu0 0.0
    %796 = vmatprep.subr.mxu0 0.0
    %797 = vmatpush1.msra.mxu0 0.0
    %798 = vmatprep.subr.mxu0 0.0
    %799 = vmatpush1.msra.mxu0 0.0
    %800 = vmatprep.subr.mxu0 0.0
    %801 = vmatpush1.msra.mxu0 0.0
    %802 = vmatprep.subr.mxu0 0.0
    %803 = vmatpush1.msra.mxu0 0.0
    %804 = vmatprep.subr.mxu0 0.0
    %805 = vmatpush1.msra.mxu0 0.0
    %806 = vmatprep.subr.mxu0 0.0
    %807 = vmatpush1.msra.mxu0 0.0
    %808 = vmatprep.subr.mxu0 0.0
    %809 = vmatpush1.msra.mxu0 0.0
    %810 = vmatprep.subr.mxu0 0.0
    %811 = vmatpush1.msra.mxu0 0.0
    %812 = vmatprep.subr.mxu0 0.0
    %813 = vmatpush1.msra.mxu0 0.0
    %814 = vmatprep.subr.mxu0 0.0
    %815 = vmatpush1.msra.mxu0 0.0
    %816 = vmatprep.subr.mxu0 0.0
    %817 = vmatpush1.msra.mxu0 0.0
    %818 = vmatprep.subr.mxu0 0.0
    %819 = vmatpush1.msra.mxu0 0.0
    %820 = vmatprep.mubr.f32.mxu0 0.0
    %821 = vmatmul.mubr.f32.gmra.mrb[0].mxu0 %v612
    %v822 = vpop.f32.mrb[0].mxu0
    %v823 = vadd.f32 0.0, %v822
    %v824 = vpop.f32.mrb[0].mxu0
    %v825 = vadd.f32 0.0, %v824
    %826 = vdwg.mxu0
    %v827 = vadd.f32 %v617, %v752
    %v828 = vadd.f32 %v618, %v754
    %v829 = vadd.f32 %v619, %v823
    %v830 = vadd.f32 %v620, %v825
    %v831 = vxor.u32 %v827, 2147483648
    %v832 = vmul.f32 %v831, 1.442695
    %v833 = vpow.pop %v832
    %v834 = vadd.f32 %v833, 1.0
    %v835 = vrcp.pop %v834
    %v836 = vmul.f32 1.0, %v835
    %v837 = vxor.u32 %v828, 2147483648
    %v838 = vmul.f32 %v837, 1.442695
    %v839 = vpow.pop %v838
    %v840 = vadd.f32 %v839, 1.0
    %v841 = vrcp.pop %v840
    %v842 = vmul.f32 1.0, %v841
    %v843 = vtanh.pop %v829
    %v844 = vxor.u32 %v830, 2147483648
    %v845 = vmul.f32 %v844, 1.442695
    %v846 = vpow.pop %v845
    %v847 = vadd.f32 %v846, 1.0
    %v848 = vrcp.pop %v847
    %v849 = vmul.f32 1.0, %v848
    %v850 = vmul.f32 %v842, %v610
    %v851 = vmul.f32 %v836, %v843
    %v852 = vadd.f32 %v850, %v851
    %v853 = vtanh.pop %v852
    %v854 = vmul.f32 %v849, %v853
    %s855 = scalar_lea.vmem [#allocation2], 8
    %856 = vst [vmem:[%s855] sm:$0xff] %v854
    %s857 = smul.u32 2, 4
    %s858 = smul.addr %s857, 8
    %s859 = scalar_lea.vmem [#allocation3], %s858
    %v860 = vld [vmem:[%s859] sm:$0xff]
    %v861 = vld [vmem:[%s859 + $0x8] sm:$0xff]
    %v862 = vld [vmem:[%s859 + $0x10] sm:$0xff]
    %v863 = vld [vmem:[%s859 + $0x18] sm:$0xff]
    %v864 = vld [vmem:[#allocation7] sm:$0xff]
    %v865 = vld [vmem:[#allocation7 + $0x8] sm:$0xff]
    %v866 = vld [vmem:[#allocation7 + $0x10] sm:$0xff]
    %v867 = vld [vmem:[#allocation7 + $0x18] sm:$0xff]
    %v868 = vld [vmem:[#allocation7 + $0x20] sm:$0xff]
    %v869 = vld [vmem:[#allocation7 + $0x28] sm:$0xff]
    %v870 = vld [vmem:[#allocation7 + $0x30] sm:$0xff]
    %v871 = vld [vmem:[#allocation7 + $0x38] sm:$0xff]
    %v872 = vld [vmem:[#allocation7 + $0x40] sm:$0xff]
    %v873 = vld [vmem:[#allocation7 + $0x48] sm:$0xff]
    %v874 = vld [vmem:[#allocation7 + $0x50] sm:$0xff]
    %v875 = vld [vmem:[#allocation7 + $0x58] sm:$0xff]
    %v876 = vld [vmem:[#allocation7 + $0x60] sm:$0xff]
    %v877 = vld [vmem:[#allocation7 + $0x68] sm:$0xff]
    %v878 = vld [vmem:[#allocation7 + $0x70] sm:$0xff]
    %v879 = vld [vmem:[#allocation7 + $0x78] sm:$0xff]
    %v880 = vld [vmem:[#allocation7 + $0x80] sm:$0xff]
    %v881 = vld [vmem:[#allocation7 + $0x88] sm:$0xff]
    %v882 = vld [vmem:[#allocation7 + $0x90] sm:$0xff]
    %v883 = vld [vmem:[#allocation7 + $0x98] sm:$0xff]
    %v884 = vld [vmem:[#allocation7 + $0xa0] sm:$0xff]
    %v885 = vld [vmem:[#allocation7 + $0xa8] sm:$0xff]
    %v886 = vld [vmem:[#allocation7 + $0xb0] sm:$0xff]
    %v887 = vld [vmem:[#allocation7 + $0xb8] sm:$0xff]
    %v888 = vld [vmem:[#allocation7 + $0xc0] sm:$0xff]
    %v889 = vld [vmem:[#allocation7 + $0xc8] sm:$0xff]
    %v890 = vld [vmem:[#allocation7 + $0xd0] sm:$0xff]
    %v891 = vld [vmem:[#allocation7 + $0xd8] sm:$0xff]
    %v892 = vld [vmem:[#allocation7 + $0xe0] sm:$0xff]
    %v893 = vld [vmem:[#allocation7 + $0xe8] sm:$0xff]
    %v894 = vld [vmem:[#allocation7 + $0xf0] sm:$0xff]
    %v895 = vld [vmem:[#allocation7 + $0xf8] sm:$0xff]
    %v896 = vld [vmem:[#allocation7 + $0x100] sm:$0xff]
    %v897 = vld [vmem:[#allocation7 + $0x108] sm:$0xff]
    %v898 = vld [vmem:[#allocation7 + $0x110] sm:$0xff]
    %v899 = vld [vmem:[#allocation7 + $0x118] sm:$0xff]
    %v900 = vld [vmem:[#allocation7 + $0x120] sm:$0xff]
    %v901 = vld [vmem:[#allocation7 + $0x128] sm:$0xff]
    %v902 = vld [vmem:[#allocation7 + $0x130] sm:$0xff]
    %v903 = vld [vmem:[#allocation7 + $0x138] sm:$0xff]
    %v904 = vld [vmem:[#allocation7 + $0x140] sm:$0xff]
    %v905 = vld [vmem:[#allocation7 + $0x148] sm:$0xff]
    %v906 = vld [vmem:[#allocation7 + $0x150] sm:$0xff]
    %v907 = vld [vmem:[#allocation7 + $0x158] sm:$0xff]
    %v908 = vld [vmem:[#allocation7 + $0x160] sm:$0xff]
    %v909 = vld [vmem:[#allocation7 + $0x168] sm:$0xff]
    %v910 = vld [vmem:[#allocation7 + $0x170] sm:$0xff]
    %v911 = vld [vmem:[#allocation7 + $0x178] sm:$0xff]
    %v912 = vld [vmem:[#allocation7 + $0x180] sm:$0xff]
    %v913 = vld [vmem:[#allocation7 + $0x188] sm:$0xff]
    %v914 = vld [vmem:[#allocation7 + $0x190] sm:$0xff]
    %v915 = vld [vmem:[#allocation7 + $0x198] sm:$0xff]
    %v916 = vld [vmem:[#allocation7 + $0x1a0] sm:$0xff]
    %v917 = vld [vmem:[#allocation7 + $0x1a8] sm:$0xff]
    %v918 = vld [vmem:[#allocation7 + $0x1b0] sm:$0xff]
    %v919 = vld [vmem:[#allocation7 + $0x1b8] sm:$0xff]
    %v920 = vld [vmem:[#allocation7 + $0x1c0] sm:$0xff]
    %v921 = vld [vmem:[#allocation7 + $0x1c8] sm:$0xff]
    %v922 = vld [vmem:[#allocation7 + $0x1d0] sm:$0xff]
    %v923 = vld [vmem:[#allocation7 + $0x1d8] sm:$0xff]
    %v924 = vld [vmem:[#allocation7 + $0x1e0] sm:$0xff]
    %v925 = vld [vmem:[#allocation7 + $0x1e8] sm:$0xff]
    %v926 = vld [vmem:[#allocation7 + $0x1f0] sm:$0xff]
    %v927 = vld [vmem:[#allocation7 + $0x1f8] sm:$0xff]
    %928 = vmatprep.subr.mxu0 %v865
    %929 = vmatpush1.msra.mxu0 %v864
    %930 = vmatprep.subr.mxu0 %v869
    %931 = vmatpush1.msra.mxu0 %v868
    %932 = vmatprep.subr.mxu0 %v873
    %933 = vmatpush1.msra.mxu0 %v872
    %934 = vmatprep.subr.mxu0 %v877
    %935 = vmatpush1.msra.mxu0 %v876
    %936 = vmatprep.subr.mxu0 %v881
    %937 = vmatpush1.msra.mxu0 %v880
    %938 = vmatprep.subr.mxu0 %v885
    %939 = vmatpush1.msra.mxu0 %v884
    %940 = vmatprep.subr.mxu0 %v889
    %941 = vmatpush1.msra.mxu0 %v888
    %942 = vmatprep.subr.mxu0 %v893
    %943 = vmatpush1.msra.mxu0 %v892
    %944 = vmatprep.subr.mxu0 %v897
    %945 = vmatpush1.msra.mxu0 %v896
    %946 = vmatprep.subr.mxu0 %v901
    %947 = vmatpush1.msra.mxu0 %v900
    %948 = vmatprep.subr.mxu0 %v905
    %949 = vmatpush1.msra.mxu0 %v904
    %950 = vmatprep.subr.mxu0 %v909
    %951 = vmatpush1.msra.mxu0 %v908
    %952 = vmatprep.subr.mxu0 %v913
    %953 = vmatpush1.msra.mxu0 %v912
    %954 = vmatprep.subr.mxu0 %v917
    %955 = vmatpush1.msra.mxu0 %v916
    %956 = vmatprep.subr.mxu0 %v921
    %957 = vmatpush1.msra.mxu0 %v920
    %958 = vmatprep.subr.mxu0 %v925
    %959 = vmatpush1.msra.mxu0 %v924
    %960 = vmatprep.subr.mxu0 0.0
    %961 = vmatpush1.msra.mxu0 0.0
    %962 = vmatprep.subr.mxu0 0.0
    %963 = vmatpush1.msra.mxu0 0.0
    %964 = vmatprep.subr.mxu0 0.0
    %965 = vmatpush1.msra.mxu0 0.0
    %966 = vmatprep.subr.mxu0 0.0
    %967 = vmatpush1.msra.mxu0 0.0
    %968 = vmatprep.subr.mxu0 0.0
    %969 = vmatpush1.msra.mxu0 0.0
    %970 = vmatprep.subr.mxu0 0.0
    %971 = vmatpush1.msra.mxu0 0.0
    %972 = vmatprep.subr.mxu0 0.0
    %973 = vmatpush1.msra.mxu0 0.0
    %974 = vmatprep.subr.mxu0 0.0
    %975 = vmatpush1.msra.mxu0 0.0
    %976 = vmatprep.subr.mxu0 0.0
    %977 = vmatpush1.msra.mxu0 0.0
    %978 = vmatprep.subr.mxu0 0.0
    %979 = vmatpush1.msra.mxu0 0.0
    %980 = vmatprep.subr.mxu0 0.0
    %981 = vmatpush1.msra.mxu0 0.0
    %982 = vmatprep.subr.mxu0 0.0
    %983 = vmatpush1.msra.mxu0 0.0
    %984 = vmatprep.subr.mxu0 0.0
    %985 = vmatpush1.msra.mxu0 0.0
    %986 = vmatprep.subr.mxu0 0.0
    %987 = vmatpush1.msra.mxu0 0.0
    %988 = vmatprep.subr.mxu0 0.0
    %989 = vmatpush1.msra.mxu0 0.0
    %990 = vmatprep.subr.mxu0 0.0
    %991 = vmatpush1.msra.mxu0 0.0
    %992 = vmatprep.mubr.f32.mxu0 0.0
    %993 = vmatmul.mubr.f32.gmra.mrb[0].mxu0 %v854
    %v994 = vpop.f32.mrb[0].mxu0
    %v995 = vadd.f32 0.0, %v994
    %v996 = vpop.f32.mrb[0].mxu0
    %v997 = vadd.f32 0.0, %v996
    %998 = vdwg.mxu0
    %999 = vmatprep.subr.mxu0 %v867
    %1000 = vmatpush1.msra.mxu0 %v866
    %1001 = vmatprep.subr.mxu0 %v871
    %1002 = vmatpush1.msra.mxu0 %v870
    %1003 = vmatprep.subr.mxu0 %v875
    %1004 = vmatpush1.msra.mxu0 %v874
    %1005 = vmatprep.subr.mxu0 %v879
    %1006 = vmatpush1.msra.mxu0 %v878
    %1007 = vmatprep.subr.mxu0 %v883
    %1008 = vmatpush1.msra.mxu0 %v882
    %1009 = vmatprep.subr.mxu0 %v887
    %1010 = vmatpush1.msra.mxu0 %v886
    %1011 = vmatprep.subr.mxu0 %v891
    %1012 = vmatpush1.msra.mxu0 %v890
    %1013 = vmatprep.subr.mxu0 %v895
    %1014 = vmatpush1.msra.mxu0 %v894
    %1015 = vmatprep.subr.mxu0 %v899
    %1016 = vmatpush1.msra.mxu0 %v898
    %1017 = vmatprep.subr.mxu0 %v903
    %1018 = vmatpush1.msra.mxu0 %v902
    %1019 = vmatprep.subr.mxu0 %v907
    %1020 = vmatpush1.msra.mxu0 %v906
    %1021 = vmatprep.subr.mxu0 %v911
    %1022 = vmatpush1.msra.mxu0 %v910
    %1023 = vmatprep.subr.mxu0 %v915
    %1024 = vmatpush1.msra.mxu0 %v914
    %1025 = vmatprep.subr.mxu0 %v919
    %1026 = vmatpush1.msra.mxu0 %v918
    %1027 = vmatprep.subr.mxu0 %v923
    %1028 = vmatpush1.msra.mxu0 %v922
    %1029 = vmatprep.subr.mxu0 %v927
    %1030 = vmatpush1.msra.mxu0 %v926
    %1031 = vmatprep.subr.mxu0 0.0
    %1032 = vmatpush1.msra.mxu0 0.0
    %1033 = vmatprep.subr.mxu0 0.0
    %1034 = vmatpush1.msra.mxu0 0.0
    %1035 = vmatprep.subr.mxu0 0.0
    %1036 = vmatpush1.msra.mxu0 0.0
    %1037 = vmatprep.subr.mxu0 0.0
    %1038 = vmatpush1.msra.mxu0 0.0
    %1039 = vmatprep.subr.mxu0 0.0
    %1040 = vmatpush1.msra.mxu0 0.0
    %1041 = vmatprep.subr.mxu0 0.0
    %1042 = vmatpush1.msra.mxu0 0.0
    %1043 = vmatprep.subr.mxu0 0.0
    %1044 = vmatpush1.msra.mxu0 0.0
    %1045 = vmatprep.subr.mxu0 0.0
    %1046 = vmatpush1.msra.mxu0 0.0
    %1047 = vmatprep.subr.mxu0 0.0
    %1048 = vmatpush1.msra.mxu0 0.0
    %1049 = vmatprep.subr.mxu0 0.0
    %1050 = vmatpush1.msra.mxu0 0.0
    %1051 = vmatprep.subr.mxu0 0.0
    %1052 = vmatpush1.msra.mxu0 0.0
    %1053 = vmatprep.subr.mxu0 0.0
    %1054 = vmatpush1.msra.mxu0 0.0
    %1055 = vmatprep.subr.mxu0 0.0
    %1056 = vmatpush1.msra.mxu0 0.0
    %1057 = vmatprep.subr.mxu0 0.0
    %1058 = vmatpush1.msra.mxu0 0.0
    %1059 = vmatprep.subr.mxu0 0.0
    %1060 = vmatpush1.msra.mxu0 0.0
    %1061 = vmatprep.subr.mxu0 0.0
    %1062 = vmatpush1.msra.mxu0 0.0
    %1063 = vmatprep.mubr.f32.mxu0 0.0
    %1064 = vmatmul.mubr.f32.gmra.mrb[0].mxu0 %v854
    %v1065 = vpop.f32.mrb[0].mxu0
    %v1066 = vadd.f32 0.0, %v1065
    %v1067 = vpop.f32.mrb[0].mxu0
    %v1068 = vadd.f32 0.0, %v1067
    %1069 = vdwg.mxu0
    %v1070 = vadd.f32 %v860, %v995
    %v1071 = vadd.f32 %v861, %v997
    %v1072 = vadd.f32 %v862, %v1066
    %v1073 = vadd.f32 %v863, %v1068
    %v1074 = vxor.u32 %v1070, 2147483648
    %v1075 = vmul.f32 %v1074, 1.442695
    %v1076 = vpow.pop %v1075
    %v1077 = vadd.f32 %v1076, 1.0
    %v1078 = vrcp.pop %v1077
    %v1079 = vmul.f32 1.0, %v1078
    %v1080 = vxor.u32 %v1071, 2147483648
    %v1081 = vmul.f32 %v1080, 1.442695
    %v1082 = vpow.pop %v1081
    %v1083 = vadd.f32 %v1082, 1.0
    %v1084 = vrcp.pop %v1083
    %v1085 = vmul.f32 1.0, %v1084
    %v1086 = vtanh.pop %v1072
    %v1087 = vxor.u32 %v1073, 2147483648
    %v1088 = vmul.f32 %v1087, 1.442695
    %v1089 = vpow.pop %v1088
    %v1090 = vadd.f32 %v1089, 1.0
    %v1091 = vrcp.pop %v1090
    %v1092 = vmul.f32 1.0, %v1091
    %v1093 = vmul.f32 %v1085, %v852
    %v1094 = vmul.f32 %v1079, %v1086
    %v1095 = vadd.f32 %v1093, %v1094
    %v1096 = vtanh.pop %v1095
    %v1097 = vmul.f32 %v1092, %v1096
    %s1098 = scalar_lea.vmem [#allocation2], 16
    %1099 = vst [vmem:[%s1098] sm:$0xff] %v1097
    %s1100 = smul.u32 3, 4
    %s1101 = smul.addr %s1100, 8
    %s1102 = scalar_lea.vmem [#allocation3], %s1101
    %v1103 = vld [vmem:[%s1102] sm:$0xff]
    %v1104 = vld [vmem:[%s1102 + $0x8] sm:$0xff]
    %v1105 = vld [vmem:[%s1102 + $0x10] sm:$0xff]
    %v1106 = vld [vmem:[%s1102 + $0x18] sm:$0xff]
    %v1107 = vld [vmem:[#allocation7] sm:$0xff]
    %v1108 = vld [vmem:[#allocation7 + $0x8] sm:$0xff]
    %v1109 = vld [vmem:[#allocation7 + $0x10] sm:$0xff]
    %v1110 = vld [vmem:[#allocation7 + $0x18] sm:$0xff]
    %v1111 = vld [vmem:[#allocation7 + $0x20] sm:$0xff]
    %v1112 = vld [vmem:[#allocation7 + $0x28] sm:$0xff]
    %v1113 = vld [vmem:[#allocation7 + $0x30] sm:$0xff]
    %v1114 = vld [vmem:[#allocation7 + $0x38] sm:$0xff]
    %v1115 = vld [vmem:[#allocation7 + $0x40] sm:$0xff]
    %v1116 = vld [vmem:[#allocation7 + $0x48] sm:$0xff]
    %v1117 = vld [vmem:[#allocation7 + $0x50] sm:$0xff]
    %v1118 = vld [vmem:[#allocation7 + $0x58] sm:$0xff]
    %v1119 = vld [vmem:[#allocation7 + $0x60] sm:$0xff]
    %v1120 = vld [vmem:[#allocation7 + $0x68] sm:$0xff]
    %v1121 = vld [vmem:[#allocation7 + $0x70] sm:$0xff]
    %v1122 = vld [vmem:[#allocation7 + $0x78] sm:$0xff]
    %v1123 = vld [vmem:[#allocation7 + $0x80] sm:$0xff]
    %v1124 = vld [vmem:[#allocation7 + $0x88] sm:$0xff]
    %v1125 = vld [vmem:[#allocation7 + $0x90] sm:$0xff]
    %v1126 = vld [vmem:[#allocation7 + $0x98] sm:$0xff]
    %v1127 = vld [vmem:[#allocation7 + $0xa0] sm:$0xff]
    %v1128 = vld [vmem:[#allocation7 + $0xa8] sm:$0xff]
    %v1129 = vld [vmem:[#allocation7 + $0xb0] sm:$0xff]
    %v1130 = vld [vmem:[#allocation7 + $0xb8] sm:$0xff]
    %v1131 = vld [vmem:[#allocation7 + $0xc0] sm:$0xff]
    %v1132 = vld [vmem:[#allocation7 + $0xc8] sm:$0xff]
    %v1133 = vld [vmem:[#allocation7 + $0xd0] sm:$0xff]
    %v1134 = vld [vmem:[#allocation7 + $0xd8] sm:$0xff]
    %v1135 = vld [vmem:[#allocation7 + $0xe0] sm:$0xff]
    %v1136 = vld [vmem:[#allocation7 + $0xe8] sm:$0xff]
    %v1137 = vld [vmem:[#allocation7 + $0xf0] sm:$0xff]
    %v1138 = vld [vmem:[#allocation7 + $0xf8] sm:$0xff]
    %v1139 = vld [vmem:[#allocation7 + $0x100] sm:$0xff]
    %v1140 = vld [vmem:[#allocation7 + $0x108] sm:$0xff]
    %v1141 = vld [vmem:[#allocation7 + $0x110] sm:$0xff]
    %v1142 = vld [vmem:[#allocation7 + $0x118] sm:$0xff]
    %v1143 = vld [vmem:[#allocation7 + $0x120] sm:$0xff]
    %v1144 = vld [vmem:[#allocation7 + $0x128] sm:$0xff]
    %v1145 = vld [vmem:[#allocation7 + $0x130] sm:$0xff]
    %v1146 = vld [vmem:[#allocation7 + $0x138] sm:$0xff]
    %v1147 = vld [vmem:[#allocation7 + $0x140] sm:$0xff]
    %v1148 = vld [vmem:[#allocation7 + $0x148] sm:$0xff]
    %v1149 = vld [vmem:[#allocation7 + $0x150] sm:$0xff]
    %v1150 = vld [vmem:[#allocation7 + $0x158] sm:$0xff]
    %v1151 = vld [vmem:[#allocation7 + $0x160] sm:$0xff]
    %v1152 = vld [vmem:[#allocation7 + $0x168] sm:$0xff]
    %v1153 = vld [vmem:[#allocation7 + $0x170] sm:$0xff]
    %v1154 = vld [vmem:[#allocation7 + $0x178] sm:$0xff]
    %v1155 = vld [vmem:[#allocation7 + $0x180] sm:$0xff]
    %v1156 = vld [vmem:[#allocation7 + $0x188] sm:$0xff]
    %v1157 = vld [vmem:[#allocation7 + $0x190] sm:$0xff]
    %v1158 = vld [vmem:[#allocation7 + $0x198] sm:$0xff]
    %v1159 = vld [vmem:[#allocation7 + $0x1a0] sm:$0xff]
    %v1160 = vld [vmem:[#allocation7 + $0x1a8] sm:$0xff]
    %v1161 = vld [vmem:[#allocation7 + $0x1b0] sm:$0xff]
    %v1162 = vld [vmem:[#allocation7 + $0x1b8] sm:$0xff]
    %v1163 = vld [vmem:[#allocation7 + $0x1c0] sm:$0xff]
    %v1164 = vld [vmem:[#allocation7 + $0x1c8] sm:$0xff]
    %v1165 = vld [vmem:[#allocation7 + $0x1d0] sm:$0xff]
    %v1166 = vld [vmem:[#allocation7 + $0x1d8] sm:$0xff]
    %v1167 = vld [vmem:[#allocation7 + $0x1e0] sm:$0xff]
    %v1168 = vld [vmem:[#allocation7 + $0x1e8] sm:$0xff]
    %v1169 = vld [vmem:[#allocation7 + $0x1f0] sm:$0xff]
    %v1170 = vld [vmem:[#allocation7 + $0x1f8] sm:$0xff]
    %1171 = vmatprep.subr.mxu0 %v1108
    %1172 = vmatpush1.msra.mxu0 %v1107
    %1173 = vmatprep.subr.mxu0 %v1112
    %1174 = vmatpush1.msra.mxu0 %v1111
    %1175 = vmatprep.subr.mxu0 %v1116
    %1176 = vmatpush1.msra.mxu0 %v1115
    %1177 = vmatprep.subr.mxu0 %v1120
    %1178 = vmatpush1.msra.mxu0 %v1119
    %1179 = vmatprep.subr.mxu0 %v1124
    %1180 = vmatpush1.msra.mxu0 %v1123
    %1181 = vmatprep.subr.mxu0 %v1128
    %1182 = vmatpush1.msra.mxu0 %v1127
    %1183 = vmatprep.subr.mxu0 %v1132
    %1184 = vmatpush1.msra.mxu0 %v1131
    %1185 = vmatprep.subr.mxu0 %v1136
    %1186 = vmatpush1.msra.mxu0 %v1135
    %1187 = vmatprep.subr.mxu0 %v1140
    %1188 = vmatpush1.msra.mxu0 %v1139
    %1189 = vmatprep.subr.mxu0 %v1144
    %1190 = vmatpush1.msra.mxu0 %v1143
    %1191 = vmatprep.subr.mxu0 %v1148
    %1192 = vmatpush1.msra.mxu0 %v1147
    %1193 = vmatprep.subr.mxu0 %v1152
    %1194 = vmatpush1.msra.mxu0 %v1151
    %1195 = vmatprep.subr.mxu0 %v1156
    %1196 = vmatpush1.msra.mxu0 %v1155
    %1197 = vmatprep.subr.mxu0 %v1160
    %1198 = vmatpush1.msra.mxu0 %v1159
    %1199 = vmatprep.subr.mxu0 %v1164
    %1200 = vmatpush1.msra.mxu0 %v1163
    %1201 = vmatprep.subr.mxu0 %v1168
    %1202 = vmatpush1.msra.mxu0 %v1167
    %1203 = vmatprep.subr.mxu0 0.0
    %1204 = vmatpush1.msra.mxu0 0.0
    %1205 = vmatprep.subr.mxu0 0.0
    %1206 = vmatpush1.msra.mxu0 0.0
    %1207 = vmatprep.subr.mxu0 0.0
    %1208 = vmatpush1.msra.mxu0 0.0
    %1209 = vmatprep.subr.mxu0 0.0
    %1210 = vmatpush1.msra.mxu0 0.0
    %1211 = vmatprep.subr.mxu0 0.0
    %1212 = vmatpush1.msra.mxu0 0.0
    %1213 = vmatprep.subr.mxu0 0.0
    %1214 = vmatpush1.msra.mxu0 0.0
    %1215 = vmatprep.subr.mxu0 0.0
    %1216 = vmatpush1.msra.mxu0 0.0
    %1217 = vmatprep.subr.mxu0 0.0
    %1218 = vmatpush1.msra.mxu0 0.0
    %1219 = vmatprep.subr.mxu0 0.0
    %1220 = vmatpush1.msra.mxu0 0.0
    %1221 = vmatprep.subr.mxu0 0.0
    %1222 = vmatpush1.msra.mxu0 0.0
    %1223 = vmatprep.subr.mxu0 0.0
    %1224 = vmatpush1.msra.mxu0 0.0
    %1225 = vmatprep.subr.mxu0 0.0
    %1226 = vmatpush1.msra.mxu0 0.0
    %1227 = vmatprep.subr.mxu0 0.0
    %1228 = vmatpush1.msra.mxu0 0.0
    %1229 = vmatprep.subr.mxu0 0.0
    %1230 = vmatpush1.msra.mxu0 0.0
    %1231 = vmatprep.subr.mxu0 0.0
    %1232 = vmatpush1.msra.mxu0 0.0
    %1233 = vmatprep.subr.mxu0 0.0
    %1234 = vmatpush1.msra.mxu0 0.0
    %1235 = vmatprep.mubr.f32.mxu0 0.0
    %1236 = vmatmul.mubr.f32.gmra.mrb[0].mxu0 %v1097
    %v1237 = vpop.f32.mrb[0].mxu0
    %v1238 = vadd.f32 0.0, %v1237
    %v1239 = vpop.f32.mrb[0].mxu0
    %v1240 = vadd.f32 0.0, %v1239
    %1241 = vdwg.mxu0
    %1242 = vmatprep.subr.mxu0 %v1110
    %1243 = vmatpush1.msra.mxu0 %v1109
    %1244 = vmatprep.subr.mxu0 %v1114
    %1245 = vmatpush1.msra.mxu0 %v1113
    %1246 = vmatprep.subr.mxu0 %v1118
    %1247 = vmatpush1.msra.mxu0 %v1117
    %1248 = vmatprep.subr.mxu0 %v1122
    %1249 = vmatpush1.msra.mxu0 %v1121
    %1250 = vmatprep.subr.mxu0 %v1126
    %1251 = vmatpush1.msra.mxu0 %v1125
    %1252 = vmatprep.subr.mxu0 %v1130
    %1253 = vmatpush1.msra.mxu0 %v1129
    %1254 = vmatprep.subr.mxu0 %v1134
    %1255 = vmatpush1.msra.mxu0 %v1133
    %1256 = vmatprep.subr.mxu0 %v1138
    %1257 = vmatpush1.msra.mxu0 %v1137
    %1258 = vmatprep.subr.mxu0 %v1142
    %1259 = vmatpush1.msra.mxu0 %v1141
    %1260 = vmatprep.subr.mxu0 %v1146
    %1261 = vmatpush1.msra.mxu0 %v1145
    %1262 = vmatprep.subr.mxu0 %v1150
    %1263 = vmatpush1.msra.mxu0 %v1149
    %1264 = vmatprep.subr.mxu0 %v1154
    %1265 = vmatpush1.msra.mxu0 %v1153
    %1266 = vmatprep.subr.mxu0 %v1158
    %1267 = vmatpush1.msra.mxu0 %v1157
    %1268 = vmatprep.subr.mxu0 %v1162
    %1269 = vmatpush1.msra.mxu0 %v1161
    %1270 = vmatprep.subr.mxu0 %v1166
    %1271 = vmatpush1.msra.mxu0 %v1165
    %1272 = vmatprep.subr.mxu0 %v1170
    %1273 = vmatpush1.msra.mxu0 %v1169
    %1274 = vmatprep.subr.mxu0 0.0
    %1275 = vmatpush1.msra.mxu0 0.0
    %1276 = vmatprep.subr.mxu0 0.0
    %1277 = vmatpush1.msra.mxu0 0.0
    %1278 = vmatprep.subr.mxu0 0.0
    %1279 = vmatpush1.msra.mxu0 0.0
    %1280 = vmatprep.subr.mxu0 0.0
    %1281 = vmatpush1.msra.mxu0 0.0
    %1282 = vmatprep.subr.mxu0 0.0
    %1283 = vmatpush1.msra.mxu0 0.0
    %1284 = vmatprep.subr.mxu0 0.0
    %1285 = vmatpush1.msra.mxu0 0.0
    %1286 = vmatprep.subr.mxu0 0.0
    %1287 = vmatpush1.msra.mxu0 0.0
    %1288 = vmatprep.subr.mxu0 0.0
    %1289 = vmatpush1.msra.mxu0 0.0
    %1290 = vmatprep.subr.mxu0 0.0
    %1291 = vmatpush1.msra.mxu0 0.0
    %1292 = vmatprep.subr.mxu0 0.0
    %1293 = vmatpush1.msra.mxu0 0.0
    %1294 = vmatprep.subr.mxu0 0.0
    %1295 = vmatpush1.msra.mxu0 0.0
    %1296 = vmatprep.subr.mxu0 0.0
    %1297 = vmatpush1.msra.mxu0 0.0
    %1298 = vmatprep.subr.mxu0 0.0
    %1299 = vmatpush1.msra.mxu0 0.0
    %1300 = vmatprep.subr.mxu0 0.0
    %1301 = vmatpush1.msra.mxu0 0.0
    %1302 = vmatprep.subr.mxu0 0.0
    %1303 = vmatpush1.msra.mxu0 0.0
    %1304 = vmatprep.subr.mxu0 0.0
    %1305 = vmatpush1.msra.mxu0 0.0
    %1306 = vmatprep.mubr.f32.mxu0 0.0
    %1307 = vmatmul.mubr.f32.gmra.mrb[0].mxu0 %v1097
    %v1308 = vpop.f32.mrb[0].mxu0
    %v1309 = vadd.f32 0.0, %v1308
    %v1310 = vpop.f32.mrb[0].mxu0
    %v1311 = vadd.f32 0.0, %v1310
    %1312 = vdwg.mxu0
    %v1313 = vadd.f32 %v1103, %v1238
    %v1314 = vadd.f32 %v1104, %v1240
    %v1315 = vadd.f32 %v1105, %v1309
    %v1316 = vadd.f32 %v1106, %v1311
    %v1317 = vxor.u32 %v1313, 2147483648
    %v1318 = vmul.f32 %v1317, 1.442695
    %v1319 = vpow.pop %v1318
    %v1320 = vadd.f32 %v1319, 1.0
    %v1321 = vrcp.pop %v1320
    %v1322 = vmul.f32 1.0, %v1321
    %v1323 = vxor.u32 %v1314, 2147483648
    %v1324 = vmul.f32 %v1323, 1.442695
    %v1325 = vpow.pop %v1324
    %v1326 = vadd.f32 %v1325, 1.0
    %v1327 = vrcp.pop %v1326
    %v1328 = vmul.f32 1.0, %v1327
    %v1329 = vtanh.pop %v1315
    %v1330 = vxor.u32 %v1316, 2147483648
    %v1331 = vmul.f32 %v1330, 1.442695
    %v1332 = vpow.pop %v1331
    %v1333 = vadd.f32 %v1332, 1.0
    %v1334 = vrcp.pop %v1333
    %v1335 = vmul.f32 1.0, %v1334
    %v1336 = vmul.f32 %v1328, %v1095
    %v1337 = vmul.f32 %v1322, %v1329
    %v1338 = vadd.f32 %v1336, %v1337
    %v1339 = vtanh.pop %v1338
    %v1340 = vmul.f32 %v1335, %v1339
    %s1341 = scalar_lea.vmem [#allocation2], 24
    %1342 = vst [vmem:[%s1341] sm:$0xff] %v1340
    %s1343 = smul.u32 4, 4
    %s1344 = smul.addr %s1343, 8
    %s1345 = scalar_lea.vmem [#allocation3], %s1344
    %v1346 = vld [vmem:[%s1345] sm:$0xff]
    %v1347 = vld [vmem:[%s1345 + $0x8] sm:$0xff]
    %v1348 = vld [vmem:[%s1345 + $0x10] sm:$0xff]
    %v1349 = vld [vmem:[%s1345 + $0x18] sm:$0xff]
    %v1350 = vld [vmem:[#allocation7] sm:$0xff]
    %v1351 = vld [vmem:[#allocation7 + $0x8] sm:$0xff]
    %v1352 = vld [vmem:[#allocation7 + $0x10] sm:$0xff]
    %v1353 = vld [vmem:[#allocation7 + $0x18] sm:$0xff]
    %v1354 = vld [vmem:[#allocation7 + $0x20] sm:$0xff]
    %v1355 = vld [vmem:[#allocation7 + $0x28] sm:$0xff]
    %v1356 = vld [vmem:[#allocation7 + $0x30] sm:$0xff]
    %v1357 = vld [vmem:[#allocation7 + $0x38] sm:$0xff]
    %v1358 = vld [vmem:[#allocation7 + $0x40] sm:$0xff]
    %v1359 = vld [vmem:[#allocation7 + $0x48] sm:$0xff]
    %v1360 = vld [vmem:[#allocation7 + $0x50] sm:$0xff]
    %v1361 = vld [vmem:[#allocation7 + $0x58] sm:$0xff]
    %v1362 = vld [vmem:[#allocation7 + $0x60] sm:$0xff]
    %v1363 = vld [vmem:[#allocation7 + $0x68] sm:$0xff]
    %v1364 = vld [vmem:[#allocation7 + $0x70] sm:$0xff]
    %v1365 = vld [vmem:[#allocation7 + $0x78] sm:$0xff]
    %v1366 = vld [vmem:[#allocation7 + $0x80] sm:$0xff]
    %v1367 = vld [vmem:[#allocation7 + $0x88] sm:$0xff]
    %v1368 = vld [vmem:[#allocation7 + $0x90] sm:$0xff]
    %v1369 = vld [vmem:[#allocation7 + $0x98] sm:$0xff]
    %v1370 = vld [vmem:[#allocation7 + $0xa0] sm:$0xff]
    %v1371 = vld [vmem:[#allocation7 + $0xa8] sm:$0xff]
    %v1372 = vld [vmem:[#allocation7 + $0xb0] sm:$0xff]
    %v1373 = vld [vmem:[#allocation7 + $0xb8] sm:$0xff]
    %v1374 = vld [vmem:[#allocation7 + $0xc0] sm:$0xff]
    %v1375 = vld [vmem:[#allocation7 + $0xc8] sm:$0xff]
    %v1376 = vld [vmem:[#allocation7 + $0xd0] sm:$0xff]
    %v1377 = vld [vmem:[#allocation7 + $0xd8] sm:$0xff]
    %v1378 = vld [vmem:[#allocation7 + $0xe0] sm:$0xff]
    %v1379 = vld [vmem:[#allocation7 + $0xe8] sm:$0xff]
    %v1380 = vld [vmem:[#allocation7 + $0xf0] sm:$0xff]
    %v1381 = vld [vmem:[#allocation7 + $0xf8] sm:$0xff]
    %v1382 = vld [vmem:[#allocation7 + $0x100] sm:$0xff]
    %v1383 = vld [vmem:[#allocation7 + $0x108] sm:$0xff]
    %v1384 = vld [vmem:[#allocation7 + $0x110] sm:$0xff]
    %v1385 = vld [vmem:[#allocation7 + $0x118] sm:$0xff]
    %v1386 = vld [vmem:[#allocation7 + $0x120] sm:$0xff]
    %v1387 = vld [vmem:[#allocation7 + $0x128] sm:$0xff]
    %v1388 = vld [vmem:[#allocation7 + $0x130] sm:$0xff]
    %v1389 = vld [vmem:[#allocation7 + $0x138] sm:$0xff]
    %v1390 = vld [vmem:[#allocation7 + $0x140] sm:$0xff]
    %v1391 = vld [vmem:[#allocation7 + $0x148] sm:$0xff]
    %v1392 = vld [vmem:[#allocation7 + $0x150] sm:$0xff]
    %v1393 = vld [vmem:[#allocation7 + $0x158] sm:$0xff]
    %v1394 = vld [vmem:[#allocation7 + $0x160] sm:$0xff]
    %v1395 = vld [vmem:[#allocation7 + $0x168] sm:$0xff]
    %v1396 = vld [vmem:[#allocation7 + $0x170] sm:$0xff]
    %v1397 = vld [vmem:[#allocation7 + $0x178] sm:$0xff]
    %v1398 = vld [vmem:[#allocation7 + $0x180] sm:$0xff]
    %v1399 = vld [vmem:[#allocation7 + $0x188] sm:$0xff]
    %v1400 = vld [vmem:[#allocation7 + $0x190] sm:$0xff]
    %v1401 = vld [vmem:[#allocation7 + $0x198] sm:$0xff]
    %v1402 = vld [vmem:[#allocation7 + $0x1a0] sm:$0xff]
    %v1403 = vld [vmem:[#allocation7 + $0x1a8] sm:$0xff]
    %v1404 = vld [vmem:[#allocation7 + $0x1b0] sm:$0xff]
    %v1405 = vld [vmem:[#allocation7 + $0x1b8] sm:$0xff]
    %v1406 = vld [vmem:[#allocation7 + $0x1c0] sm:$0xff]
    %v1407 = vld [vmem:[#allocation7 + $0x1c8] sm:$0xff]
    %v1408 = vld [vmem:[#allocation7 + $0x1d0] sm:$0xff]
    %v1409 = vld [vmem:[#allocation7 + $0x1d8] sm:$0xff]
    %v1410 = vld [vmem:[#allocation7 + $0x1e0] sm:$0xff]
    %v1411 = vld [vmem:[#allocation7 + $0x1e8] sm:$0xff]
    %v1412 = vld [vmem:[#allocation7 + $0x1f0] sm:$0xff]
    %v1413 = vld [vmem:[#allocation7 + $0x1f8] sm:$0xff]
    %1414 = vmatprep.subr.mxu0 %v1351
    %1415 = vmatpush1.msra.mxu0 %v1350
    %1416 = vmatprep.subr.mxu0 %v1355
    %1417 = vmatpush1.msra.mxu0 %v1354
    %1418 = vmatprep.subr.mxu0 %v1359
    %1419 = vmatpush1.msra.mxu0 %v1358
    %1420 = vmatprep.subr.mxu0 %v1363
    %1421 = vmatpush1.msra.mxu0 %v1362
    %1422 = vmatprep.subr.mxu0 %v1367
    %1423 = vmatpush1.msra.mxu0 %v1366
    %1424 = vmatprep.subr.mxu0 %v1371
    %1425 = vmatpush1.msra.mxu0 %v1370
    %1426 = vmatprep.subr.mxu0 %v1375
    %1427 = vmatpush1.msra.mxu0 %v1374
    %1428 = vmatprep.subr.mxu0 %v1379
    %1429 = vmatpush1.msra.mxu0 %v1378
    %1430 = vmatprep.subr.mxu0 %v1383
    %1431 = vmatpush1.msra.mxu0 %v1382
    %1432 = vmatprep.subr.mxu0 %v1387
    %1433 = vmatpush1.msra.mxu0 %v1386
    %1434 = vmatprep.subr.mxu0 %v1391
    %1435 = vmatpush1.msra.mxu0 %v1390
    %1436 = vmatprep.subr.mxu0 %v1395
    %1437 = vmatpush1.msra.mxu0 %v1394
    %1438 = vmatprep.subr.mxu0 %v1399
    %1439 = vmatpush1.msra.mxu0 %v1398
    %1440 = vmatprep.subr.mxu0 %v1403
    %1441 = vmatpush1.msra.mxu0 %v1402
    %1442 = vmatprep.subr.mxu0 %v1407
    %1443 = vmatpush1.msra.mxu0 %v1406
    %1444 = vmatprep.subr.mxu0 %v1411
    %1445 = vmatpush1.msra.mxu0 %v1410
    %1446 = vmatprep.subr.mxu0 0.0
    %1447 = vmatpush1.msra.mxu0 0.0
    %1448 = vmatprep.subr.mxu0 0.0
    %1449 = vmatpush1.msra.mxu0 0.0
    %1450 = vmatprep.subr.mxu0 0.0
    %1451 = vmatpush1.msra.mxu0 0.0
    %1452 = vmatprep.subr.mxu0 0.0
    %1453 = vmatpush1.msra.mxu0 0.0
    %1454 = vmatprep.subr.mxu0 0.0
    %1455 = vmatpush1.msra.mxu0 0.0
    %1456 = vmatprep.subr.mxu0 0.0
    %1457 = vmatpush1.msra.mxu0 0.0
    %1458 = vmatprep.subr.mxu0 0.0
    %1459 = vmatpush1.msra.mxu0 0.0
    %1460 = vmatprep.subr.mxu0 0.0
    %1461 = vmatpush1.msra.mxu0 0.0
    %1462 = vmatprep.subr.mxu0 0.0
    %1463 = vmatpush1.msra.mxu0 0.0
    %1464 = vmatprep.subr.mxu0 0.0
    %1465 = vmatpush1.msra.mxu0 0.0
    %1466 = vmatprep.subr.mxu0 0.0
    %1467 = vmatpush1.msra.mxu0 0.0
    %1468 = vmatprep.subr.mxu0 0.0
    %1469 = vmatpush1.msra.mxu0 0.0
    %1470 = vmatprep.subr.mxu0 0.0
    %1471 = vmatpush1.msra.mxu0 0.0
    %1472 = vmatprep.subr.mxu0 0.0
    %1473 = vmatpush1.msra.mxu0 0.0
    %1474 = vmatprep.subr.mxu0 0.0
    %1475 = vmatpush1.msra.mxu0 0.0
    %1476 = vmatprep.subr.mxu0 0.0
    %1477 = vmatpush1.msra.mxu0 0.0
    %1478 = vmatprep.mubr.f32.mxu0 0.0
    %1479 = vmatmul.mubr.f32.gmra.mrb[0].mxu0 %v1340
    %v1480 = vpop.f32.mrb[0].mxu0
    %v1481 = vadd.f32 0.0, %v1480
    %v1482 = vpop.f32.mrb[0].mxu0
    %v1483 = vadd.f32 0.0, %v1482
    %1484 = vdwg.mxu0
    %1485 = vmatprep.subr.mxu0 %v1353
    %1486 = vmatpush1.msra.mxu0 %v1352
    %1487 = vmatprep.subr.mxu0 %v1357
    %1488 = vmatpush1.msra.mxu0 %v1356
    %1489 = vmatprep.subr.mxu0 %v1361
    %1490 = vmatpush1.msra.mxu0 %v1360
    %1491 = vmatprep.subr.mxu0 %v1365
    %1492 = vmatpush1.msra.mxu0 %v1364
    %1493 = vmatprep.subr.mxu0 %v1369
    %1494 = vmatpush1.msra.mxu0 %v1368
    %1495 = vmatprep.subr.mxu0 %v1373
    %1496 = vmatpush1.msra.mxu0 %v1372
    %1497 = vmatprep.subr.mxu0 %v1377
    %1498 = vmatpush1.msra.mxu0 %v1376
    %1499 = vmatprep.subr.mxu0 %v1381
    %1500 = vmatpush1.msra.mxu0 %v1380
    %1501 = vmatprep.subr.mxu0 %v1385
    %1502 = vmatpush1.msra.mxu0 %v1384
    %1503 = vmatprep.subr.mxu0 %v1389
    %1504 = vmatpush1.msra.mxu0 %v1388
    %1505 = vmatprep.subr.mxu0 %v1393
    %1506 = vmatpush1.msra.mxu0 %v1392
    %1507 = vmatprep.subr.mxu0 %v1397
    %1508 = vmatpush1.msra.mxu0 %v1396
    %1509 = vmatprep.subr.mxu0 %v1401
    %1510 = vmatpush1.msra.mxu0 %v1400
    %1511 = vmatprep.subr.mxu0 %v1405
    %1512 = vmatpush1.msra.mxu0 %v1404
    %1513 = vmatprep.subr.mxu0 %v1409
    %1514 = vmatpush1.msra.mxu0 %v1408
    %1515 = vmatprep.subr.mxu0 %v1413
    %1516 = vmatpush1.msra.mxu0 %v1412
    %1517 = vmatprep.subr.mxu0 0.0
    %1518 = vmatpush1.msra.mxu0 0.0
    %1519 = vmatprep.subr.mxu0 0.0
    %1520 = vmatpush1.msra.mxu0 0.0
    %1521 = vmatprep.subr.mxu0 0.0
    %1522 = vmatpush1.msra.mxu0 0.0
    %1523 = vmatprep.subr.mxu0 0.0
    %1524 = vmatpush1.msra.mxu0 0.0
    %1525 = vmatprep.subr.mxu0 0.0
    %1526 = vmatpush1.msra.mxu0 0.0
    %1527 = vmatprep.subr.mxu0 0.0
    %1528 = vmatpush1.msra.mxu0 0.0
    %1529 = vmatprep.subr.mxu0 0.0
    %1530 = vmatpush1.msra.mxu0 0.0
    %1531 = vmatprep.subr.mxu0 0.0
    %1532 = vmatpush1.msra.mxu0 0.0
    %1533 = vmatprep.subr.mxu0 0.0
    %1534 = vmatpush1.msra.mxu0 0.0
    %1535 = vmatprep.subr.mxu0 0.0
    %1536 = vmatpush1.msra.mxu0 0.0
    %1537 = vmatprep.subr.mxu0 0.0
    %1538 = vmatpush1.msra.mxu0 0.0
    %1539 = vmatprep.subr.mxu0 0.0
    %1540 = vmatpush1.msra.mxu0 0.0
    %1541 = vmatprep.subr.mxu0 0.0
    %1542 = vmatpush1.msra.mxu0 0.0
    %1543 = vmatprep.subr.mxu0 0.0
    %1544 = vmatpush1.msra.mxu0 0.0
    %1545 = vmatprep.subr.mxu0 0.0
    %1546 = vmatpush1.msra.mxu0 0.0
    %1547 = vmatprep.subr.mxu0 0.0
    %1548 = vmatpush1.msra.mxu0 0.0
    %1549 = vmatprep.mubr.f32.mxu0 0.0
    %1550 = vmatmul.mubr.f32.gmra.mrb[0].mxu0 %v1340
    %v1551 = vpop.f32.mrb[0].mxu0
    %v1552 = vadd.f32 0.0, %v1551
    %v1553 = vpop.f32.mrb[0].mxu0
    %v1554 = vadd.f32 0.0, %v1553
    %1555 = vdwg.mxu0
    %v1556 = vadd.f32 %v1346, %v1481
    %v1557 = vadd.f32 %v1347, %v1483
    %v1558 = vadd.f32 %v1348, %v1552
    %v1559 = vadd.f32 %v1349, %v1554
    %v1560 = vxor.u32 %v1556, 2147483648
    %v1561 = vmul.f32 %v1560, 1.442695
    %v1562 = vpow.pop %v1561
    %v1563 = vadd.f32 %v1562, 1.0
    %v1564 = vrcp.pop %v1563
    %v1565 = vmul.f32 1.0, %v1564
    %v1566 = vxor.u32 %v1557, 2147483648
    %v1567 = vmul.f32 %v1566, 1.442695
    %v1568 = vpow.pop %v1567
    %v1569 = vadd.f32 %v1568, 1.0
    %v1570 = vrcp.pop %v1569
    %v1571 = vmul.f32 1.0, %v1570
    %v1572 = vtanh.pop %v1558
    %v1573 = vxor.u32 %v1559, 2147483648
    %v1574 = vmul.f32 %v1573, 1.442695
    %v1575 = vpow.pop %v1574
    %v1576 = vadd.f32 %v1575, 1.0
    %v1577 = vrcp.pop %v1576
    %v1578 = vmul.f32 1.0, %v1577
    %v1579 = vmul.f32 %v1571, %v1338
    %v1580 = vmul.f32 %v1565, %v1572
    %v1581 = vadd.f32 %v1579, %v1580
    %v1582 = vtanh.pop %v1581
    %v1583 = vmul.f32 %v1578, %v1582
    %s1584 = scalar_lea.vmem [#allocation2], 32
    %1585 = vst [vmem:[%s1584] sm:$0xff] %v1583
    %s1586 = smul.u32 5, 4
    %s1587 = smul.addr %s1586, 8
    %s1588 = scalar_lea.vmem [#allocation3], %s1587
    %v1589 = vld [vmem:[%s1588] sm:$0xff]
    %v1590 = vld [vmem:[%s1588 + $0x8] sm:$0xff]
    %v1591 = vld [vmem:[%s1588 + $0x10] sm:$0xff]
    %v1592 = vld [vmem:[%s1588 + $0x18] sm:$0xff]
    %v1593 = vld [vmem:[#allocation7] sm:$0xff]
    %v1594 = vld [vmem:[#allocation7 + $0x8] sm:$0xff]
    %v1595 = vld [vmem:[#allocation7 + $0x10] sm:$0xff]
    %v1596 = vld [vmem:[#allocation7 + $0x18] sm:$0xff]
    %v1597 = vld [vmem:[#allocation7 + $0x20] sm:$0xff]
    %v1598 = vld [vmem:[#allocation7 + $0x28] sm:$0xff]
    %v1599 = vld [vmem:[#allocation7 + $0x30] sm:$0xff]
    %v1600 = vld [vmem:[#allocation7 + $0x38] sm:$0xff]
    %v1601 = vld [vmem:[#allocation7 + $0x40] sm:$0xff]
    %v1602 = vld [vmem:[#allocation7 + $0x48] sm:$0xff]
    %v1603 = vld [vmem:[#allocation7 + $0x50] sm:$0xff]
    %v1604 = vld [vmem:[#allocation7 + $0x58] sm:$0xff]
    %v1605 = vld [vmem:[#allocation7 + $0x60] sm:$0xff]
    %v1606 = vld [vmem:[#allocation7 + $0x68] sm:$0xff]
    %v1607 = vld [vmem:[#allocation7 + $0x70] sm:$0xff]
    %v1608 = vld [vmem:[#allocation7 + $0x78] sm:$0xff]
    %v1609 = vld [vmem:[#allocation7 + $0x80] sm:$0xff]
    %v1610 = vld [vmem:[#allocation7 + $0x88] sm:$0xff]
    %v1611 = vld [vmem:[#allocation7 + $0x90] sm:$0xff]
    %v1612 = vld [vmem:[#allocation7 + $0x98] sm:$0xff]
    %v1613 = vld [vmem:[#allocation7 + $0xa0] sm:$0xff]
    %v1614 = vld [vmem:[#allocation7 + $0xa8] sm:$0xff]
    %v1615 = vld [vmem:[#allocation7 + $0xb0] sm:$0xff]
    %v1616 = vld [vmem:[#allocation7 + $0xb8] sm:$0xff]
    %v1617 = vld [vmem:[#allocation7 + $0xc0] sm:$0xff]
    %v1618 = vld [vmem:[#allocation7 + $0xc8] sm:$0xff]
    %v1619 = vld [vmem:[#allocation7 + $0xd0] sm:$0xff]
    %v1620 = vld [vmem:[#allocation7 + $0xd8] sm:$0xff]
    %v1621 = vld [vmem:[#allocation7 + $0xe0] sm:$0xff]
    %v1622 = vld [vmem:[#allocation7 + $0xe8] sm:$0xff]
    %v1623 = vld [vmem:[#allocation7 + $0xf0] sm:$0xff]
    %v1624 = vld [vmem:[#allocation7 + $0xf8] sm:$0xff]
    %v1625 = vld [vmem:[#allocation7 + $0x100] sm:$0xff]
    %v1626 = vld [vmem:[#allocation7 + $0x108] sm:$0xff]
    %v1627 = vld [vmem:[#allocation7 + $0x110] sm:$0xff]
    %v1628 = vld [vmem:[#allocation7 + $0x118] sm:$0xff]
    %v1629 = vld [vmem:[#allocation7 + $0x120] sm:$0xff]
    %v1630 = vld [vmem:[#allocation7 + $0x128] sm:$0xff]
    %v1631 = vld [vmem:[#allocation7 + $0x130] sm:$0xff]
    %v1632 = vld [vmem:[#allocation7 + $0x138] sm:$0xff]
    %v1633 = vld [vmem:[#allocation7 + $0x140] sm:$0xff]
    %v1634 = vld [vmem:[#allocation7 + $0x148] sm:$0xff]
    %v1635 = vld [vmem:[#allocation7 + $0x150] sm:$0xff]
    %v1636 = vld [vmem:[#allocation7 + $0x158] sm:$0xff]
    %v1637 = vld [vmem:[#allocation7 + $0x160] sm:$0xff]
    %v1638 = vld [vmem:[#allocation7 + $0x168] sm:$0xff]
    %v1639 = vld [vmem:[#allocation7 + $0x170] sm:$0xff]
    %v1640 = vld [vmem:[#allocation7 + $0x178] sm:$0xff]
    %v1641 = vld [vmem:[#allocation7 + $0x180] sm:$0xff]
    %v1642 = vld [vmem:[#allocation7 + $0x188] sm:$0xff]
    %v1643 = vld [vmem:[#allocation7 + $0x190] sm:$0xff]
    %v1644 = vld [vmem:[#allocation7 + $0x198] sm:$0xff]
    %v1645 = vld [vmem:[#allocation7 + $0x1a0] sm:$0xff]
    %v1646 = vld [vmem:[#allocation7 + $0x1a8] sm:$0xff]
    %v1647 = vld [vmem:[#allocation7 + $0x1b0] sm:$0xff]
    %v1648 = vld [vmem:[#allocation7 + $0x1b8] sm:$0xff]
    %v1649 = vld [vmem:[#allocation7 + $0x1c0] sm:$0xff]
    %v1650 = vld [vmem:[#allocation7 + $0x1c8] sm:$0xff]
    %v1651 = vld [vmem:[#allocation7 + $0x1d0] sm:$0xff]
    %v1652 = vld [vmem:[#allocation7 + $0x1d8] sm:$0xff]
    %v1653 = vld [vmem:[#allocation7 + $0x1e0] sm:$0xff]
    %v1654 = vld [vmem:[#allocation7 + $0x1e8] sm:$0xff]
    %v1655 = vld [vmem:[#allocation7 + $0x1f0] sm:$0xff]
    %v1656 = vld [vmem:[#allocation7 + $0x1f8] sm:$0xff]
    %1657 = vmatprep.subr.mxu0 %v1594
    %1658 = vmatpush1.msra.mxu0 %v1593
    %1659 = vmatprep.subr.mxu0 %v1598
    %1660 = vmatpush1.msra.mxu0 %v1597
    %1661 = vmatprep.subr.mxu0 %v1602
    %1662 = vmatpush1.msra.mxu0 %v1601
    %1663 = vmatprep.subr.mxu0 %v1606
    %1664 = vmatpush1.msra.mxu0 %v1605
    %1665 = vmatprep.subr.mxu0 %v1610
    %1666 = vmatpush1.msra.mxu0 %v1609
    %1667 = vmatprep.subr.mxu0 %v1614
    %1668 = vmatpush1.msra.mxu0 %v1613
    %1669 = vmatprep.subr.mxu0 %v1618
    %1670 = vmatpush1.msra.mxu0 %v1617
    %1671 = vmatprep.subr.mxu0 %v1622
    %1672 = vmatpush1.msra.mxu0 %v1621
    %1673 = vmatprep.subr.mxu0 %v1626
    %1674 = vmatpush1.msra.mxu0 %v1625
    %1675 = vmatprep.subr.mxu0 %v1630
    %1676 = vmatpush1.msra.mxu0 %v1629
    %1677 = vmatprep.subr.mxu0 %v1634
    %1678 = vmatpush1.msra.mxu0 %v1633
    %1679 = vmatprep.subr.mxu0 %v1638
    %1680 = vmatpush1.msra.mxu0 %v1637
    %1681 = vmatprep.subr.mxu0 %v1642
    %1682 = vmatpush1.msra.mxu0 %v1641
    %1683 = vmatprep.subr.mxu0 %v1646
    %1684 = vmatpush1.msra.mxu0 %v1645
    %1685 = vmatprep.subr.mxu0 %v1650
    %1686 = vmatpush1.msra.mxu0 %v1649
    %1687 = vmatprep.subr.mxu0 %v1654
    %1688 = vmatpush1.msra.mxu0 %v1653
    %1689 = vmatprep.subr.mxu0 0.0
    %1690 = vmatpush1.msra.mxu0 0.0
    %1691 = vmatprep.subr.mxu0 0.0
    %1692 = vmatpush1.msra.mxu0 0.0
    %1693 = vmatprep.subr.mxu0 0.0
    %1694 = vmatpush1.msra.mxu0 0.0
    %1695 = vmatprep.subr.mxu0 0.0
    %1696 = vmatpush1.msra.mxu0 0.0
    %1697 = vmatprep.subr.mxu0 0.0
    %1698 = vmatpush1.msra.mxu0 0.0
    %1699 = vmatprep.subr.mxu0 0.0
    %1700 = vmatpush1.msra.mxu0 0.0
    %1701 = vmatprep.subr.mxu0 0.0
    %1702 = vmatpush1.msra.mxu0 0.0
    %1703 = vmatprep.subr.mxu0 0.0
    %1704 = vmatpush1.msra.mxu0 0.0
    %1705 = vmatprep.subr.mxu0 0.0
    %1706 = vmatpush1.msra.mxu0 0.0
    %1707 = vmatprep.subr.mxu0 0.0
    %1708 = vmatpush1.msra.mxu0 0.0
    %1709 = vmatprep.subr.mxu0 0.0
    %1710 = vmatpush1.msra.mxu0 0.0
    %1711 = vmatprep.subr.mxu0 0.0
    %1712 = vmatpush1.msra.mxu0 0.0
    %1713 = vmatprep.subr.mxu0 0.0
    %1714 = vmatpush1.msra.mxu0 0.0
    %1715 = vmatprep.subr.mxu0 0.0
    %1716 = vmatpush1.msra.mxu0 0.0
    %1717 = vmatprep.subr.mxu0 0.0
    %1718 = vmatpush1.msra.mxu0 0.0
    %1719 = vmatprep.subr.mxu0 0.0
    %1720 = vmatpush1.msra.mxu0 0.0
    %1721 = vmatprep.mubr.f32.mxu0 0.0
    %1722 = vmatmul.mubr.f32.gmra.mrb[0].mxu0 %v1583
    %v1723 = vpop.f32.mrb[0].mxu0
    %v1724 = vadd.f32 0.0, %v1723
    %v1725 = vpop.f32.mrb[0].mxu0
    %v1726 = vadd.f32 0.0, %v1725
    %1727 = vdwg.mxu0
    %1728 = vmatprep.subr.mxu0 %v1596
    %1729 = vmatpush1.msra.mxu0 %v1595
    %1730 = vmatprep.subr.mxu0 %v1600
    %1731 = vmatpush1.msra.mxu0 %v1599
    %1732 = vmatprep.subr.mxu0 %v1604
    %1733 = vmatpush1.msra.mxu0 %v1603
    %1734 = vmatprep.subr.mxu0 %v1608
    %1735 = vmatpush1.msra.mxu0 %v1607
    %1736 = vmatprep.subr.mxu0 %v1612
    %1737 = vmatpush1.msra.mxu0 %v1611
    %1738 = vmatprep.subr.mxu0 %v1616
    %1739 = vmatpush1.msra.mxu0 %v1615
    %1740 = vmatprep.subr.mxu0 %v1620
    %1741 = vmatpush1.msra.mxu0 %v1619
    %1742 = vmatprep.subr.mxu0 %v1624
    %1743 = vmatpush1.msra.mxu0 %v1623
    %1744 = vmatprep.subr.mxu0 %v1628
    %1745 = vmatpush1.msra.mxu0 %v1627
    %1746 = vmatprep.subr.mxu0 %v1632
    %1747 = vmatpush1.msra.mxu0 %v1631
    %1748 = vmatprep.subr.mxu0 %v1636
    %1749 = vmatpush1.msra.mxu0 %v1635
    %1750 = vmatprep.subr.mxu0 %v1640
    %1751 = vmatpush1.msra.mxu0 %v1639
    %1752 = vmatprep.subr.mxu0 %v1644
    %1753 = vmatpush1.msra.mxu0 %v1643
    %1754 = vmatprep.subr.mxu0 %v1648
    %1755 = vmatpush1.msra.mxu0 %v1647
    %1756 = vmatprep.subr.mxu0 %v1652
    %1757 = vmatpush1.msra.mxu0 %v1651
    %1758 = vmatprep.subr.mxu0 %v1656
    %1759 = vmatpush1.msra.mxu0 %v1655
    %1760 = vmatprep.subr.mxu0 0.0
    %1761 = vmatpush1.msra.mxu0 0.0
    %1762 = vmatprep.subr.mxu0 0.0
    %1763 = vmatpush1.msra.mxu0 0.0
    %1764 = vmatprep.subr.mxu0 0.0
    %1765 = vmatpush1.msra.mxu0 0.0
    %1766 = vmatprep.subr.mxu0 0.0
    %1767 = vmatpush1.msra.mxu0 0.0
    %1768 = vmatprep.subr.mxu0 0.0
    %1769 = vmatpush1.msra.mxu0 0.0
    %1770 = vmatprep.subr.mxu0 0.0
    %1771 = vmatpush1.msra.mxu0 0.0
    %1772 = vmatprep.subr.mxu0 0.0
    %1773 = vmatpush1.msra.mxu0 0.0
    %1774 = vmatprep.subr.mxu0 0.0
    %1775 = vmatpush1.msra.mxu0 0.0
    %1776 = vmatprep.subr.mxu0 0.0
    %1777 = vmatpush1.msra.mxu0 0.0
    %1778 = vmatprep.subr.mxu0 0.0
    %1779 = vmatpush1.msra.mxu0 0.0
    %1780 = vmatprep.subr.mxu0 0.0
    %1781 = vmatpush1.msra.mxu0 0.0
    %1782 = vmatprep.subr.mxu0 0.0
    %1783 = vmatpush1.msra.mxu0 0.0
    %1784 = vmatprep.subr.mxu0 0.0
    %1785 = vmatpush1.msra.mxu0 0.0
    %1786 = vmatprep.subr.mxu0 0.0
    %1787 = vmatpush1.msra.mxu0 0.0
    %1788 = vmatprep.subr.mxu0 0.0
    %1789 = vmatpush1.msra.mxu0 0.0
    %1790 = vmatprep.subr.mxu0 0.0
    %1791 = vmatpush1.msra.mxu0 0.0
    %1792 = vmatprep.mubr.f32.mxu0 0.0
    %1793 = vmatmul.mubr.f32.gmra.mrb[0].mxu0 %v1583
    %v1794 = vpop.f32.mrb[0].mxu0
    %v1795 = vadd.f32 0.0, %v1794
    %v1796 = vpop.f32.mrb[0].mxu0
    %v1797 = vadd.f32 0.0, %v1796
    %1798 = vdwg.mxu0
    %v1799 = vadd.f32 %v1589, %v1724
    %v1800 = vadd.f32 %v1590, %v1726
    %v1801 = vadd.f32 %v1591, %v1795
    %v1802 = vadd.f32 %v1592, %v1797
    %v1803 = vxor.u32 %v1799, 2147483648
    %v1804 = vmul.f32 %v1803, 1.442695
    %v1805 = vpow.pop %v1804
    %v1806 = vadd.f32 %v1805, 1.0
    %v1807 = vrcp.pop %v1806
    %v1808 = vmul.f32 1.0, %v1807
    %v1809 = vxor.u32 %v1800, 2147483648
    %v1810 = vmul.f32 %v1809, 1.442695
    %v1811 = vpow.pop %v1810
    %v1812 = vadd.f32 %v1811, 1.0
    %v1813 = vrcp.pop %v1812
    %v1814 = vmul.f32 1.0, %v1813
    %v1815 = vtanh.pop %v1801
    %v1816 = vxor.u32 %v1802, 2147483648
    %v1817 = vmul.f32 %v1816, 1.442695
    %v1818 = vpow.pop %v1817
    %v1819 = vadd.f32 %v1818, 1.0
    %v1820 = vrcp.pop %v1819
    %v1821 = vmul.f32 1.0, %v1820
    %v1822 = vmul.f32 %v1814, %v1581
    %v1823 = vmul.f32 %v1808, %v1815
    %v1824 = vadd.f32 %v1822, %v1823
    %v1825 = vtanh.pop %v1824
    %v1826 = vmul.f32 %v1821, %v1825
    %s1827 = scalar_lea.vmem [#allocation2], 40
    %1828 = vst [vmem:[%s1827] sm:$0xff] %v1826
    %s1829 = smul.u32 6, 4
    %s1830 = smul.addr %s1829, 8
    %s1831 = scalar_lea.vmem [#allocation3], %s1830
    %v1832 = vld [vmem:[%s1831] sm:$0xff]
    %v1833 = vld [vmem:[%s1831 + $0x8] sm:$0xff]
    %v1834 = vld [vmem:[%s1831 + $0x10] sm:$0xff]
    %v1835 = vld [vmem:[%s1831 + $0x18] sm:$0xff]
    %v1836 = vld [vmem:[#allocation7] sm:$0xff]
    %v1837 = vld [vmem:[#allocation7 + $0x8] sm:$0xff]
    %v1838 = vld [vmem:[#allocation7 + $0x10] sm:$0xff]
    %v1839 = vld [vmem:[#allocation7 + $0x18] sm:$0xff]
    %v1840 = vld [vmem:[#allocation7 + $0x20] sm:$0xff]
    %v1841 = vld [vmem:[#allocation7 + $0x28] sm:$0xff]
    %v1842 = vld [vmem:[#allocation7 + $0x30] sm:$0xff]
    %v1843 = vld [vmem:[#allocation7 + $0x38] sm:$0xff]
    %v1844 = vld [vmem:[#allocation7 + $0x40] sm:$0xff]
    %v1845 = vld [vmem:[#allocation7 + $0x48] sm:$0xff]
    %v1846 = vld [vmem:[#allocation7 + $0x50] sm:$0xff]
    %v1847 = vld [vmem:[#allocation7 + $0x58] sm:$0xff]
    %v1848 = vld [vmem:[#allocation7 + $0x60] sm:$0xff]
    %v1849 = vld [vmem:[#allocation7 + $0x68] sm:$0xff]
    %v1850 = vld [vmem:[#allocation7 + $0x70] sm:$0xff]
    %v1851 = vld [vmem:[#allocation7 + $0x78] sm:$0xff]
    %v1852 = vld [vmem:[#allocation7 + $0x80] sm:$0xff]
    %v1853 = vld [vmem:[#allocation7 + $0x88] sm:$0xff]
    %v1854 = vld [vmem:[#allocation7 + $0x90] sm:$0xff]
    %v1855 = vld [vmem:[#allocation7 + $0x98] sm:$0xff]
    %v1856 = vld [vmem:[#allocation7 + $0xa0] sm:$0xff]
    %v1857 = vld [vmem:[#allocation7 + $0xa8] sm:$0xff]
    %v1858 = vld [vmem:[#allocation7 + $0xb0] sm:$0xff]
    %v1859 = vld [vmem:[#allocation7 + $0xb8] sm:$0xff]
    %v1860 = vld [vmem:[#allocation7 + $0xc0] sm:$0xff]
    %v1861 = vld [vmem:[#allocation7 + $0xc8] sm:$0xff]
    %v1862 = vld [vmem:[#allocation7 + $0xd0] sm:$0xff]
    %v1863 = vld [vmem:[#allocation7 + $0xd8] sm:$0xff]
    %v1864 = vld [vmem:[#allocation7 + $0xe0] sm:$0xff]
    %v1865 = vld [vmem:[#allocation7 + $0xe8] sm:$0xff]
    %v1866 = vld [vmem:[#allocation7 + $0xf0] sm:$0xff]
    %v1867 = vld [vmem:[#allocation7 + $0xf8] sm:$0xff]
    %v1868 = vld [vmem:[#allocation7 + $0x100] sm:$0xff]
    %v1869 = vld [vmem:[#allocation7 + $0x108] sm:$0xff]
    %v1870 = vld [vmem:[#allocation7 + $0x110] sm:$0xff]
    %v1871 = vld [vmem:[#allocation7 + $0x118] sm:$0xff]
    %v1872 = vld [vmem:[#allocation7 + $0x120] sm:$0xff]
    %v1873 = vld [vmem:[#allocation7 + $0x128] sm:$0xff]
    %v1874 = vld [vmem:[#allocation7 + $0x130] sm:$0xff]
    %v1875 = vld [vmem:[#allocation7 + $0x138] sm:$0xff]
    %v1876 = vld [vmem:[#allocation7 + $0x140] sm:$0xff]
    %v1877 = vld [vmem:[#allocation7 + $0x148] sm:$0xff]
    %v1878 = vld [vmem:[#allocation7 + $0x150] sm:$0xff]
    %v1879 = vld [vmem:[#allocation7 + $0x158] sm:$0xff]
    %v1880 = vld [vmem:[#allocation7 + $0x160] sm:$0xff]
    %v1881 = vld [vmem:[#allocation7 + $0x168] sm:$0xff]
    %v1882 = vld [vmem:[#allocation7 + $0x170] sm:$0xff]
    %v1883 = vld [vmem:[#allocation7 + $0x178] sm:$0xff]
    %v1884 = vld [vmem:[#allocation7 + $0x180] sm:$0xff]
    %v1885 = vld [vmem:[#allocation7 + $0x188] sm:$0xff]
    %v1886 = vld [vmem:[#allocation7 + $0x190] sm:$0xff]
    %v1887 = vld [vmem:[#allocation7 + $0x198] sm:$0xff]
    %v1888 = vld [vmem:[#allocation7 + $0x1a0] sm:$0xff]
    %v1889 = vld [vmem:[#allocation7 + $0x1a8] sm:$0xff]
    %v1890 = vld [vmem:[#allocation7 + $0x1b0] sm:$0xff]
    %v1891 = vld [vmem:[#allocation7 + $0x1b8] sm:$0xff]
    %v1892 = vld [vmem:[#allocation7 + $0x1c0] sm:$0xff]
    %v1893 = vld [vmem:[#allocation7 + $0x1c8] sm:$0xff]
    %v1894 = vld [vmem:[#allocation7 + $0x1d0] sm:$0xff]
    %v1895 = vld [vmem:[#allocation7 + $0x1d8] sm:$0xff]
    %v1896 = vld [vmem:[#allocation7 + $0x1e0] sm:$0xff]
    %v1897 = vld [vmem:[#allocation7 + $0x1e8] sm:$0xff]
    %v1898 = vld [vmem:[#allocation7 + $0x1f0] sm:$0xff]
    %v1899 = vld [vmem:[#allocation7 + $0x1f8] sm:$0xff]
    %1900 = vmatprep.subr.mxu0 %v1837
    %1901 = vmatpush1.msra.mxu0 %v1836
    %1902 = vmatprep.subr.mxu0 %v1841
    %1903 = vmatpush1.msra.mxu0 %v1840
    %1904 = vmatprep.subr.mxu0 %v1845
    %1905 = vmatpush1.msra.mxu0 %v1844
    %1906 = vmatprep.subr.mxu0 %v1849
    %1907 = vmatpush1.msra.mxu0 %v1848
    %1908 = vmatprep.subr.mxu0 %v1853
    %1909 = vmatpush1.msra.mxu0 %v1852
    %1910 = vmatprep.subr.mxu0 %v1857
    %1911 = vmatpush1.msra.mxu0 %v1856
    %1912 = vmatprep.subr.mxu0 %v1861
    %1913 = vmatpush1.msra.mxu0 %v1860
    %1914 = vmatprep.subr.mxu0 %v1865
    %1915 = vmatpush1.msra.mxu0 %v1864
    %1916 = vmatprep.subr.mxu0 %v1869
    %1917 = vmatpush1.msra.mxu0 %v1868
    %1918 = vmatprep.subr.mxu0 %v1873
    %1919 = vmatpush1.msra.mxu0 %v1872
    %1920 = vmatprep.subr.mxu0 %v1877
    %1921 = vmatpush1.msra.mxu0 %v1876
    %1922 = vmatprep.subr.mxu0 %v1881
    %1923 = vmatpush1.msra.mxu0 %v1880
    %1924 = vmatprep.subr.mxu0 %v1885
    %1925 = vmatpush1.msra.mxu0 %v1884
    %1926 = vmatprep.subr.mxu0 %v1889
    %1927 = vmatpush1.msra.mxu0 %v1888
    %1928 = vmatprep.subr.mxu0 %v1893
    %1929 = vmatpush1.msra.mxu0 %v1892
    %1930 = vmatprep.subr.mxu0 %v1897
    %1931 = vmatpush1.msra.mxu0 %v1896
    %1932 = vmatprep.subr.mxu0 0.0
    %1933 = vmatpush1.msra.mxu0 0.0
    %1934 = vmatprep.subr.mxu0 0.0
    %1935 = vmatpush1.msra.mxu0 0.0
    %1936 = vmatprep.subr.mxu0 0.0
    %1937 = vmatpush1.msra.mxu0 0.0
    %1938 = vmatprep.subr.mxu0 0.0
    %1939 = vmatpush1.msra.mxu0 0.0
    %1940 = vmatprep.subr.mxu0 0.0
    %1941 = vmatpush1.msra.mxu0 0.0
    %1942 = vmatprep.subr.mxu0 0.0
    %1943 = vmatpush1.msra.mxu0 0.0
    %1944 = vmatprep.subr.mxu0 0.0
    %1945 = vmatpush1.msra.mxu0 0.0
    %1946 = vmatprep.subr.mxu0 0.0
    %1947 = vmatpush1.msra.mxu0 0.0
    %1948 = vmatprep.subr.mxu0 0.0
    %1949 = vmatpush1.msra.mxu0 0.0
    %1950 = vmatprep.subr.mxu0 0.0
    %1951 = vmatpush1.msra.mxu0 0.0
    %1952 = vmatprep.subr.mxu0 0.0
    %1953 = vmatpush1.msra.mxu0 0.0
    %1954 = vmatprep.subr.mxu0 0.0
    %1955 = vmatpush1.msra.mxu0 0.0
    %1956 = vmatprep.subr.mxu0 0.0
    %1957 = vmatpush1.msra.mxu0 0.0
    %1958 = vmatprep.subr.mxu0 0.0
    %1959 = vmatpush1.msra.mxu0 0.0
    %1960 = vmatprep.subr.mxu0 0.0
    %1961 = vmatpush1.msra.mxu0 0.0
    %1962 = vmatprep.subr.mxu0 0.0
    %1963 = vmatpush1.msra.mxu0 0.0
    %1964 = vmatprep.mubr.f32.mxu0 0.0
    %1965 = vmatmul.mubr.f32.gmra.mrb[0].mxu0 %v1826
    %v1966 = vpop.f32.mrb[0].mxu0
    %v1967 = vadd.f32 0.0, %v1966
    %v1968 = vpop.f32.mrb[0].mxu0
    %v1969 = vadd.f32 0.0, %v1968
    %1970 = vdwg.mxu0
    %1971 = vmatprep.subr.mxu0 %v1839
    %1972 = vmatpush1.msra.mxu0 %v1838
    %1973 = vmatprep.subr.mxu0 %v1843
    %1974 = vmatpush1.msra.mxu0 %v1842
    %1975 = vmatprep.subr.mxu0 %v1847
    %1976 = vmatpush1.msra.mxu0 %v1846
    %1977 = vmatprep.subr.mxu0 %v1851
    %1978 = vmatpush1.msra.mxu0 %v1850
    %1979 = vmatprep.subr.mxu0 %v1855
    %1980 = vmatpush1.msra.mxu0 %v1854
    %1981 = vmatprep.subr.mxu0 %v1859
    %1982 = vmatpush1.msra.mxu0 %v1858
    %1983 = vmatprep.subr.mxu0 %v1863
    %1984 = vmatpush1.msra.mxu0 %v1862
    %1985 = vmatprep.subr.mxu0 %v1867
    %1986 = vmatpush1.msra.mxu0 %v1866
    %1987 = vmatprep.subr.mxu0 %v1871
    %1988 = vmatpush1.msra.mxu0 %v1870
    %1989 = vmatprep.subr.mxu0 %v1875
    %1990 = vmatpush1.msra.mxu0 %v1874
    %1991 = vmatprep.subr.mxu0 %v1879
    %1992 = vmatpush1.msra.mxu0 %v1878
    %1993 = vmatprep.subr.mxu0 %v1883
    %1994 = vmatpush1.msra.mxu0 %v1882
    %1995 = vmatprep.subr.mxu0 %v1887
    %1996 = vmatpush1.msra.mxu0 %v1886
    %1997 = vmatprep.subr.mxu0 %v1891
    %1998 = vmatpush1.msra.mxu0 %v1890
    %1999 = vmatprep.subr.mxu0 %v1895
    %2000 = vmatpush1.msra.mxu0 %v1894
    %2001 = vmatprep.subr.mxu0 %v1899
    %2002 = vmatpush1.msra.mxu0 %v1898
    %2003 = vmatprep.subr.mxu0 0.0
    %2004 = vmatpush1.msra.mxu0 0.0
    %2005 = vmatprep.subr.mxu0 0.0
    %2006 = vmatpush1.msra.mxu0 0.0
    %2007 = vmatprep.subr.mxu0 0.0
    %2008 = vmatpush1.msra.mxu0 0.0
    %2009 = vmatprep.subr.mxu0 0.0
    %2010 = vmatpush1.msra.mxu0 0.0
    %2011 = vmatprep.subr.mxu0 0.0
    %2012 = vmatpush1.msra.mxu0 0.0
    %2013 = vmatprep.subr.mxu0 0.0
    %2014 = vmatpush1.msra.mxu0 0.0
    %2015 = vmatprep.subr.mxu0 0.0
    %2016 = vmatpush1.msra.mxu0 0.0
    %2017 = vmatprep.subr.mxu0 0.0
    %2018 = vmatpush1.msra.mxu0 0.0
    %2019 = vmatprep.subr.mxu0 0.0
    %2020 = vmatpush1.msra.mxu0 0.0
    %2021 = vmatprep.subr.mxu0 0.0
    %2022 = vmatpush1.msra.mxu0 0.0
    %2023 = vmatprep.subr.mxu0 0.0
    %2024 = vmatpush1.msra.mxu0 0.0
    %2025 = vmatprep.subr.mxu0 0.0
    %2026 = vmatpush1.msra.mxu0 0.0
    %2027 = vmatprep.subr.mxu0 0.0
    %2028 = vmatpush1.msra.mxu0 0.0
    %2029 = vmatprep.subr.mxu0 0.0
    %2030 = vmatpush1.msra.mxu0 0.0
    %2031 = vmatprep.subr.mxu0 0.0
    %2032 = vmatpush1.msra.mxu0 0.0
    %2033 = vmatprep.subr.mxu0 0.0
    %2034 = vmatpush1.msra.mxu0 0.0
    %2035 = vmatprep.mubr.f32.mxu0 0.0
    %2036 = vmatmul.mubr.f32.gmra.mrb[0].mxu0 %v1826
    %v2037 = vpop.f32.mrb[0].mxu0
    %v2038 = vadd.f32 0.0, %v2037
    %v2039 = vpop.f32.mrb[0].mxu0
    %v2040 = vadd.f32 0.0, %v2039
    %2041 = vdwg.mxu0
    %v2042 = vadd.f32 %v1832, %v1967
    %v2043 = vadd.f32 %v1833, %v1969
    %v2044 = vadd.f32 %v1834, %v2038
    %v2045 = vadd.f32 %v1835, %v2040
    %v2046 = vxor.u32 %v2042, 2147483648
    %v2047 = vmul.f32 %v2046, 1.442695
    %v2048 = vpow.pop %v2047
    %v2049 = vadd.f32 %v2048, 1.0
    %v2050 = vrcp.pop %v2049
    %v2051 = vmul.f32 1.0, %v2050
    %v2052 = vxor.u32 %v2043, 2147483648
    %v2053 = vmul.f32 %v2052, 1.442695
    %v2054 = vpow.pop %v2053
    %v2055 = vadd.f32 %v2054, 1.0
    %v2056 = vrcp.pop %v2055
    %v2057 = vmul.f32 1.0, %v2056
    %v2058 = vtanh.pop %v2044
    %v2059 = vxor.u32 %v2045, 2147483648
    %v2060 = vmul.f32 %v2059, 1.442695
    %v2061 = vpow.pop %v2060
    %v2062 = vadd.f32 %v2061, 1.0
    %v2063 = vrcp.pop %v2062
    %v2064 = vmul.f32 1.0, %v2063
    %v2065 = vmul.f32 %v2057, %v1824
    %v2066 = vmul.f32 %v2051, %v2058
    %v2067 = vadd.f32 %v2065, %v2066
    %v2068 = vtanh.pop %v2067
    %v2069 = vmul.f32 %v2064, %v2068
    %s2070 = scalar_lea.vmem [#allocation2], 48
    %2071 = vst [vmem:[%s2070] sm:$0xff] %v2069
    %s2072 = smul.u32 7, 4
    %s2073 = smul.addr %s2072, 8
    %s2074 = scalar_lea.vmem [#allocation3], %s2073
    %v2075 = vld [vmem:[%s2074] sm:$0xff]
    %v2076 = vld [vmem:[%s2074 + $0x8] sm:$0xff]
    %v2077 = vld [vmem:[%s2074 + $0x10] sm:$0xff]
    %v2078 = vld [vmem:[%s2074 + $0x18] sm:$0xff]
    %v2079 = vld [vmem:[#allocation7] sm:$0xff]
    %v2080 = vld [vmem:[#allocation7 + $0x8] sm:$0xff]
    %v2081 = vld [vmem:[#allocation7 + $0x10] sm:$0xff]
    %v2082 = vld [vmem:[#allocation7 + $0x18] sm:$0xff]
    %v2083 = vld [vmem:[#allocation7 + $0x20] sm:$0xff]
    %v2084 = vld [vmem:[#allocation7 + $0x28] sm:$0xff]
    %v2085 = vld [vmem:[#allocation7 + $0x30] sm:$0xff]
    %v2086 = vld [vmem:[#allocation7 + $0x38] sm:$0xff]
    %v2087 = vld [vmem:[#allocation7 + $0x40] sm:$0xff]
    %v2088 = vld [vmem:[#allocation7 + $0x48] sm:$0xff]
    %v2089 = vld [vmem:[#allocation7 + $0x50] sm:$0xff]
    %v2090 = vld [vmem:[#allocation7 + $0x58] sm:$0xff]
    %v2091 = vld [vmem:[#allocation7 + $0x60] sm:$0xff]
    %v2092 = vld [vmem:[#allocation7 + $0x68] sm:$0xff]
    %v2093 = vld [vmem:[#allocation7 + $0x70] sm:$0xff]
    %v2094 = vld [vmem:[#allocation7 + $0x78] sm:$0xff]
    %v2095 = vld [vmem:[#allocation7 + $0x80] sm:$0xff]
    %v2096 = vld [vmem:[#allocation7 + $0x88] sm:$0xff]
    %v2097 = vld [vmem:[#allocation7 + $0x90] sm:$0xff]
    %v2098 = vld [vmem:[#allocation7 + $0x98] sm:$0xff]
    %v2099 = vld [vmem:[#allocation7 + $0xa0] sm:$0xff]
    %v2100 = vld [vmem:[#allocation7 + $0xa8] sm:$0xff]
    %v2101 = vld [vmem:[#allocation7 + $0xb0] sm:$0xff]
    %v2102 = vld [vmem:[#allocation7 + $0xb8] sm:$0xff]
    %v2103 = vld [vmem:[#allocation7 + $0xc0] sm:$0xff]
    %v2104 = vld [vmem:[#allocation7 + $0xc8] sm:$0xff]
    %v2105 = vld [vmem:[#allocation7 + $0xd0] sm:$0xff]
    %v2106 = vld [vmem:[#allocation7 + $0xd8] sm:$0xff]
    %v2107 = vld [vmem:[#allocation7 + $0xe0] sm:$0xff]
    %v2108 = vld [vmem:[#allocation7 + $0xe8] sm:$0xff]
    %v2109 = vld [vmem:[#allocation7 + $0xf0] sm:$0xff]
    %v2110 = vld [vmem:[#allocation7 + $0xf8] sm:$0xff]
    %v2111 = vld [vmem:[#allocation7 + $0x100] sm:$0xff]
    %v2112 = vld [vmem:[#allocation7 + $0x108] sm:$0xff]
    %v2113 = vld [vmem:[#allocation7 + $0x110] sm:$0xff]
    %v2114 = vld [vmem:[#allocation7 + $0x118] sm:$0xff]
    %v2115 = vld [vmem:[#allocation7 + $0x120] sm:$0xff]
    %v2116 = vld [vmem:[#allocation7 + $0x128] sm:$0xff]
    %v2117 = vld [vmem:[#allocation7 + $0x130] sm:$0xff]
    %v2118 = vld [vmem:[#allocation7 + $0x138] sm:$0xff]
    %v2119 = vld [vmem:[#allocation7 + $0x140] sm:$0xff]
    %v2120 = vld [vmem:[#allocation7 + $0x148] sm:$0xff]
    %v2121 = vld [vmem:[#allocation7 + $0x150] sm:$0xff]
    %v2122 = vld [vmem:[#allocation7 + $0x158] sm:$0xff]
    %v2123 = vld [vmem:[#allocation7 + $0x160] sm:$0xff]
    %v2124 = vld [vmem:[#allocation7 + $0x168] sm:$0xff]
    %v2125 = vld [vmem:[#allocation7 + $0x170] sm:$0xff]
    %v2126 = vld [vmem:[#allocation7 + $0x178] sm:$0xff]
    %v2127 = vld [vmem:[#allocation7 + $0x180] sm:$0xff]
    %v2128 = vld [vmem:[#allocation7 + $0x188] sm:$0xff]
    %v2129 = vld [vmem:[#allocation7 + $0x190] sm:$0xff]
    %v2130 = vld [vmem:[#allocation7 + $0x198] sm:$0xff]
    %v2131 = vld [vmem:[#allocation7 + $0x1a0] sm:$0xff]
    %v2132 = vld [vmem:[#allocation7 + $0x1a8] sm:$0xff]
    %v2133 = vld [vmem:[#allocation7 + $0x1b0] sm:$0xff]
    %v2134 = vld [vmem:[#allocation7 + $0x1b8] sm:$0xff]
    %v2135 = vld [vmem:[#allocation7 + $0x1c0] sm:$0xff]
    %v2136 = vld [vmem:[#allocation7 + $0x1c8] sm:$0xff]
    %v2137 = vld [vmem:[#allocation7 + $0x1d0] sm:$0xff]
    %v2138 = vld [vmem:[#allocation7 + $0x1d8] sm:$0xff]
    %v2139 = vld [vmem:[#allocation7 + $0x1e0] sm:$0xff]
    %v2140 = vld [vmem:[#allocation7 + $0x1e8] sm:$0xff]
    %v2141 = vld [vmem:[#allocation7 + $0x1f0] sm:$0xff]
    %v2142 = vld [vmem:[#allocation7 + $0x1f8] sm:$0xff]
    %2143 = vmatprep.subr.mxu0 %v2080
    %2144 = vmatpush1.msra.mxu0 %v2079
    %2145 = vmatprep.subr.mxu0 %v2084
    %2146 = vmatpush1.msra.mxu0 %v2083
    %2147 = vmatprep.subr.mxu0 %v2088
    %2148 = vmatpush1.msra.mxu0 %v2087
    %2149 = vmatprep.subr.mxu0 %v2092
    %2150 = vmatpush1.msra.mxu0 %v2091
    %2151 = vmatprep.subr.mxu0 %v2096
    %2152 = vmatpush1.msra.mxu0 %v2095
    %2153 = vmatprep.subr.mxu0 %v2100
    %2154 = vmatpush1.msra.mxu0 %v2099
    %2155 = vmatprep.subr.mxu0 %v2104
    %2156 = vmatpush1.msra.mxu0 %v2103
    %2157 = vmatprep.subr.mxu0 %v2108
    %2158 = vmatpush1.msra.mxu0 %v2107
    %2159 = vmatprep.subr.mxu0 %v2112
    %2160 = vmatpush1.msra.mxu0 %v2111
    %2161 = vmatprep.subr.mxu0 %v2116
    %2162 = vmatpush1.msra.mxu0 %v2115
    %2163 = vmatprep.subr.mxu0 %v2120
    %2164 = vmatpush1.msra.mxu0 %v2119
    %2165 = vmatprep.subr.mxu0 %v2124
    %2166 = vmatpush1.msra.mxu0 %v2123
    %2167 = vmatprep.subr.mxu0 %v2128
    %2168 = vmatpush1.msra.mxu0 %v2127
    %2169 = vmatprep.subr.mxu0 %v2132
    %2170 = vmatpush1.msra.mxu0 %v2131
    %2171 = vmatprep.subr.mxu0 %v2136
    %2172 = vmatpush1.msra.mxu0 %v2135
    %2173 = vmatprep.subr.mxu0 %v2140
    %2174 = vmatpush1.msra.mxu0 %v2139
    %2175 = vmatprep.subr.mxu0 0.0
    %2176 = vmatpush1.msra.mxu0 0.0
    %2177 = vmatprep.subr.mxu0 0.0
    %2178 = vmatpush1.msra.mxu0 0.0
    %2179 = vmatprep.subr.mxu0 0.0
    %2180 = vmatpush1.msra.mxu0 0.0
    %2181 = vmatprep.subr.mxu0 0.0
    %2182 = vmatpush1.msra.mxu0 0.0
    %2183 = vmatprep.subr.mxu0 0.0
    %2184 = vmatpush1.msra.mxu0 0.0
    %2185 = vmatprep.subr.mxu0 0.0
    %2186 = vmatpush1.msra.mxu0 0.0
    %2187 = vmatprep.subr.mxu0 0.0
    %2188 = vmatpush1.msra.mxu0 0.0
    %2189 = vmatprep.subr.mxu0 0.0
    %2190 = vmatpush1.msra.mxu0 0.0
    %2191 = vmatprep.subr.mxu0 0.0
    %2192 = vmatpush1.msra.mxu0 0.0
    %2193 = vmatprep.subr.mxu0 0.0
    %2194 = vmatpush1.msra.mxu0 0.0
    %2195 = vmatprep.subr.mxu0 0.0
    %2196 = vmatpush1.msra.mxu0 0.0
    %2197 = vmatprep.subr.mxu0 0.0
    %2198 = vmatpush1.msra.mxu0 0.0
    %2199 = vmatprep.subr.mxu0 0.0
    %2200 = vmatpush1.msra.mxu0 0.0
    %2201 = vmatprep.subr.mxu0 0.0
    %2202 = vmatpush1.msra.mxu0 0.0
    %2203 = vmatprep.subr.mxu0 0.0
    %2204 = vmatpush1.msra.mxu0 0.0
    %2205 = vmatprep.subr.mxu0 0.0
    %2206 = vmatpush1.msra.mxu0 0.0
    %2207 = vmatprep.mubr.f32.mxu0 0.0
    %2208 = vmatmul.mubr.f32.gmra.mrb[0].mxu0 %v2069
    %v2209 = vpop.f32.mrb[0].mxu0
    %v2210 = vadd.f32 0.0, %v2209
    %v2211 = vpop.f32.mrb[0].mxu0
    %v2212 = vadd.f32 0.0, %v2211
    %2213 = vdwg.mxu0
    %2214 = vmatprep.subr.mxu0 %v2082
    %2215 = vmatpush1.msra.mxu0 %v2081
    %2216 = vmatprep.subr.mxu0 %v2086
    %2217 = vmatpush1.msra.mxu0 %v2085
    %2218 = vmatprep.subr.mxu0 %v2090
    %2219 = vmatpush1.msra.mxu0 %v2089
    %2220 = vmatprep.subr.mxu0 %v2094
    %2221 = vmatpush1.msra.mxu0 %v2093
    %2222 = vmatprep.subr.mxu0 %v2098
    %2223 = vmatpush1.msra.mxu0 %v2097
    %2224 = vmatprep.subr.mxu0 %v2102
    %2225 = vmatpush1.msra.mxu0 %v2101
    %2226 = vmatprep.subr.mxu0 %v2106
    %2227 = vmatpush1.msra.mxu0 %v2105
    %2228 = vmatprep.subr.mxu0 %v2110
    %2229 = vmatpush1.msra.mxu0 %v2109
    %2230 = vmatprep.subr.mxu0 %v2114
    %2231 = vmatpush1.msra.mxu0 %v2113
    %2232 = vmatprep.subr.mxu0 %v2118
    %2233 = vmatpush1.msra.mxu0 %v2117
    %2234 = vmatprep.subr.mxu0 %v2122
    %2235 = vmatpush1.msra.mxu0 %v2121
    %2236 = vmatprep.subr.mxu0 %v2126
    %2237 = vmatpush1.msra.mxu0 %v2125
    %2238 = vmatprep.subr.mxu0 %v2130
    %2239 = vmatpush1.msra.mxu0 %v2129
    %2240 = vmatprep.subr.mxu0 %v2134
    %2241 = vmatpush1.msra.mxu0 %v2133
    %2242 = vmatprep.subr.mxu0 %v2138
    %2243 = vmatpush1.msra.mxu0 %v2137
    %2244 = vmatprep.subr.mxu0 %v2142
    %2245 = vmatpush1.msra.mxu0 %v2141
    %2246 = vmatprep.subr.mxu0 0.0
    %2247 = vmatpush1.msra.mxu0 0.0
    %2248 = vmatprep.subr.mxu0 0.0
    %2249 = vmatpush1.msra.mxu0 0.0
    %2250 = vmatprep.subr.mxu0 0.0
    %2251 = vmatpush1.msra.mxu0 0.0
    %2252 = vmatprep.subr.mxu0 0.0
    %2253 = vmatpush1.msra.mxu0 0.0
    %2254 = vmatprep.subr.mxu0 0.0
    %2255 = vmatpush1.msra.mxu0 0.0
    %2256 = vmatprep.subr.mxu0 0.0
    %2257 = vmatpush1.msra.mxu0 0.0
    %2258 = vmatprep.subr.mxu0 0.0
    %2259 = vmatpush1.msra.mxu0 0.0
    %2260 = vmatprep.subr.mxu0 0.0
    %2261 = vmatpush1.msra.mxu0 0.0
    %2262 = vmatprep.subr.mxu0 0.0
    %2263 = vmatpush1.msra.mxu0 0.0
    %2264 = vmatprep.subr.mxu0 0.0
    %2265 = vmatpush1.msra.mxu0 0.0
    %2266 = vmatprep.subr.mxu0 0.0
    %2267 = vmatpush1.msra.mxu0 0.0
    %2268 = vmatprep.subr.mxu0 0.0
    %2269 = vmatpush1.msra.mxu0 0.0
    %2270 = vmatprep.subr.mxu0 0.0
    %2271 = vmatpush1.msra.mxu0 0.0
    %2272 = vmatprep.subr.mxu0 0.0
    %2273 = vmatpush1.msra.mxu0 0.0
    %2274 = vmatprep.subr.mxu0 0.0
    %2275 = vmatpush1.msra.mxu0 0.0
    %2276 = vmatprep.subr.mxu0 0.0
    %2277 = vmatpush1.msra.mxu0 0.0
    %2278 = vmatprep.mubr.f32.mxu0 0.0
    %2279 = vmatmul.mubr.f32.gmra.mrb[0].mxu0 %v2069
    %v2280 = vpop.f32.mrb[0].mxu0
    %v2281 = vadd.f32 0.0, %v2280
    %v2282 = vpop.f32.mrb[0].mxu0
    %v2283 = vadd.f32 0.0, %v2282
    %2284 = vdwg.mxu0
    %v2285 = vadd.f32 %v2075, %v2210
    %v2286 = vadd.f32 %v2076, %v2212
    %v2287 = vadd.f32 %v2077, %v2281
    %v2288 = vadd.f32 %v2078, %v2283
    %v2289 = vxor.u32 %v2285, 2147483648
    %v2290 = vmul.f32 %v2289, 1.442695
    %v2291 = vpow.pop %v2290
    %v2292 = vadd.f32 %v2291, 1.0
    %v2293 = vrcp.pop %v2292
    %v2294 = vmul.f32 1.0, %v2293
    %v2295 = vxor.u32 %v2286, 2147483648
    %v2296 = vmul.f32 %v2295, 1.442695
    %v2297 = vpow.pop %v2296
    %v2298 = vadd.f32 %v2297, 1.0
    %v2299 = vrcp.pop %v2298
    %v2300 = vmul.f32 1.0, %v2299
    %v2301 = vtanh.pop %v2287
    %v2302 = vxor.u32 %v2288, 2147483648
    %v2303 = vmul.f32 %v2302, 1.442695
    %v2304 = vpow.pop %v2303
    %v2305 = vadd.f32 %v2304, 1.0
    %v2306 = vrcp.pop %v2305
    %v2307 = vmul.f32 1.0, %v2306
    %v2308 = vmul.f32 %v2300, %v2067
    %v2309 = vmul.f32 %v2294, %v2301
    %v2310 = vadd.f32 %v2308, %v2309
    %v2311 = vtanh.pop %v2310
    %v2312 = vmul.f32 %v2307, %v2311
    %s2313 = scalar_lea.vmem [#allocation2], 56
    %2314 = vst [vmem:[%s2313] sm:$0xff] %v2312
    %s2315 = scalar_lea.vmem %s4, 4
    %v2316 = vld [vmem:[%s2315] sm:$0xf]
    %v2317 = vld [vmem:[#allocation2] sm:$0xff]
    %v2318 = vld [vmem:[#allocation2 + $0x8] sm:$0xff]
    %v2319 = vld [vmem:[#allocation2 + $0x10] sm:$0xff]
    %v2320 = vld [vmem:[#allocation2 + $0x18] sm:$0xff]
    %v2321 = vld [vmem:[#allocation2 + $0x20] sm:$0xff]
    %v2322 = vld [vmem:[#allocation2 + $0x28] sm:$0xff]
    %v2323 = vld [vmem:[#allocation2 + $0x30] sm:$0xff]
    %v2324 = vld [vmem:[#allocation2 + $0x38] sm:$0xff]
    %v2325 = vld [vmem:[#allocation4] sm:$0xff]
    %v2326 = vld [vmem:[#allocation4 + $0x8] sm:$0xff]
    %v2327 = vld [vmem:[#allocation4 + $0x10] sm:$0xff]
    %v2328 = vld [vmem:[#allocation4 + $0x18] sm:$0xff]
    %v2329 = vld [vmem:[#allocation4 + $0x20] sm:$0xff]
    %v2330 = vld [vmem:[#allocation4 + $0x28] sm:$0xff]
    %v2331 = vld [vmem:[#allocation4 + $0x30] sm:$0xff]
    %v2332 = vld [vmem:[#allocation4 + $0x38] sm:$0xff]
    %v2333 = vld [vmem:[#allocation4 + $0x40] sm:$0xff]
    %v2334 = vld [vmem:[#allocation4 + $0x48] sm:$0xff]
    %v2335 = vld [vmem:[#allocation4 + $0x50] sm:$0xff]
    %v2336 = vld [vmem:[#allocation4 + $0x58] sm:$0xff]
    %v2337 = vld [vmem:[#allocation4 + $0x60] sm:$0xff]
    %v2338 = vld [vmem:[#allocation4 + $0x68] sm:$0xff]
    %v2339 = vld [vmem:[#allocation4 + $0x70] sm:$0xff]
    %v2340 = vld [vmem:[#allocation4 + $0x78] sm:$0xff]
    %v2341 = vld [vmem:[#allocation4 + $0x80] sm:$0xff]
    %v2342 = vld [vmem:[#allocation4 + $0x88] sm:$0xff]
    %v2343 = vld [vmem:[#allocation4 + $0x90] sm:$0xff]
    %v2344 = vld [vmem:[#allocation4 + $0x98] sm:$0xff]
    %v2345 = vld [vmem:[#allocation4 + $0xa0] sm:$0xff]
    %v2346 = vld [vmem:[#allocation4 + $0xa8] sm:$0xff]
    %v2347 = vld [vmem:[#allocation4 + $0xb0] sm:$0xff]
    %v2348 = vld [vmem:[#allocation4 + $0xb8] sm:$0xff]
    %v2349 = vld [vmem:[#allocation4 + $0xc0] sm:$0xff]
    %v2350 = vld [vmem:[#allocation4 + $0xc8] sm:$0xff]
    %v2351 = vld [vmem:[#allocation4 + $0xd0] sm:$0xff]
    %v2352 = vld [vmem:[#allocation4 + $0xd8] sm:$0xff]
    %v2353 = vld [vmem:[#allocation4 + $0xe0] sm:$0xff]
    %v2354 = vld [vmem:[#allocation4 + $0xe8] sm:$0xff]
    %v2355 = vld [vmem:[#allocation4 + $0xf0] sm:$0xff]
    %v2356 = vld [vmem:[#allocation4 + $0xf8] sm:$0xff]
    %v2357 = vld [vmem:[#allocation4 + $0x100] sm:$0xff]
    %v2358 = vld [vmem:[#allocation4 + $0x108] sm:$0xff]
    %v2359 = vld [vmem:[#allocation4 + $0x110] sm:$0xff]
    %v2360 = vld [vmem:[#allocation4 + $0x118] sm:$0xff]
    %v2361 = vld [vmem:[#allocation4 + $0x120] sm:$0xff]
    %v2362 = vld [vmem:[#allocation4 + $0x128] sm:$0xff]
    %v2363 = vld [vmem:[#allocation4 + $0x130] sm:$0xff]
    %v2364 = vld [vmem:[#allocation4 + $0x138] sm:$0xff]
    %v2365 = vld [vmem:[#allocation4 + $0x140] sm:$0xff]
    %v2366 = vld [vmem:[#allocation4 + $0x148] sm:$0xff]
    %v2367 = vld [vmem:[#allocation4 + $0x150] sm:$0xff]
    %v2368 = vld [vmem:[#allocation4 + $0x158] sm:$0xff]
    %v2369 = vld [vmem:[#allocation4 + $0x160] sm:$0xff]
    %v2370 = vld [vmem:[#allocation4 + $0x168] sm:$0xff]
    %v2371 = vld [vmem:[#allocation4 + $0x170] sm:$0xff]
    %v2372 = vld [vmem:[#allocation4 + $0x178] sm:$0xff]
    %v2373 = vld [vmem:[#allocation4 + $0x180] sm:$0xff]
    %v2374 = vld [vmem:[#allocation4 + $0x188] sm:$0xff]
    %v2375 = vld [vmem:[#allocation4 + $0x190] sm:$0xff]
    %v2376 = vld [vmem:[#allocation4 + $0x198] sm:$0xff]
    %v2377 = vld [vmem:[#allocation4 + $0x1a0] sm:$0xff]
    %v2378 = vld [vmem:[#allocation4 + $0x1a8] sm:$0xff]
    %v2379 = vld [vmem:[#allocation4 + $0x1b0] sm:$0xff]
    %v2380 = vld [vmem:[#allocation4 + $0x1b8] sm:$0xff]
    %v2381 = vld [vmem:[#allocation4 + $0x1c0] sm:$0xff]
    %v2382 = vld [vmem:[#allocation4 + $0x1c8] sm:$0xff]
    %v2383 = vld [vmem:[#allocation4 + $0x1d0] sm:$0xff]
    %v2384 = vld [vmem:[#allocation4 + $0x1d8] sm:$0xff]
    %v2385 = vld [vmem:[#allocation4 + $0x1e0] sm:$0xff]
    %v2386 = vld [vmem:[#allocation4 + $0x1e8] sm:$0xff]
    %v2387 = vld [vmem:[#allocation4 + $0x1f0] sm:$0xff]
    %v2388 = vld [vmem:[#allocation4 + $0x1f8] sm:$0xff]
    %v2390 = vlaneseq
    %v2391 = vshrl.u32 %v2390, 7
    %v2392 = vsub.s32 0, %v2391
    %v2393 = vrot.slane %v2316, %v2392
    %v2394 = vlaneseq
    %v2395 = vshrl.u32 %v2394, 7
    %v2396 = vsub.s32 1, %v2395
    %v2397 = vrot.slane %v2316, %v2396
    %v2398 = vlaneseq
    %v2399 = vshrl.u32 %v2398, 7
    %v2400 = vsub.s32 2, %v2399
    %v2401 = vrot.slane %v2316, %v2400
    %v2402 = vlaneseq
    %v2403 = vshrl.u32 %v2402, 7
    %v2404 = vsub.s32 3, %v2403
    %v2405 = vrot.slane %v2316, %v2404
    %2410 = vmatprep.subr.mxu0 %v2326
    %2411 = vmatpush1.msra.mxu0 %v2325
    %2412 = vmatprep.subr.mxu0 %v2330
    %2413 = vmatpush1.msra.mxu0 %v2329
    %2414 = vmatprep.subr.mxu0 %v2334
    %2415 = vmatpush1.msra.mxu0 %v2333
    %2416 = vmatprep.subr.mxu0 %v2338
    %2417 = vmatpush1.msra.mxu0 %v2337
    %2418 = vmatprep.subr.mxu0 %v2342
    %2419 = vmatpush1.msra.mxu0 %v2341
    %2420 = vmatprep.subr.mxu0 %v2346
    %2421 = vmatpush1.msra.mxu0 %v2345
    %2422 = vmatprep.subr.mxu0 %v2350
    %2423 = vmatpush1.msra.mxu0 %v2349
    %2424 = vmatprep.subr.mxu0 %v2354
    %2425 = vmatpush1.msra.mxu0 %v2353
    %2426 = vmatprep.subr.mxu0 %v2358
    %2427 = vmatpush1.msra.mxu0 %v2357
    %2428 = vmatprep.subr.mxu0 %v2362
    %2429 = vmatpush1.msra.mxu0 %v2361
    %2430 = vmatprep.subr.mxu0 %v2366
    %2431 = vmatpush1.msra.mxu0 %v2365
    %2432 = vmatprep.subr.mxu0 %v2370
    %2433 = vmatpush1.msra.mxu0 %v2369
    %2434 = vmatprep.subr.mxu0 %v2374
    %2435 = vmatpush1.msra.mxu0 %v2373
    %2436 = vmatprep.subr.mxu0 %v2378
    %2437 = vmatpush1.msra.mxu0 %v2377
    %2438 = vmatprep.subr.mxu0 %v2382
    %2439 = vmatpush1.msra.mxu0 %v2381
    %2440 = vmatprep.subr.mxu0 %v2386
    %2441 = vmatpush1.msra.mxu0 %v2385
    %2442 = vmatprep.subr.mxu0 0.0
    %2443 = vmatpush1.msra.mxu0 0.0
    %2444 = vmatprep.subr.mxu0 0.0
    %2445 = vmatpush1.msra.mxu0 0.0
    %2446 = vmatprep.subr.mxu0 0.0
    %2447 = vmatpush1.msra.mxu0 0.0
    %2448 = vmatprep.subr.mxu0 0.0
    %2449 = vmatpush1.msra.mxu0 0.0
    %2450 = vmatprep.subr.mxu0 0.0
    %2451 = vmatpush1.msra.mxu0 0.0
    %2452 = vmatprep.subr.mxu0 0.0
    %2453 = vmatpush1.msra.mxu0 0.0
    %2454 = vmatprep.subr.mxu0 0.0
    %2455 = vmatpush1.msra.mxu0 0.0
    %2456 = vmatprep.subr.mxu0 0.0
    %2457 = vmatpush1.msra.mxu0 0.0
    %2458 = vmatprep.subr.mxu0 0.0
    %2459 = vmatpush1.msra.mxu0 0.0
    %2460 = vmatprep.subr.mxu0 0.0
    %2461 = vmatpush1.msra.mxu0 0.0
    %2462 = vmatprep.subr.mxu0 0.0
    %2463 = vmatpush1.msra.mxu0 0.0
    %2464 = vmatprep.subr.mxu0 0.0
    %2465 = vmatpush1.msra.mxu0 0.0
    %2466 = vmatprep.subr.mxu0 0.0
    %2467 = vmatpush1.msra.mxu0 0.0
    %2468 = vmatprep.subr.mxu0 0.0
    %2469 = vmatpush1.msra.mxu0 0.0
    %2470 = vmatprep.subr.mxu0 0.0
    %2471 = vmatpush1.msra.mxu0 0.0
    %2472 = vmatprep.subr.mxu0 0.0
    %2473 = vmatpush1.msra.mxu0 0.0
    %2474 = vmatprep.mubr.f32.mxu0 0.0
    %2475 = vmatmul.mubr.f32.gmra.mrb[0].mxu0 %v2317
    %v2476 = vpop.f32.mrb[0].mxu0
    %v2477 = vadd.f32 %v2393, %v2476
    %v2478 = vpop.f32.mrb[0].mxu0
    %v2479 = vadd.f32 %v2397, %v2478
    %2480 = vmatprep.mubr.f32.mxu0 0.0
    %2481 = vmatmul.mubr.f32.gmra.mrb[0].mxu0 %v2318
    %v2482 = vpop.f32.mrb[0].mxu0
    %v2483 = vadd.f32 %v2393, %v2482
    %v2484 = vpop.f32.mrb[0].mxu0
    %v2485 = vadd.f32 %v2397, %v2484
    %2486 = vmatprep.mubr.f32.mxu0 0.0
    %2487 = vmatmul.mubr.f32.gmra.mrb[0].mxu0 %v2319
    %v2488 = vpop.f32.mrb[0].mxu0
    %v2489 = vadd.f32 %v2393, %v2488
    %v2490 = vpop.f32.mrb[0].mxu0
    %v2491 = vadd.f32 %v2397, %v2490
    %2492 = vmatprep.mubr.f32.mxu0 0.0
    %2493 = vmatmul.mubr.f32.gmra.mrb[0].mxu0 %v2320
    %v2494 = vpop.f32.mrb[0].mxu0
    %v2495 = vadd.f32 %v2393, %v2494
    %v2496 = vpop.f32.mrb[0].mxu0
    %v2497 = vadd.f32 %v2397, %v2496
    %2498 = vmatprep.mubr.f32.mxu0 0.0
    %2499 = vmatmul.mubr.f32.gmra.mrb[0].mxu0 %v2321
    %v2500 = vpop.f32.mrb[0].mxu0
    %v2501 = vadd.f32 %v2393, %v2500
    %v2502 = vpop.f32.mrb[0].mxu0
    %v2503 = vadd.f32 %v2397, %v2502
    %2504 = vmatprep.mubr.f32.mxu0 0.0
    %2505 = vmatmul.mubr.f32.gmra.mrb[0].mxu0 %v2322
    %v2506 = vpop.f32.mrb[0].mxu0
    %v2507 = vadd.f32 %v2393, %v2506
    %v2508 = vpop.f32.mrb[0].mxu0
    %v2509 = vadd.f32 %v2397, %v2508
    %2510 = vmatprep.mubr.f32.mxu0 0.0
    %2511 = vmatmul.mubr.f32.gmra.mrb[0].mxu0 %v2323
    %v2512 = vpop.f32.mrb[0].mxu0
    %v2513 = vadd.f32 %v2393, %v2512
    %v2514 = vpop.f32.mrb[0].mxu0
    %v2515 = vadd.f32 %v2397, %v2514
    %2516 = vmatprep.mubr.f32.mxu0 0.0
    %2517 = vmatmul.mubr.f32.gmra.mrb[0].mxu0 %v2324
    %v2518 = vpop.f32.mrb[0].mxu0
    %v2519 = vadd.f32 %v2393, %v2518
    %v2520 = vpop.f32.mrb[0].mxu0
    %v2521 = vadd.f32 %v2397, %v2520
    %2522 = vdwg.mxu0
    %2523 = vmatprep.subr.mxu0 %v2328
    %2524 = vmatpush1.msra.mxu0 %v2327
    %2525 = vmatprep.subr.mxu0 %v2332
    %2526 = vmatpush1.msra.mxu0 %v2331
    %2527 = vmatprep.subr.mxu0 %v2336
    %2528 = vmatpush1.msra.mxu0 %v2335
    %2529 = vmatprep.subr.mxu0 %v2340
    %2530 = vmatpush1.msra.mxu0 %v2339
    %2531 = vmatprep.subr.mxu0 %v2344
    %2532 = vmatpush1.msra.mxu0 %v2343
    %2533 = vmatprep.subr.mxu0 %v2348
    %2534 = vmatpush1.msra.mxu0 %v2347
    %2535 = vmatprep.subr.mxu0 %v2352
    %2536 = vmatpush1.msra.mxu0 %v2351
    %2537 = vmatprep.subr.mxu0 %v2356
    %2538 = vmatpush1.msra.mxu0 %v2355
    %2539 = vmatprep.subr.mxu0 %v2360
    %2540 = vmatpush1.msra.mxu0 %v2359
    %2541 = vmatprep.subr.mxu0 %v2364
    %2542 = vmatpush1.msra.mxu0 %v2363
    %2543 = vmatprep.subr.mxu0 %v2368
    %2544 = vmatpush1.msra.mxu0 %v2367
    %2545 = vmatprep.subr.mxu0 %v2372
    %2546 = vmatpush1.msra.mxu0 %v2371
    %2547 = vmatprep.subr.mxu0 %v2376
    %2548 = vmatpush1.msra.mxu0 %v2375
    %2549 = vmatprep.subr.mxu0 %v2380
    %2550 = vmatpush1.msra.mxu0 %v2379
    %2551 = vmatprep.subr.mxu0 %v2384
    %2552 = vmatpush1.msra.mxu0 %v2383
    %2553 = vmatprep.subr.mxu0 %v2388
    %2554 = vmatpush1.msra.mxu0 %v2387
    %2555 = vmatprep.subr.mxu0 0.0
    %2556 = vmatpush1.msra.mxu0 0.0
    %2557 = vmatprep.subr.mxu0 0.0
    %2558 = vmatpush1.msra.mxu0 0.0
    %2559 = vmatprep.subr.mxu0 0.0
    %2560 = vmatpush1.msra.mxu0 0.0
    %2561 = vmatprep.subr.mxu0 0.0
    %2562 = vmatpush1.msra.mxu0 0.0
    %2563 = vmatprep.subr.mxu0 0.0
    %2564 = vmatpush1.msra.mxu0 0.0
    %2565 = vmatprep.subr.mxu0 0.0
    %2566 = vmatpush1.msra.mxu0 0.0
    %2567 = vmatprep.subr.mxu0 0.0
    %2568 = vmatpush1.msra.mxu0 0.0
    %2569 = vmatprep.subr.mxu0 0.0
    %2570 = vmatpush1.msra.mxu0 0.0
    %2571 = vmatprep.subr.mxu0 0.0
    %2572 = vmatpush1.msra.mxu0 0.0
    %2573 = vmatprep.subr.mxu0 0.0
    %2574 = vmatpush1.msra.mxu0 0.0
    %2575 = vmatprep.subr.mxu0 0.0
    %2576 = vmatpush1.msra.mxu0 0.0
    %2577 = vmatprep.subr.mxu0 0.0
    %2578 = vmatpush1.msra.mxu0 0.0
    %2579 = vmatprep.subr.mxu0 0.0
    %2580 = vmatpush1.msra.mxu0 0.0
    %2581 = vmatprep.subr.mxu0 0.0
    %2582 = vmatpush1.msra.mxu0 0.0
    %2583 = vmatprep.subr.mxu0 0.0
    %2584 = vmatpush1.msra.mxu0 0.0
    %2585 = vmatprep.subr.mxu0 0.0
    %2586 = vmatpush1.msra.mxu0 0.0
    %2587 = vmatprep.mubr.f32.mxu0 0.0
    %2588 = vmatmul.mubr.f32.gmra.mrb[0].mxu0 %v2317
    %v2589 = vpop.f32.mrb[0].mxu0
    %v2590 = vadd.f32 %v2401, %v2589
    %v2591 = vpop.f32.mrb[0].mxu0
    %v2592 = vadd.f32 %v2405, %v2591
    %2593 = vmatprep.mubr.f32.mxu0 0.0
    %2594 = vmatmul.mubr.f32.gmra.mrb[0].mxu0 %v2318
    %v2595 = vpop.f32.mrb[0].mxu0
    %v2596 = vadd.f32 %v2401, %v2595
    %v2597 = vpop.f32.mrb[0].mxu0
    %v2598 = vadd.f32 %v2405, %v2597
    %2599 = vmatprep.mubr.f32.mxu0 0.0
    %2600 = vmatmul.mubr.f32.gmra.mrb[0].mxu0 %v2319
    %v2601 = vpop.f32.mrb[0].mxu0
    %v2602 = vadd.f32 %v2401, %v2601
    %v2603 = vpop.f32.mrb[0].mxu0
    %v2604 = vadd.f32 %v2405, %v2603
    %2605 = vmatprep.mubr.f32.mxu0 0.0
    %2606 = vmatmul.mubr.f32.gmra.mrb[0].mxu0 %v2320
    %v2607 = vpop.f32.mrb[0].mxu0
    %v2608 = vadd.f32 %v2401, %v2607
    %v2609 = vpop.f32.mrb[0].mxu0
    %v2610 = vadd.f32 %v2405, %v2609
    %2611 = vmatprep.mubr.f32.mxu0 0.0
    %2612 = vmatmul.mubr.f32.gmra.mrb[0].mxu0 %v2321
    %v2613 = vpop.f32.mrb[0].mxu0
    %v2614 = vadd.f32 %v2401, %v2613
    %v2615 = vpop.f32.mrb[0].mxu0
    %v2616 = vadd.f32 %v2405, %v2615
    %2617 = vmatprep.mubr.f32.mxu0 0.0
    %2618 = vmatmul.mubr.f32.gmra.mrb[0].mxu0 %v2322
    %v2619 = vpop.f32.mrb[0].mxu0
    %v2620 = vadd.f32 %v2401, %v2619
    %v2621 = vpop.f32.mrb[0].mxu0
    %v2622 = vadd.f32 %v2405, %v2621
    %2623 = vmatprep.mubr.f32.mxu0 0.0
    %2624 = vmatmul.mubr.f32.gmra.mrb[0].mxu0 %v2323
    %v2625 = vpop.f32.mrb[0].mxu0
    %v2626 = vadd.f32 %v2401, %v2625
    %v2627 = vpop.f32.mrb[0].mxu0
    %v2628 = vadd.f32 %v2405, %v2627
    %2629 = vmatprep.mubr.f32.mxu0 0.0
    %2630 = vmatmul.mubr.f32.gmra.mrb[0].mxu0 %v2324
    %v2631 = vpop.f32.mrb[0].mxu0
    %v2632 = vadd.f32 %v2401, %v2631
    %v2633 = vpop.f32.mrb[0].mxu0
    %v2634 = vadd.f32 %v2405, %v2633
    %2635 = vdwg.mxu0
    %2636 = vst [vmem:[#allocation3] sm:$0xff] %v2477
    %2637 = vst [vmem:[#allocation3 + $0x8] sm:$0xff] %v2479
    %2638 = vst [vmem:[#allocation3 + $0x10] sm:$0xff] %v2590
    %2639 = vst [vmem:[#allocation3 + $0x18] sm:$0xff] %v2592
    %2640 = vst [vmem:[#allocation3 + $0x20] sm:$0xff] %v2483
    %2641 = vst [vmem:[#allocation3 + $0x28] sm:$0xff] %v2485
    %2642 = vst [vmem:[#allocation3 + $0x30] sm:$0xff] %v2596
    %2643 = vst [vmem:[#allocation3 + $0x38] sm:$0xff] %v2598
    %2644 = vst [vmem:[#allocation3 + $0x40] sm:$0xff] %v2489
    %2645 = vst [vmem:[#allocation3 + $0x48] sm:$0xff] %v2491
    %2646 = vst [vmem:[#allocation3 + $0x50] sm:$0xff] %v2602
    %2647 = vst [vmem:[#allocation3 + $0x58] sm:$0xff] %v2604
    %2648 = vst [vmem:[#allocation3 + $0x60] sm:$0xff] %v2495
    %2649 = vst [vmem:[#allocation3 + $0x68] sm:$0xff] %v2497
    %2650 = vst [vmem:[#allocation3 + $0x70] sm:$0xff] %v2608
    %2651 = vst [vmem:[#allocation3 + $0x78] sm:$0xff] %v2610
    %2652 = vst [vmem:[#allocation3 + $0x80] sm:$0xff] %v2501
    %2653 = vst [vmem:[#allocation3 + $0x88] sm:$0xff] %v2503
    %2654 = vst [vmem:[#allocation3 + $0x90] sm:$0xff] %v2614
    %2655 = vst [vmem:[#allocation3 + $0x98] sm:$0xff] %v2616
    %2656 = vst [vmem:[#allocation3 + $0xa0] sm:$0xff] %v2507
    %2657 = vst [vmem:[#allocation3 + $0xa8] sm:$0xff] %v2509
    %2658 = vst [vmem:[#allocation3 + $0xb0] sm:$0xff] %v2620
    %2659 = vst [vmem:[#allocation3 + $0xb8] sm:$0xff] %v2622
    %2660 = vst [vmem:[#allocation3 + $0xc0] sm:$0xff] %v2513
    %2661 = vst [vmem:[#allocation3 + $0xc8] sm:$0xff] %v2515
    %2662 = vst [vmem:[#allocation3 + $0xd0] sm:$0xff] %v2626
    %2663 = vst [vmem:[#allocation3 + $0xd8] sm:$0xff] %v2628
    %2664 = vst [vmem:[#allocation3 + $0xe0] sm:$0xff] %v2519
    %2665 = vst [vmem:[#allocation3 + $0xe8] sm:$0xff] %v2521
    %2666 = vst [vmem:[#allocation3 + $0xf0] sm:$0xff] %v2632
    %2667 = vst [vmem:[#allocation3 + $0xf8] sm:$0xff] %v2634
    %v2668 = vld [vmem:[%s374] sm:$0xff]
    %v2669 = vld [vmem:[%s374 + $0x8] sm:$0xff]
    %v2670 = vld [vmem:[%s374 + $0x10] sm:$0xff]
    %v2671 = vld [vmem:[%s374 + $0x18] sm:$0xff]
    %s2672 = scalar_lea.vmem [#allocation7], 512
    %v2673 = vld [vmem:[%s2672] sm:$0xff]
    %v2674 = vld [vmem:[%s2672 + $0x8] sm:$0xff]
    %v2675 = vld [vmem:[%s2672 + $0x10] sm:$0xff]
    %v2676 = vld [vmem:[%s2672 + $0x18] sm:$0xff]
    %v2677 = vld [vmem:[%s2672 + $0x20] sm:$0xff]
    %v2678 = vld [vmem:[%s2672 + $0x28] sm:$0xff]
    %v2679 = vld [vmem:[%s2672 + $0x30] sm:$0xff]
    %v2680 = vld [vmem:[%s2672 + $0x38] sm:$0xff]
    %v2681 = vld [vmem:[%s2672 + $0x40] sm:$0xff]
    %v2682 = vld [vmem:[%s2672 + $0x48] sm:$0xff]
    %v2683 = vld [vmem:[%s2672 + $0x50] sm:$0xff]
    %v2684 = vld [vmem:[%s2672 + $0x58] sm:$0xff]
    %v2685 = vld [vmem:[%s2672 + $0x60] sm:$0xff]
    %v2686 = vld [vmem:[%s2672 + $0x68] sm:$0xff]
    %v2687 = vld [vmem:[%s2672 + $0x70] sm:$0xff]
    %v2688 = vld [vmem:[%s2672 + $0x78] sm:$0xff]
    %v2689 = vld [vmem:[%s2672 + $0x80] sm:$0xff]
    %v2690 = vld [vmem:[%s2672 + $0x88] sm:$0xff]
    %v2691 = vld [vmem:[%s2672 + $0x90] sm:$0xff]
    %v2692 = vld [vmem:[%s2672 + $0x98] sm:$0xff]
    %v2693 = vld [vmem:[%s2672 + $0xa0] sm:$0xff]
    %v2694 = vld [vmem:[%s2672 + $0xa8] sm:$0xff]
    %v2695 = vld [vmem:[%s2672 + $0xb0] sm:$0xff]
    %v2696 = vld [vmem:[%s2672 + $0xb8] sm:$0xff]
    %v2697 = vld [vmem:[%s2672 + $0xc0] sm:$0xff]
    %v2698 = vld [vmem:[%s2672 + $0xc8] sm:$0xff]
    %v2699 = vld [vmem:[%s2672 + $0xd0] sm:$0xff]
    %v2700 = vld [vmem:[%s2672 + $0xd8] sm:$0xff]
    %v2701 = vld [vmem:[%s2672 + $0xe0] sm:$0xff]
    %v2702 = vld [vmem:[%s2672 + $0xe8] sm:$0xff]
    %v2703 = vld [vmem:[%s2672 + $0xf0] sm:$0xff]
    %v2704 = vld [vmem:[%s2672 + $0xf8] sm:$0xff]
    %v2705 = vld [vmem:[%s2672 + $0x100] sm:$0xff]
    %v2706 = vld [vmem:[%s2672 + $0x108] sm:$0xff]
    %v2707 = vld [vmem:[%s2672 + $0x110] sm:$0xff]
    %v2708 = vld [vmem:[%s2672 + $0x118] sm:$0xff]
    %v2709 = vld [vmem:[%s2672 + $0x120] sm:$0xff]
    %v2710 = vld [vmem:[%s2672 + $0x128] sm:$0xff]
    %v2711 = vld [vmem:[%s2672 + $0x130] sm:$0xff]
    %v2712 = vld [vmem:[%s2672 + $0x138] sm:$0xff]
    %v2713 = vld [vmem:[%s2672 + $0x140] sm:$0xff]
    %v2714 = vld [vmem:[%s2672 + $0x148] sm:$0xff]
    %v2715 = vld [vmem:[%s2672 + $0x150] sm:$0xff]
    %v2716 = vld [vmem:[%s2672 + $0x158] sm:$0xff]
    %v2717 = vld [vmem:[%s2672 + $0x160] sm:$0xff]
    %v2718 = vld [vmem:[%s2672 + $0x168] sm:$0xff]
    %v2719 = vld [vmem:[%s2672 + $0x170] sm:$0xff]
    %v2720 = vld [vmem:[%s2672 + $0x178] sm:$0xff]
    %v2721 = vld [vmem:[%s2672 + $0x180] sm:$0xff]
    %v2722 = vld [vmem:[%s2672 + $0x188] sm:$0xff]
    %v2723 = vld [vmem:[%s2672 + $0x190] sm:$0xff]
    %v2724 = vld [vmem:[%s2672 + $0x198] sm:$0xff]
    %v2725 = vld [vmem:[%s2672 + $0x1a0] sm:$0xff]
    %v2726 = vld [vmem:[%s2672 + $0x1a8] sm:$0xff]
    %v2727 = vld [vmem:[%s2672 + $0x1b0] sm:$0xff]
    %v2728 = vld [vmem:[%s2672 + $0x1b8] sm:$0xff]
    %v2729 = vld [vmem:[%s2672 + $0x1c0] sm:$0xff]
    %v2730 = vld [vmem:[%s2672 + $0x1c8] sm:$0xff]
    %v2731 = vld [vmem:[%s2672 + $0x1d0] sm:$0xff]
    %v2732 = vld [vmem:[%s2672 + $0x1d8] sm:$0xff]
    %v2733 = vld [vmem:[%s2672 + $0x1e0] sm:$0xff]
    %v2734 = vld [vmem:[%s2672 + $0x1e8] sm:$0xff]
    %v2735 = vld [vmem:[%s2672 + $0x1f0] sm:$0xff]
    %v2736 = vld [vmem:[%s2672 + $0x1f8] sm:$0xff]
    %2737 = vmatprep.subr.mxu0 %v2674
    %2738 = vmatpush1.msra.mxu0 %v2673
    %2739 = vmatprep.subr.mxu0 %v2678
    %2740 = vmatpush1.msra.mxu0 %v2677
    %2741 = vmatprep.subr.mxu0 %v2682
    %2742 = vmatpush1.msra.mxu0 %v2681
    %2743 = vmatprep.subr.mxu0 %v2686
    %2744 = vmatpush1.msra.mxu0 %v2685
    %2745 = vmatprep.subr.mxu0 %v2690
    %2746 = vmatpush1.msra.mxu0 %v2689
    %2747 = vmatprep.subr.mxu0 %v2694
    %2748 = vmatpush1.msra.mxu0 %v2693
    %2749 = vmatprep.subr.mxu0 %v2698
    %2750 = vmatpush1.msra.mxu0 %v2697
    %2751 = vmatprep.subr.mxu0 %v2702
    %2752 = vmatpush1.msra.mxu0 %v2701
    %2753 = vmatprep.subr.mxu0 %v2706
    %2754 = vmatpush1.msra.mxu0 %v2705
    %2755 = vmatprep.subr.mxu0 %v2710
    %2756 = vmatpush1.msra.mxu0 %v2709
    %2757 = vmatprep.subr.mxu0 %v2714
    %2758 = vmatpush1.msra.mxu0 %v2713
    %2759 = vmatprep.subr.mxu0 %v2718
    %2760 = vmatpush1.msra.mxu0 %v2717
    %2761 = vmatprep.subr.mxu0 %v2722
    %2762 = vmatpush1.msra.mxu0 %v2721
    %2763 = vmatprep.subr.mxu0 %v2726
    %2764 = vmatpush1.msra.mxu0 %v2725
    %2765 = vmatprep.subr.mxu0 %v2730
    %2766 = vmatpush1.msra.mxu0 %v2729
    %2767 = vmatprep.subr.mxu0 %v2734
    %2768 = vmatpush1.msra.mxu0 %v2733
    %2769 = vmatprep.subr.mxu0 0.0
    %2770 = vmatpush1.msra.mxu0 0.0
    %2771 = vmatprep.subr.mxu0 0.0
    %2772 = vmatpush1.msra.mxu0 0.0
    %2773 = vmatprep.subr.mxu0 0.0
    %2774 = vmatpush1.msra.mxu0 0.0
    %2775 = vmatprep.subr.mxu0 0.0
    %2776 = vmatpush1.msra.mxu0 0.0
    %2777 = vmatprep.subr.mxu0 0.0
    %2778 = vmatpush1.msra.mxu0 0.0
    %2779 = vmatprep.subr.mxu0 0.0
    %2780 = vmatpush1.msra.mxu0 0.0
    %2781 = vmatprep.subr.mxu0 0.0
    %2782 = vmatpush1.msra.mxu0 0.0
    %2783 = vmatprep.subr.mxu0 0.0
    %2784 = vmatpush1.msra.mxu0 0.0
    %2785 = vmatprep.subr.mxu0 0.0
    %2786 = vmatpush1.msra.mxu0 0.0
    %2787 = vmatprep.subr.mxu0 0.0
    %2788 = vmatpush1.msra.mxu0 0.0
    %2789 = vmatprep.subr.mxu0 0.0
    %2790 = vmatpush1.msra.mxu0 0.0
    %2791 = vmatprep.subr.mxu0 0.0
    %2792 = vmatpush1.msra.mxu0 0.0
    %2793 = vmatprep.subr.mxu0 0.0
    %2794 = vmatpush1.msra.mxu0 0.0
    %2795 = vmatprep.subr.mxu0 0.0
    %2796 = vmatpush1.msra.mxu0 0.0
    %2797 = vmatprep.subr.mxu0 0.0
    %2798 = vmatpush1.msra.mxu0 0.0
    %2799 = vmatprep.subr.mxu0 0.0
    %2800 = vmatpush1.msra.mxu0 0.0
    %2801 = vmatprep.mubr.f32.mxu0 0.0
    %2802 = vmatmul.mubr.f32.gmra.mrb[0].mxu0 0.0
    %v2803 = vpop.f32.mrb[0].mxu0
    %v2804 = vadd.f32 0.0, %v2803
    %v2805 = vpop.f32.mrb[0].mxu0
    %v2806 = vadd.f32 0.0, %v2805
    %2807 = vdwg.mxu0
    %2808 = vmatprep.subr.mxu0 %v2676
    %2809 = vmatpush1.msra.mxu0 %v2675
    %2810 = vmatprep.subr.mxu0 %v2680
    %2811 = vmatpush1.msra.mxu0 %v2679
    %2812 = vmatprep.subr.mxu0 %v2684
    %2813 = vmatpush1.msra.mxu0 %v2683
    %2814 = vmatprep.subr.mxu0 %v2688
    %2815 = vmatpush1.msra.mxu0 %v2687
    %2816 = vmatprep.subr.mxu0 %v2692
    %2817 = vmatpush1.msra.mxu0 %v2691
    %2818 = vmatprep.subr.mxu0 %v2696
    %2819 = vmatpush1.msra.mxu0 %v2695
    %2820 = vmatprep.subr.mxu0 %v2700
    %2821 = vmatpush1.msra.mxu0 %v2699
    %2822 = vmatprep.subr.mxu0 %v2704
    %2823 = vmatpush1.msra.mxu0 %v2703
    %2824 = vmatprep.subr.mxu0 %v2708
    %2825 = vmatpush1.msra.mxu0 %v2707
    %2826 = vmatprep.subr.mxu0 %v2712
    %2827 = vmatpush1.msra.mxu0 %v2711
    %2828 = vmatprep.subr.mxu0 %v2716
    %2829 = vmatpush1.msra.mxu0 %v2715
    %2830 = vmatprep.subr.mxu0 %v2720
    %2831 = vmatpush1.msra.mxu0 %v2719
    %2832 = vmatprep.subr.mxu0 %v2724
    %2833 = vmatpush1.msra.mxu0 %v2723
    %2834 = vmatprep.subr.mxu0 %v2728
    %2835 = vmatpush1.msra.mxu0 %v2727
    %2836 = vmatprep.subr.mxu0 %v2732
    %2837 = vmatpush1.msra.mxu0 %v2731
    %2838 = vmatprep.subr.mxu0 %v2736
    %2839 = vmatpush1.msra.mxu0 %v2735
    %2840 = vmatprep.subr.mxu0 0.0
    %2841 = vmatpush1.msra.mxu0 0.0
    %2842 = vmatprep.subr.mxu0 0.0
    %2843 = vmatpush1.msra.mxu0 0.0
    %2844 = vmatprep.subr.mxu0 0.0
    %2845 = vmatpush1.msra.mxu0 0.0
    %2846 = vmatprep.subr.mxu0 0.0
    %2847 = vmatpush1.msra.mxu0 0.0
    %2848 = vmatprep.subr.mxu0 0.0
    %2849 = vmatpush1.msra.mxu0 0.0
    %2850 = vmatprep.subr.mxu0 0.0
    %2851 = vmatpush1.msra.mxu0 0.0
    %2852 = vmatprep.subr.mxu0 0.0
    %2853 = vmatpush1.msra.mxu0 0.0
    %2854 = vmatprep.subr.mxu0 0.0
    %2855 = vmatpush1.msra.mxu0 0.0
    %2856 = vmatprep.subr.mxu0 0.0
    %2857 = vmatpush1.msra.mxu0 0.0
    %2858 = vmatprep.subr.mxu0 0.0
    %2859 = vmatpush1.msra.mxu0 0.0
    %2860 = vmatprep.subr.mxu0 0.0
    %2861 = vmatpush1.msra.mxu0 0.0
    %2862 = vmatprep.subr.mxu0 0.0
    %2863 = vmatpush1.msra.mxu0 0.0
    %2864 = vmatprep.subr.mxu0 0.0
    %2865 = vmatpush1.msra.mxu0 0.0
    %2866 = vmatprep.subr.mxu0 0.0
    %2867 = vmatpush1.msra.mxu0 0.0
    %2868 = vmatprep.subr.mxu0 0.0
    %2869 = vmatpush1.msra.mxu0 0.0
    %2870 = vmatprep.subr.mxu0 0.0
    %2871 = vmatpush1.msra.mxu0 0.0
    %2872 = vmatprep.mubr.f32.mxu0 0.0
    %2873 = vmatmul.mubr.f32.gmra.mrb[0].mxu0 0.0
    %v2874 = vpop.f32.mrb[0].mxu0
    %v2875 = vadd.f32 0.0, %v2874
    %v2876 = vpop.f32.mrb[0].mxu0
    %v2877 = vadd.f32 0.0, %v2876
    %2878 = vdwg.mxu0
    %v2879 = vadd.f32 %v2668, %v2804
    %v2880 = vadd.f32 %v2669, %v2806
    %v2881 = vadd.f32 %v2670, %v2875
    %v2882 = vadd.f32 %v2671, %v2877
    %v2883 = vxor.u32 %v2879, 2147483648
    %v2884 = vmul.f32 %v2883, 1.442695
    %v2885 = vpow.pop %v2884
    %v2886 = vadd.f32 %v2885, 1.0
    %v2887 = vrcp.pop %v2886
    %v2888 = vmul.f32 1.0, %v2887
    %v2889 = vxor.u32 %v2880, 2147483648
    %v2890 = vmul.f32 %v2889, 1.442695
    %v2891 = vpow.pop %v2890
    %v2892 = vadd.f32 %v2891, 1.0
    %v2893 = vrcp.pop %v2892
    %v2894 = vmul.f32 1.0, %v2893
    %v2895 = vtanh.pop %v2881
    %v2896 = vxor.u32 %v2882, 2147483648
    %v2897 = vmul.f32 %v2896, 1.442695
    %v2898 = vpow.pop %v2897
    %v2899 = vadd.f32 %v2898, 1.0
    %v2900 = vrcp.pop %v2899
    %v2901 = vmul.f32 1.0, %v2900
    %v2902 = vmul.f32 %v2894, 0.0
    %v2903 = vmul.f32 %v2888, %v2895
    %v2904 = vadd.f32 %v2902, %v2903
    %v2905 = vtanh.pop %v2904
    %v2906 = vmul.f32 %v2901, %v2905
    %v2907 = vld [vmem:[%s616] sm:$0xff]
    %v2908 = vld [vmem:[%s616 + $0x8] sm:$0xff]
    %v2909 = vld [vmem:[%s616 + $0x10] sm:$0xff]
    %v2910 = vld [vmem:[%s616 + $0x18] sm:$0xff]
    %2911 = vmatprep.subr.mxu0 %v2674
    %2912 = vmatpush1.msra.mxu0 %v2673
    %2913 = vmatprep.subr.mxu0 %v2678
    %2914 = vmatpush1.msra.mxu0 %v2677
    %2915 = vmatprep.subr.mxu0 %v2682
    %2916 = vmatpush1.msra.mxu0 %v2681
    %2917 = vmatprep.subr.mxu0 %v2686
    %2918 = vmatpush1.msra.mxu0 %v2685
    %2919 = vmatprep.subr.mxu0 %v2690
    %2920 = vmatpush1.msra.mxu0 %v2689
    %2921 = vmatprep.subr.mxu0 %v2694
    %2922 = vmatpush1.msra.mxu0 %v2693
    %2923 = vmatprep.subr.mxu0 %v2698
    %2924 = vmatpush1.msra.mxu0 %v2697
    %2925 = vmatprep.subr.mxu0 %v2702
    %2926 = vmatpush1.msra.mxu0 %v2701
    %2927 = vmatprep.subr.mxu0 %v2706
    %2928 = vmatpush1.msra.mxu0 %v2705
    %2929 = vmatprep.subr.mxu0 %v2710
    %2930 = vmatpush1.msra.mxu0 %v2709
    %2931 = vmatprep.subr.mxu0 %v2714
    %2932 = vmatpush1.msra.mxu0 %v2713
    %2933 = vmatprep.subr.mxu0 %v2718
    %2934 = vmatpush1.msra.mxu0 %v2717
    %2935 = vmatprep.subr.mxu0 %v2722
    %2936 = vmatpush1.msra.mxu0 %v2721
    %2937 = vmatprep.subr.mxu0 %v2726
    %2938 = vmatpush1.msra.mxu0 %v2725
    %2939 = vmatprep.subr.mxu0 %v2730
    %2940 = vmatpush1.msra.mxu0 %v2729
    %2941 = vmatprep.subr.mxu0 %v2734
    %2942 = vmatpush1.msra.mxu0 %v2733
    %2943 = vmatprep.subr.mxu0 0.0
    %2944 = vmatpush1.msra.mxu0 0.0
    %2945 = vmatprep.subr.mxu0 0.0
    %2946 = vmatpush1.msra.mxu0 0.0
    %2947 = vmatprep.subr.mxu0 0.0
    %2948 = vmatpush1.msra.mxu0 0.0
    %2949 = vmatprep.subr.mxu0 0.0
    %2950 = vmatpush1.msra.mxu0 0.0
    %2951 = vmatprep.subr.mxu0 0.0
    %2952 = vmatpush1.msra.mxu0 0.0
    %2953 = vmatprep.subr.mxu0 0.0
    %2954 = vmatpush1.msra.mxu0 0.0
    %2955 = vmatprep.subr.mxu0 0.0
    %2956 = vmatpush1.msra.mxu0 0.0
    %2957 = vmatprep.subr.mxu0 0.0
    %2958 = vmatpush1.msra.mxu0 0.0
    %2959 = vmatprep.subr.mxu0 0.0
    %2960 = vmatpush1.msra.mxu0 0.0
    %2961 = vmatprep.subr.mxu0 0.0
    %2962 = vmatpush1.msra.mxu0 0.0
    %2963 = vmatprep.subr.mxu0 0.0
    %2964 = vmatpush1.msra.mxu0 0.0
    %2965 = vmatprep.subr.mxu0 0.0
    %2966 = vmatpush1.msra.mxu0 0.0
    %2967 = vmatprep.subr.mxu0 0.0
    %2968 = vmatpush1.msra.mxu0 0.0
    %2969 = vmatprep.subr.mxu0 0.0
    %2970 = vmatpush1.msra.mxu0 0.0
    %2971 = vmatprep.subr.mxu0 0.0
    %2972 = vmatpush1.msra.mxu0 0.0
    %2973 = vmatprep.subr.mxu0 0.0
    %2974 = vmatpush1.msra.mxu0 0.0
    %2975 = vmatprep.mubr.f32.mxu0 0.0
    %2976 = vmatmul.mubr.f32.gmra.mrb[0].mxu0 %v2906
    %v2977 = vpop.f32.mrb[0].mxu0
    %v2978 = vadd.f32 0.0, %v2977
    %v2979 = vpop.f32.mrb[0].mxu0
    %v2980 = vadd.f32 0.0, %v2979
    %2981 = vdwg.mxu0
    %2982 = vmatprep.subr.mxu0 %v2676
    %2983 = vmatpush1.msra.mxu0 %v2675
    %2984 = vmatprep.subr.mxu0 %v2680
    %2985 = vmatpush1.msra.mxu0 %v2679
    %2986 = vmatprep.subr.mxu0 %v2684
    %2987 = vmatpush1.msra.mxu0 %v2683
    %2988 = vmatprep.subr.mxu0 %v2688
    %2989 = vmatpush1.msra.mxu0 %v2687
    %2990 = vmatprep.subr.mxu0 %v2692
    %2991 = vmatpush1.msra.mxu0 %v2691
    %2992 = vmatprep.subr.mxu0 %v2696
    %2993 = vmatpush1.msra.mxu0 %v2695
    %2994 = vmatprep.subr.mxu0 %v2700
    %2995 = vmatpush1.msra.mxu0 %v2699
    %2996 = vmatprep.subr.mxu0 %v2704
    %2997 = vmatpush1.msra.mxu0 %v2703
    %2998 = vmatprep.subr.mxu0 %v2708
    %2999 = vmatpush1.msra.mxu0 %v2707
    %3000 = vmatprep.subr.mxu0 %v2712
    %3001 = vmatpush1.msra.mxu0 %v2711
    %3002 = vmatprep.subr.mxu0 %v2716
    %3003 = vmatpush1.msra.mxu0 %v2715
    %3004 = vmatprep.subr.mxu0 %v2720
    %3005 = vmatpush1.msra.mxu0 %v2719
    %3006 = vmatprep.subr.mxu0 %v2724
    %3007 = vmatpush1.msra.mxu0 %v2723
    %3008 = vmatprep.subr.mxu0 %v2728
    %3009 = vmatpush1.msra.mxu0 %v2727
    %3010 = vmatprep.subr.mxu0 %v2732
    %3011 = vmatpush1.msra.mxu0 %v2731
    %3012 = vmatprep.subr.mxu0 %v2736
    %3013 = vmatpush1.msra.mxu0 %v2735
    %3014 = vmatprep.subr.mxu0 0.0
    %3015 = vmatpush1.msra.mxu0 0.0
    %3016 = vmatprep.subr.mxu0 0.0
    %3017 = vmatpush1.msra.mxu0 0.0
    %3018 = vmatprep.subr.mxu0 0.0
    %3019 = vmatpush1.msra.mxu0 0.0
    %3020 = vmatprep.subr.mxu0 0.0
    %3021 = vmatpush1.msra.mxu0 0.0
    %3022 = vmatprep.subr.mxu0 0.0
    %3023 = vmatpush1.msra.mxu0 0.0
    %3024 = vmatprep.subr.mxu0 0.0
    %3025 = vmatpush1.msra.mxu0 0.0
    %3026 = vmatprep.subr.mxu0 0.0
    %3027 = vmatpush1.msra.mxu0 0.0
    %3028 = vmatprep.subr.mxu0 0.0
    %3029 = vmatpush1.msra.mxu0 0.0
    %3030 = vmatprep.subr.mxu0 0.0
    %3031 = vmatpush1.msra.mxu0 0.0
    %3032 = vmatprep.subr.mxu0 0.0
    %3033 = vmatpush1.msra.mxu0 0.0
    %3034 = vmatprep.subr.mxu0 0.0
    %3035 = vmatpush1.msra.mxu0 0.0
    %3036 = vmatprep.subr.mxu0 0.0
    %3037 = vmatpush1.msra.mxu0 0.0
    %3038 = vmatprep.subr.mxu0 0.0
    %3039 = vmatpush1.msra.mxu0 0.0
    %3040 = vmatprep.subr.mxu0 0.0
    %3041 = vmatpush1.msra.mxu0 0.0
    %3042 = vmatprep.subr.mxu0 0.0
    %3043 = vmatpush1.msra.mxu0 0.0
    %3044 = vmatprep.subr.mxu0 0.0
    %3045 = vmatpush1.msra.mxu0 0.0
    %3046 = vmatprep.mubr.f32.mxu0 0.0
    %3047 = vmatmul.mubr.f32.gmra.mrb[0].mxu0 %v2906
    %v3048 = vpop.f32.mrb[0].mxu0
    %v3049 = vadd.f32 0.0, %v3048
    %v3050 = vpop.f32.mrb[0].mxu0
    %v3051 = vadd.f32 0.0, %v3050
    %3052 = vdwg.mxu0
    %v3053 = vadd.f32 %v2907, %v2978
    %v3054 = vadd.f32 %v2908, %v2980
    %v3055 = vadd.f32 %v2909, %v3049
    %v3056 = vadd.f32 %v2910, %v3051
    %v3057 = vxor.u32 %v3053, 2147483648
    %v3058 = vmul.f32 %v3057, 1.442695
    %v3059 = vpow.pop %v3058
    %v3060 = vadd.f32 %v3059, 1.0
    %v3061 = vrcp.pop %v3060
    %v3062 = vmul.f32 1.0, %v3061
    %v3063 = vxor.u32 %v3054, 2147483648
    %v3064 = vmul.f32 %v3063, 1.442695
    %v3065 = vpow.pop %v3064
    %v3066 = vadd.f32 %v3065, 1.0
    %v3067 = vrcp.pop %v3066
    %v3068 = vmul.f32 1.0, %v3067
    %v3069 = vtanh.pop %v3055
    %v3070 = vxor.u32 %v3056, 2147483648
    %v3071 = vmul.f32 %v3070, 1.442695
    %v3072 = vpow.pop %v3071
    %v3073 = vadd.f32 %v3072, 1.0
    %v3074 = vrcp.pop %v3073
    %v3075 = vmul.f32 1.0, %v3074
    %v3076 = vmul.f32 %v3068, %v2904
    %v3077 = vmul.f32 %v3062, %v3069
    %v3078 = vadd.f32 %v3076, %v3077
    %v3079 = vtanh.pop %v3078
    %v3080 = vmul.f32 %v3075, %v3079
    %v3081 = vld [vmem:[%s859] sm:$0xff]
    %v3082 = vld [vmem:[%s859 + $0x8] sm:$0xff]
    %v3083 = vld [vmem:[%s859 + $0x10] sm:$0xff]
    %v3084 = vld [vmem:[%s859 + $0x18] sm:$0xff]
    %3085 = vmatprep.subr.mxu0 %v2674
    %3086 = vmatpush1.msra.mxu0 %v2673
    %3087 = vmatprep.subr.mxu0 %v2678
    %3088 = vmatpush1.msra.mxu0 %v2677
    %3089 = vmatprep.subr.mxu0 %v2682
    %3090 = vmatpush1.msra.mxu0 %v2681
    %3091 = vmatprep.subr.mxu0 %v2686
    %3092 = vmatpush1.msra.mxu0 %v2685
    %3093 = vmatprep.subr.mxu0 %v2690
    %3094 = vmatpush1.msra.mxu0 %v2689
    %3095 = vmatprep.subr.mxu0 %v2694
    %3096 = vmatpush1.msra.mxu0 %v2693
    %3097 = vmatprep.subr.mxu0 %v2698
    %3098 = vmatpush1.msra.mxu0 %v2697
    %3099 = vmatprep.subr.mxu0 %v2702
    %3100 = vmatpush1.msra.mxu0 %v2701
    %3101 = vmatprep.subr.mxu0 %v2706
    %3102 = vmatpush1.msra.mxu0 %v2705
    %3103 = vmatprep.subr.mxu0 %v2710
    %3104 = vmatpush1.msra.mxu0 %v2709
    %3105 = vmatprep.subr.mxu0 %v2714
    %3106 = vmatpush1.msra.mxu0 %v2713
    %3107 = vmatprep.subr.mxu0 %v2718
    %3108 = vmatpush1.msra.mxu0 %v2717
    %3109 = vmatprep.subr.mxu0 %v2722
    %3110 = vmatpush1.msra.mxu0 %v2721
    %3111 = vmatprep.subr.mxu0 %v2726
    %3112 = vmatpush1.msra.mxu0 %v2725
    %3113 = vmatprep.subr.mxu0 %v2730
    %3114 = vmatpush1.msra.mxu0 %v2729
    %3115 = vmatprep.subr.mxu0 %v2734
    %3116 = vmatpush1.msra.mxu0 %v2733
    %3117 = vmatprep.subr.mxu0 0.0
    %3118 = vmatpush1.msra.mxu0 0.0
    %3119 = vmatprep.subr.mxu0 0.0
    %3120 = vmatpush1.msra.mxu0 0.0
    %3121 = vmatprep.subr.mxu0 0.0
    %3122 = vmatpush1.msra.mxu0 0.0
    %3123 = vmatprep.subr.mxu0 0.0
    %3124 = vmatpush1.msra.mxu0 0.0
    %3125 = vmatprep.subr.mxu0 0.0
    %3126 = vmatpush1.msra.mxu0 0.0
    %3127 = vmatprep.subr.mxu0 0.0
    %3128 = vmatpush1.msra.mxu0 0.0
    %3129 = vmatprep.subr.mxu0 0.0
    %3130 = vmatpush1.msra.mxu0 0.0
    %3131 = vmatprep.subr.mxu0 0.0
    %3132 = vmatpush1.msra.mxu0 0.0
    %3133 = vmatprep.subr.mxu0 0.0
    %3134 = vmatpush1.msra.mxu0 0.0
    %3135 = vmatprep.subr.mxu0 0.0
    %3136 = vmatpush1.msra.mxu0 0.0
    %3137 = vmatprep.subr.mxu0 0.0
    %3138 = vmatpush1.msra.mxu0 0.0
    %3139 = vmatprep.subr.mxu0 0.0
    %3140 = vmatpush1.msra.mxu0 0.0
    %3141 = vmatprep.subr.mxu0 0.0
    %3142 = vmatpush1.msra.mxu0 0.0
    %3143 = vmatprep.subr.mxu0 0.0
    %3144 = vmatpush1.msra.mxu0 0.0
    %3145 = vmatprep.subr.mxu0 0.0
    %3146 = vmatpush1.msra.mxu0 0.0
    %3147 = vmatprep.subr.mxu0 0.0
    %3148 = vmatpush1.msra.mxu0 0.0
    %3149 = vmatprep.mubr.f32.mxu0 0.0
    %3150 = vmatmul.mubr.f32.gmra.mrb[0].mxu0 %v3080
    %v3151 = vpop.f32.mrb[0].mxu0
    %v3152 = vadd.f32 0.0, %v3151
    %v3153 = vpop.f32.mrb[0].mxu0
    %v3154 = vadd.f32 0.0, %v3153
    %3155 = vdwg.mxu0
    %3156 = vmatprep.subr.mxu0 %v2676
    %3157 = vmatpush1.msra.mxu0 %v2675
    %3158 = vmatprep.subr.mxu0 %v2680
    %3159 = vmatpush1.msra.mxu0 %v2679
    %3160 = vmatprep.subr.mxu0 %v2684
    %3161 = vmatpush1.msra.mxu0 %v2683
    %3162 = vmatprep.subr.mxu0 %v2688
    %3163 = vmatpush1.msra.mxu0 %v2687
    %3164 = vmatprep.subr.mxu0 %v2692
    %3165 = vmatpush1.msra.mxu0 %v2691
    %3166 = vmatprep.subr.mxu0 %v2696
    %3167 = vmatpush1.msra.mxu0 %v2695
    %3168 = vmatprep.subr.mxu0 %v2700
    %3169 = vmatpush1.msra.mxu0 %v2699
    %3170 = vmatprep.subr.mxu0 %v2704
    %3171 = vmatpush1.msra.mxu0 %v2703
    %3172 = vmatprep.subr.mxu0 %v2708
    %3173 = vmatpush1.msra.mxu0 %v2707
    %3174 = vmatprep.subr.mxu0 %v2712
    %3175 = vmatpush1.msra.mxu0 %v2711
    %3176 = vmatprep.subr.mxu0 %v2716
    %3177 = vmatpush1.msra.mxu0 %v2715
    %3178 = vmatprep.subr.mxu0 %v2720
    %3179 = vmatpush1.msra.mxu0 %v2719
    %3180 = vmatprep.subr.mxu0 %v2724
    %3181 = vmatpush1.msra.mxu0 %v2723
    %3182 = vmatprep.subr.mxu0 %v2728
    %3183 = vmatpush1.msra.mxu0 %v2727
    %3184 = vmatprep.subr.mxu0 %v2732
    %3185 = vmatpush1.msra.mxu0 %v2731
    %3186 = vmatprep.subr.mxu0 %v2736
    %3187 = vmatpush1.msra.mxu0 %v2735
    %3188 = vmatprep.subr.mxu0 0.0
    %3189 = vmatpush1.msra.mxu0 0.0
    %3190 = vmatprep.subr.mxu0 0.0
    %3191 = vmatpush1.msra.mxu0 0.0
    %3192 = vmatprep.subr.mxu0 0.0
    %3193 = vmatpush1.msra.mxu0 0.0
    %3194 = vmatprep.subr.mxu0 0.0
    %3195 = vmatpush1.msra.mxu0 0.0
    %3196 = vmatprep.subr.mxu0 0.0
    %3197 = vmatpush1.msra.mxu0 0.0
    %3198 = vmatprep.subr.mxu0 0.0
    %3199 = vmatpush1.msra.mxu0 0.0
    %3200 = vmatprep.subr.mxu0 0.0
    %3201 = vmatpush1.msra.mxu0 0.0
    %3202 = vmatprep.subr.mxu0 0.0
    %3203 = vmatpush1.msra.mxu0 0.0
    %3204 = vmatprep.subr.mxu0 0.0
    %3205 = vmatpush1.msra.mxu0 0.0
    %3206 = vmatprep.subr.mxu0 0.0
    %3207 = vmatpush1.msra.mxu0 0.0
    %3208 = vmatprep.subr.mxu0 0.0
    %3209 = vmatpush1.msra.mxu0 0.0
    %3210 = vmatprep.subr.mxu0 0.0
    %3211 = vmatpush1.msra.mxu0 0.0
    %3212 = vmatprep.subr.mxu0 0.0
    %3213 = vmatpush1.msra.mxu0 0.0
    %3214 = vmatprep.subr.mxu0 0.0
    %3215 = vmatpush1.msra.mxu0 0.0
    %3216 = vmatprep.subr.mxu0 0.0
    %3217 = vmatpush1.msra.mxu0 0.0
    %3218 = vmatprep.subr.mxu0 0.0
    %3219 = vmatpush1.msra.mxu0 0.0
    %3220 = vmatprep.mubr.f32.mxu0 0.0
    %3221 = vmatmul.mubr.f32.gmra.mrb[0].mxu0 %v3080
    %v3222 = vpop.f32.mrb[0].mxu0
    %v3223 = vadd.f32 0.0, %v3222
    %v3224 = vpop.f32.mrb[0].mxu0
    %v3225 = vadd.f32 0.0, %v3224
    %3226 = vdwg.mxu0
    %v3227 = vadd.f32 %v3081, %v3152
    %v3228 = vadd.f32 %v3082, %v3154
    %v3229 = vadd.f32 %v3083, %v3223
    %v3230 = vadd.f32 %v3084, %v3225
    %v3231 = vxor.u32 %v3227, 2147483648
    %v3232 = vmul.f32 %v3231, 1.442695
    %v3233 = vpow.pop %v3232
    %v3234 = vadd.f32 %v3233, 1.0
    %v3235 = vrcp.pop %v3234
    %v3236 = vmul.f32 1.0, %v3235
    %v3237 = vxor.u32 %v3228, 2147483648
    %v3238 = vmul.f32 %v3237, 1.442695
    %v3239 = vpow.pop %v3238
    %v3240 = vadd.f32 %v3239, 1.0
    %v3241 = vrcp.pop %v3240
    %v3242 = vmul.f32 1.0, %v3241
    %v3243 = vtanh.pop %v3229
    %v3244 = vxor.u32 %v3230, 2147483648
    %v3245 = vmul.f32 %v3244, 1.442695
    %v3246 = vpow.pop %v3245
    %v3247 = vadd.f32 %v3246, 1.0
    %v3248 = vrcp.pop %v3247
    %v3249 = vmul.f32 1.0, %v3248
    %v3250 = vmul.f32 %v3242, %v3078
    %v3251 = vmul.f32 %v3236, %v3243
    %v3252 = vadd.f32 %v3250, %v3251
    %v3253 = vtanh.pop %v3252
    %v3254 = vmul.f32 %v3249, %v3253
    %v3255 = vld [vmem:[%s1102] sm:$0xff]
    %v3256 = vld [vmem:[%s1102 + $0x8] sm:$0xff]
    %v3257 = vld [vmem:[%s1102 + $0x10] sm:$0xff]
    %v3258 = vld [vmem:[%s1102 + $0x18] sm:$0xff]
    %3259 = vmatprep.subr.mxu0 %v2674
    %3260 = vmatpush1.msra.mxu0 %v2673
    %3261 = vmatprep.subr.mxu0 %v2678
    %3262 = vmatpush1.msra.mxu0 %v2677
    %3263 = vmatprep.subr.mxu0 %v2682
    %3264 = vmatpush1.msra.mxu0 %v2681
    %3265 = vmatprep.subr.mxu0 %v2686
    %3266 = vmatpush1.msra.mxu0 %v2685
    %3267 = vmatprep.subr.mxu0 %v2690
    %3268 = vmatpush1.msra.mxu0 %v2689
    %3269 = vmatprep.subr.mxu0 %v2694
    %3270 = vmatpush1.msra.mxu0 %v2693
    %3271 = vmatprep.subr.mxu0 %v2698
    %3272 = vmatpush1.msra.mxu0 %v2697
    %3273 = vmatprep.subr.mxu0 %v2702
    %3274 = vmatpush1.msra.mxu0 %v2701
    %3275 = vmatprep.subr.mxu0 %v2706
    %3276 = vmatpush1.msra.mxu0 %v2705
    %3277 = vmatprep.subr.mxu0 %v2710
    %3278 = vmatpush1.msra.mxu0 %v2709
    %3279 = vmatprep.subr.mxu0 %v2714
    %3280 = vmatpush1.msra.mxu0 %v2713
    %3281 = vmatprep.subr.mxu0 %v2718
    %3282 = vmatpush1.msra.mxu0 %v2717
    %3283 = vmatprep.subr.mxu0 %v2722
    %3284 = vmatpush1.msra.mxu0 %v2721
    %3285 = vmatprep.subr.mxu0 %v2726
    %3286 = vmatpush1.msra.mxu0 %v2725
    %3287 = vmatprep.subr.mxu0 %v2730
    %3288 = vmatpush1.msra.mxu0 %v2729
    %3289 = vmatprep.subr.mxu0 %v2734
    %3290 = vmatpush1.msra.mxu0 %v2733
    %3291 = vmatprep.subr.mxu0 0.0
    %3292 = vmatpush1.msra.mxu0 0.0
    %3293 = vmatprep.subr.mxu0 0.0
    %3294 = vmatpush1.msra.mxu0 0.0
    %3295 = vmatprep.subr.mxu0 0.0
    %3296 = vmatpush1.msra.mxu0 0.0
    %3297 = vmatprep.subr.mxu0 0.0
    %3298 = vmatpush1.msra.mxu0 0.0
    %3299 = vmatprep.subr.mxu0 0.0
    %3300 = vmatpush1.msra.mxu0 0.0
    %3301 = vmatprep.subr.mxu0 0.0
    %3302 = vmatpush1.msra.mxu0 0.0
    %3303 = vmatprep.subr.mxu0 0.0
    %3304 = vmatpush1.msra.mxu0 0.0
    %3305 = vmatprep.subr.mxu0 0.0
    %3306 = vmatpush1.msra.mxu0 0.0
    %3307 = vmatprep.subr.mxu0 0.0
    %3308 = vmatpush1.msra.mxu0 0.0
    %3309 = vmatprep.subr.mxu0 0.0
    %3310 = vmatpush1.msra.mxu0 0.0
    %3311 = vmatprep.subr.mxu0 0.0
    %3312 = vmatpush1.msra.mxu0 0.0
    %3313 = vmatprep.subr.mxu0 0.0
    %3314 = vmatpush1.msra.mxu0 0.0
    %3315 = vmatprep.subr.mxu0 0.0
    %3316 = vmatpush1.msra.mxu0 0.0
    %3317 = vmatprep.subr.mxu0 0.0
    %3318 = vmatpush1.msra.mxu0 0.0
    %3319 = vmatprep.subr.mxu0 0.0
    %3320 = vmatpush1.msra.mxu0 0.0
    %3321 = vmatprep.subr.mxu0 0.0
    %3322 = vmatpush1.msra.mxu0 0.0
    %3323 = vmatprep.mubr.f32.mxu0 0.0
    %3324 = vmatmul.mubr.f32.gmra.mrb[0].mxu0 %v3254
    %v3325 = vpop.f32.mrb[0].mxu0
    %v3326 = vadd.f32 0.0, %v3325
    %v3327 = vpop.f32.mrb[0].mxu0
    %v3328 = vadd.f32 0.0, %v3327
    %3329 = vdwg.mxu0
    %3330 = vmatprep.subr.mxu0 %v2676
    %3331 = vmatpush1.msra.mxu0 %v2675
    %3332 = vmatprep.subr.mxu0 %v2680
    %3333 = vmatpush1.msra.mxu0 %v2679
    %3334 = vmatprep.subr.mxu0 %v2684
    %3335 = vmatpush1.msra.mxu0 %v2683
    %3336 = vmatprep.subr.mxu0 %v2688
    %3337 = vmatpush1.msra.mxu0 %v2687
    %3338 = vmatprep.subr.mxu0 %v2692
    %3339 = vmatpush1.msra.mxu0 %v2691
    %3340 = vmatprep.subr.mxu0 %v2696
    %3341 = vmatpush1.msra.mxu0 %v2695
    %3342 = vmatprep.subr.mxu0 %v2700
    %3343 = vmatpush1.msra.mxu0 %v2699
    %3344 = vmatprep.subr.mxu0 %v2704
    %3345 = vmatpush1.msra.mxu0 %v2703
    %3346 = vmatprep.subr.mxu0 %v2708
    %3347 = vmatpush1.msra.mxu0 %v2707
    %3348 = vmatprep.subr.mxu0 %v2712
    %3349 = vmatpush1.msra.mxu0 %v2711
    %3350 = vmatprep.subr.mxu0 %v2716
    %3351 = vmatpush1.msra.mxu0 %v2715
    %3352 = vmatprep.subr.mxu0 %v2720
    %3353 = vmatpush1.msra.mxu0 %v2719
    %3354 = vmatprep.subr.mxu0 %v2724
    %3355 = vmatpush1.msra.mxu0 %v2723
    %3356 = vmatprep.subr.mxu0 %v2728
    %3357 = vmatpush1.msra.mxu0 %v2727
    %3358 = vmatprep.subr.mxu0 %v2732
    %3359 = vmatpush1.msra.mxu0 %v2731
    %3360 = vmatprep.subr.mxu0 %v2736
    %3361 = vmatpush1.msra.mxu0 %v2735
    %3362 = vmatprep.subr.mxu0 0.0
    %3363 = vmatpush1.msra.mxu0 0.0
    %3364 = vmatprep.subr.mxu0 0.0
    %3365 = vmatpush1.msra.mxu0 0.0
    %3366 = vmatprep.subr.mxu0 0.0
    %3367 = vmatpush1.msra.mxu0 0.0
    %3368 = vmatprep.subr.mxu0 0.0
    %3369 = vmatpush1.msra.mxu0 0.0
    %3370 = vmatprep.subr.mxu0 0.0
    %3371 = vmatpush1.msra.mxu0 0.0
    %3372 = vmatprep.subr.mxu0 0.0
    %3373 = vmatpush1.msra.mxu0 0.0
    %3374 = vmatprep.subr.mxu0 0.0
    %3375 = vmatpush1.msra.mxu0 0.0
    %3376 = vmatprep.subr.mxu0 0.0
    %3377 = vmatpush1.msra.mxu0 0.0
    %3378 = vmatprep.subr.mxu0 0.0
    %3379 = vmatpush1.msra.mxu0 0.0
    %3380 = vmatprep.subr.mxu0 0.0
    %3381 = vmatpush1.msra.mxu0 0.0
    %3382 = vmatprep.subr.mxu0 0.0
    %3383 = vmatpush1.msra.mxu0 0.0
    %3384 = vmatprep.subr.mxu0 0.0
    %3385 = vmatpush1.msra.mxu0 0.0
    %3386 = vmatprep.subr.mxu0 0.0
    %3387 = vmatpush1.msra.mxu0 0.0
    %3388 = vmatprep.subr.mxu0 0.0
    %3389 = vmatpush1.msra.mxu0 0.0
    %3390 = vmatprep.subr.mxu0 0.0
    %3391 = vmatpush1.msra.mxu0 0.0
    %3392 = vmatprep.subr.mxu0 0.0
    %3393 = vmatpush1.msra.mxu0 0.0
    %3394 = vmatprep.mubr.f32.mxu0 0.0
    %3395 = vmatmul.mubr.f32.gmra.mrb[0].mxu0 %v3254
    %v3396 = vpop.f32.mrb[0].mxu0
    %v3397 = vadd.f32 0.0, %v3396
    %v3398 = vpop.f32.mrb[0].mxu0
    %v3399 = vadd.f32 0.0, %v3398
    %3400 = vdwg.mxu0
    %v3401 = vadd.f32 %v3255, %v3326
    %v3402 = vadd.f32 %v3256, %v3328
    %v3403 = vadd.f32 %v3257, %v3397
    %v3404 = vadd.f32 %v3258, %v3399
    %v3405 = vxor.u32 %v3401, 2147483648
    %v3406 = vmul.f32 %v3405, 1.442695
    %v3407 = vpow.pop %v3406
    %v3408 = vadd.f32 %v3407, 1.0
    %v3409 = vrcp.pop %v3408
    %v3410 = vmul.f32 1.0, %v3409
    %v3411 = vxor.u32 %v3402, 2147483648
    %v3412 = vmul.f32 %v3411, 1.442695
    %v3413 = vpow.pop %v3412
    %v3414 = vadd.f32 %v3413, 1.0
    %v3415 = vrcp.pop %v3414
    %v3416 = vmul.f32 1.0, %v3415
    %v3417 = vtanh.pop %v3403
    %v3418 = vxor.u32 %v3404, 2147483648
    %v3419 = vmul.f32 %v3418, 1.442695
    %v3420 = vpow.pop %v3419
    %v3421 = vadd.f32 %v3420, 1.0
    %v3422 = vrcp.pop %v3421
    %v3423 = vmul.f32 1.0, %v3422
    %v3424 = vmul.f32 %v3416, %v3252
    %v3425 = vmul.f32 %v3410, %v3417
    %v3426 = vadd.f32 %v3424, %v3425
    %v3427 = vtanh.pop %v3426
    %v3428 = vmul.f32 %v3423, %v3427
    %v3429 = vld [vmem:[%s1345] sm:$0xff]
    %v3430 = vld [vmem:[%s1345 + $0x8] sm:$0xff]
    %v3431 = vld [vmem:[%s1345 + $0x10] sm:$0xff]
    %v3432 = vld [vmem:[%s1345 + $0x18] sm:$0xff]
    %3433 = vmatprep.subr.mxu0 %v2674
    %3434 = vmatpush1.msra.mxu0 %v2673
    %3435 = vmatprep.subr.mxu0 %v2678
    %3436 = vmatpush1.msra.mxu0 %v2677
    %3437 = vmatprep.subr.mxu0 %v2682
    %3438 = vmatpush1.msra.mxu0 %v2681
    %3439 = vmatprep.subr.mxu0 %v2686
    %3440 = vmatpush1.msra.mxu0 %v2685
    %3441 = vmatprep.subr.mxu0 %v2690
    %3442 = vmatpush1.msra.mxu0 %v2689
    %3443 = vmatprep.subr.mxu0 %v2694
    %3444 = vmatpush1.msra.mxu0 %v2693
    %3445 = vmatprep.subr.mxu0 %v2698
    %3446 = vmatpush1.msra.mxu0 %v2697
    %3447 = vmatprep.subr.mxu0 %v2702
    %3448 = vmatpush1.msra.mxu0 %v2701
    %3449 = vmatprep.subr.mxu0 %v2706
    %3450 = vmatpush1.msra.mxu0 %v2705
    %3451 = vmatprep.subr.mxu0 %v2710
    %3452 = vmatpush1.msra.mxu0 %v2709
    %3453 = vmatprep.subr.mxu0 %v2714
    %3454 = vmatpush1.msra.mxu0 %v2713
    %3455 = vmatprep.subr.mxu0 %v2718
    %3456 = vmatpush1.msra.mxu0 %v2717
    %3457 = vmatprep.subr.mxu0 %v2722
    %3458 = vmatpush1.msra.mxu0 %v2721
    %3459 = vmatprep.subr.mxu0 %v2726
    %3460 = vmatpush1.msra.mxu0 %v2725
    %3461 = vmatprep.subr.mxu0 %v2730
    %3462 = vmatpush1.msra.mxu0 %v2729
    %3463 = vmatprep.subr.mxu0 %v2734
    %3464 = vmatpush1.msra.mxu0 %v2733
    %3465 = vmatprep.subr.mxu0 0.0
    %3466 = vmatpush1.msra.mxu0 0.0
    %3467 = vmatprep.subr.mxu0 0.0
    %3468 = vmatpush1.msra.mxu0 0.0
    %3469 = vmatprep.subr.mxu0 0.0
    %3470 = vmatpush1.msra.mxu0 0.0
    %3471 = vmatprep.subr.mxu0 0.0
    %3472 = vmatpush1.msra.mxu0 0.0
    %3473 = vmatprep.subr.mxu0 0.0
    %3474 = vmatpush1.msra.mxu0 0.0
    %3475 = vmatprep.subr.mxu0 0.0
    %3476 = vmatpush1.msra.mxu0 0.0
    %3477 = vmatprep.subr.mxu0 0.0
    %3478 = vmatpush1.msra.mxu0 0.0
    %3479 = vmatprep.subr.mxu0 0.0
    %3480 = vmatpush1.msra.mxu0 0.0
    %3481 = vmatprep.subr.mxu0 0.0
    %3482 = vmatpush1.msra.mxu0 0.0
    %3483 = vmatprep.subr.mxu0 0.0
    %3484 = vmatpush1.msra.mxu0 0.0
    %3485 = vmatprep.subr.mxu0 0.0
    %3486 = vmatpush1.msra.mxu0 0.0
    %3487 = vmatprep.subr.mxu0 0.0
    %3488 = vmatpush1.msra.mxu0 0.0
    %3489 = vmatprep.subr.mxu0 0.0
    %3490 = vmatpush1.msra.mxu0 0.0
    %3491 = vmatprep.subr.mxu0 0.0
    %3492 = vmatpush1.msra.mxu0 0.0
    %3493 = vmatprep.subr.mxu0 0.0
    %3494 = vmatpush1.msra.mxu0 0.0
    %3495 = vmatprep.subr.mxu0 0.0
    %3496 = vmatpush1.msra.mxu0 0.0
    %3497 = vmatprep.mubr.f32.mxu0 0.0
    %3498 = vmatmul.mubr.f32.gmra.mrb[0].mxu0 %v3428
    %v3499 = vpop.f32.mrb[0].mxu0
    %v3500 = vadd.f32 0.0, %v3499
    %v3501 = vpop.f32.mrb[0].mxu0
    %v3502 = vadd.f32 0.0, %v3501
    %3503 = vdwg.mxu0
    %3504 = vmatprep.subr.mxu0 %v2676
    %3505 = vmatpush1.msra.mxu0 %v2675
    %3506 = vmatprep.subr.mxu0 %v2680
    %3507 = vmatpush1.msra.mxu0 %v2679
    %3508 = vmatprep.subr.mxu0 %v2684
    %3509 = vmatpush1.msra.mxu0 %v2683
    %3510 = vmatprep.subr.mxu0 %v2688
    %3511 = vmatpush1.msra.mxu0 %v2687
    %3512 = vmatprep.subr.mxu0 %v2692
    %3513 = vmatpush1.msra.mxu0 %v2691
    %3514 = vmatprep.subr.mxu0 %v2696
    %3515 = vmatpush1.msra.mxu0 %v2695
    %3516 = vmatprep.subr.mxu0 %v2700
    %3517 = vmatpush1.msra.mxu0 %v2699
    %3518 = vmatprep.subr.mxu0 %v2704
    %3519 = vmatpush1.msra.mxu0 %v2703
    %3520 = vmatprep.subr.mxu0 %v2708
    %3521 = vmatpush1.msra.mxu0 %v2707
    %3522 = vmatprep.subr.mxu0 %v2712
    %3523 = vmatpush1.msra.mxu0 %v2711
    %3524 = vmatprep.subr.mxu0 %v2716
    %3525 = vmatpush1.msra.mxu0 %v2715
    %3526 = vmatprep.subr.mxu0 %v2720
    %3527 = vmatpush1.msra.mxu0 %v2719
    %3528 = vmatprep.subr.mxu0 %v2724
    %3529 = vmatpush1.msra.mxu0 %v2723
    %3530 = vmatprep.subr.mxu0 %v2728
    %3531 = vmatpush1.msra.mxu0 %v2727
    %3532 = vmatprep.subr.mxu0 %v2732
    %3533 = vmatpush1.msra.mxu0 %v2731
    %3534 = vmatprep.subr.mxu0 %v2736
    %3535 = vmatpush1.msra.mxu0 %v2735
    %3536 = vmatprep.subr.mxu0 0.0
    %3537 = vmatpush1.msra.mxu0 0.0
    %3538 = vmatprep.subr.mxu0 0.0
    %3539 = vmatpush1.msra.mxu0 0.0
    %3540 = vmatprep.subr.mxu0 0.0
    %3541 = vmatpush1.msra.mxu0 0.0
    %3542 = vmatprep.subr.mxu0 0.0
    %3543 = vmatpush1.msra.mxu0 0.0
    %3544 = vmatprep.subr.mxu0 0.0
    %3545 = vmatpush1.msra.mxu0 0.0
    %3546 = vmatprep.subr.mxu0 0.0
    %3547 = vmatpush1.msra.mxu0 0.0
    %3548 = vmatprep.subr.mxu0 0.0
    %3549 = vmatpush1.msra.mxu0 0.0
    %3550 = vmatprep.subr.mxu0 0.0
    %3551 = vmatpush1.msra.mxu0 0.0
    %3552 = vmatprep.subr.mxu0 0.0
    %3553 = vmatpush1.msra.mxu0 0.0
    %3554 = vmatprep.subr.mxu0 0.0
    %3555 = vmatpush1.msra.mxu0 0.0
    %3556 = vmatprep.subr.mxu0 0.0
    %3557 = vmatpush1.msra.mxu0 0.0
    %3558 = vmatprep.subr.mxu0 0.0
    %3559 = vmatpush1.msra.mxu0 0.0
    %3560 = vmatprep.subr.mxu0 0.0
    %3561 = vmatpush1.msra.mxu0 0.0
    %3562 = vmatprep.subr.mxu0 0.0
    %3563 = vmatpush1.msra.mxu0 0.0
    %3564 = vmatprep.subr.mxu0 0.0
    %3565 = vmatpush1.msra.mxu0 0.0
    %3566 = vmatprep.subr.mxu0 0.0
    %3567 = vmatpush1.msra.mxu0 0.0
    %3568 = vmatprep.mubr.f32.mxu0 0.0
    %3569 = vmatmul.mubr.f32.gmra.mrb[0].mxu0 %v3428
    %v3570 = vpop.f32.mrb[0].mxu0
    %v3571 = vadd.f32 0.0, %v3570
    %v3572 = vpop.f32.mrb[0].mxu0
    %v3573 = vadd.f32 0.0, %v3572
    %3574 = vdwg.mxu0
    %v3575 = vadd.f32 %v3429, %v3500
    %v3576 = vadd.f32 %v3430, %v3502
    %v3577 = vadd.f32 %v3431, %v3571
    %v3578 = vadd.f32 %v3432, %v3573
    %v3579 = vxor.u32 %v3575, 2147483648
    %v3580 = vmul.f32 %v3579, 1.442695
    %v3581 = vpow.pop %v3580
    %v3582 = vadd.f32 %v3581, 1.0
    %v3583 = vrcp.pop %v3582
    %v3584 = vmul.f32 1.0, %v3583
    %v3585 = vxor.u32 %v3576, 2147483648
    %v3586 = vmul.f32 %v3585, 1.442695
    %v3587 = vpow.pop %v3586
    %v3588 = vadd.f32 %v3587, 1.0
    %v3589 = vrcp.pop %v3588
    %v3590 = vmul.f32 1.0, %v3589
    %v3591 = vtanh.pop %v3577
    %v3592 = vxor.u32 %v3578, 2147483648
    %v3593 = vmul.f32 %v3592, 1.442695
    %v3594 = vpow.pop %v3593
    %v3595 = vadd.f32 %v3594, 1.0
    %v3596 = vrcp.pop %v3595
    %v3597 = vmul.f32 1.0, %v3596
    %v3598 = vmul.f32 %v3590, %v3426
    %v3599 = vmul.f32 %v3584, %v3591
    %v3600 = vadd.f32 %v3598, %v3599
    %v3601 = vtanh.pop %v3600
    %v3602 = vmul.f32 %v3597, %v3601
    %v3603 = vld [vmem:[%s1588] sm:$0xff]
    %v3604 = vld [vmem:[%s1588 + $0x8] sm:$0xff]
    %v3605 = vld [vmem:[%s1588 + $0x10] sm:$0xff]
    %v3606 = vld [vmem:[%s1588 + $0x18] sm:$0xff]
    %3607 = vmatprep.subr.mxu0 %v2674
    %3608 = vmatpush1.msra.mxu0 %v2673
    %3609 = vmatprep.subr.mxu0 %v2678
    %3610 = vmatpush1.msra.mxu0 %v2677
    %3611 = vmatprep.subr.mxu0 %v2682
    %3612 = vmatpush1.msra.mxu0 %v2681
    %3613 = vmatprep.subr.mxu0 %v2686
    %3614 = vmatpush1.msra.mxu0 %v2685
    %3615 = vmatprep.subr.mxu0 %v2690
    %3616 = vmatpush1.msra.mxu0 %v2689
    %3617 = vmatprep.subr.mxu0 %v2694
    %3618 = vmatpush1.msra.mxu0 %v2693
    %3619 = vmatprep.subr.mxu0 %v2698
    %3620 = vmatpush1.msra.mxu0 %v2697
    %3621 = vmatprep.subr.mxu0 %v2702
    %3622 = vmatpush1.msra.mxu0 %v2701
    %3623 = vmatprep.subr.mxu0 %v2706
    %3624 = vmatpush1.msra.mxu0 %v2705
    %3625 = vmatprep.subr.mxu0 %v2710
    %3626 = vmatpush1.msra.mxu0 %v2709
    %3627 = vmatprep.subr.mxu0 %v2714
    %3628 = vmatpush1.msra.mxu0 %v2713
    %3629 = vmatprep.subr.mxu0 %v2718
    %3630 = vmatpush1.msra.mxu0 %v2717
    %3631 = vmatprep.subr.mxu0 %v2722
    %3632 = vmatpush1.msra.mxu0 %v2721
    %3633 = vmatprep.subr.mxu0 %v2726
    %3634 = vmatpush1.msra.mxu0 %v2725
    %3635 = vmatprep.subr.mxu0 %v2730
    %3636 = vmatpush1.msra.mxu0 %v2729
    %3637 = vmatprep.subr.mxu0 %v2734
    %3638 = vmatpush1.msra.mxu0 %v2733
    %3639 = vmatprep.subr.mxu0 0.0
    %3640 = vmatpush1.msra.mxu0 0.0
    %3641 = vmatprep.subr.mxu0 0.0
    %3642 = vmatpush1.msra.mxu0 0.0
    %3643 = vmatprep.subr.mxu0 0.0
    %3644 = vmatpush1.msra.mxu0 0.0
    %3645 = vmatprep.subr.mxu0 0.0
    %3646 = vmatpush1.msra.mxu0 0.0
    %3647 = vmatprep.subr.mxu0 0.0
    %3648 = vmatpush1.msra.mxu0 0.0
    %3649 = vmatprep.subr.mxu0 0.0
    %3650 = vmatpush1.msra.mxu0 0.0
    %3651 = vmatprep.subr.mxu0 0.0
    %3652 = vmatpush1.msra.mxu0 0.0
    %3653 = vmatprep.subr.mxu0 0.0
    %3654 = vmatpush1.msra.mxu0 0.0
    %3655 = vmatprep.subr.mxu0 0.0
    %3656 = vmatpush1.msra.mxu0 0.0
    %3657 = vmatprep.subr.mxu0 0.0
    %3658 = vmatpush1.msra.mxu0 0.0
    %3659 = vmatprep.subr.mxu0 0.0
    %3660 = vmatpush1.msra.mxu0 0.0
    %3661 = vmatprep.subr.mxu0 0.0
    %3662 = vmatpush1.msra.mxu0 0.0
    %3663 = vmatprep.subr.mxu0 0.0
    %3664 = vmatpush1.msra.mxu0 0.0
    %3665 = vmatprep.subr.mxu0 0.0
    %3666 = vmatpush1.msra.mxu0 0.0
    %3667 = vmatprep.subr.mxu0 0.0
    %3668 = vmatpush1.msra.mxu0 0.0
    %3669 = vmatprep.subr.mxu0 0.0
    %3670 = vmatpush1.msra.mxu0 0.0
    %3671 = vmatprep.mubr.f32.mxu0 0.0
    %3672 = vmatmul.mubr.f32.gmra.mrb[0].mxu0 %v3602
    %v3673 = vpop.f32.mrb[0].mxu0
    %v3674 = vadd.f32 0.0, %v3673
    %v3675 = vpop.f32.mrb[0].mxu0
    %v3676 = vadd.f32 0.0, %v3675
    %3677 = vdwg.mxu0
    %3678 = vmatprep.subr.mxu0 %v2676
    %3679 = vmatpush1.msra.mxu0 %v2675
    %3680 = vmatprep.subr.mxu0 %v2680
    %3681 = vmatpush1.msra.mxu0 %v2679
    %3682 = vmatprep.subr.mxu0 %v2684
    %3683 = vmatpush1.msra.mxu0 %v2683
    %3684 = vmatprep.subr.mxu0 %v2688
    %3685 = vmatpush1.msra.mxu0 %v2687
    %3686 = vmatprep.subr.mxu0 %v2692
    %3687 = vmatpush1.msra.mxu0 %v2691
    %3688 = vmatprep.subr.mxu0 %v2696
    %3689 = vmatpush1.msra.mxu0 %v2695
    %3690 = vmatprep.subr.mxu0 %v2700
    %3691 = vmatpush1.msra.mxu0 %v2699
    %3692 = vmatprep.subr.mxu0 %v2704
    %3693 = vmatpush1.msra.mxu0 %v2703
    %3694 = vmatprep.subr.mxu0 %v2708
    %3695 = vmatpush1.msra.mxu0 %v2707
    %3696 = vmatprep.subr.mxu0 %v2712
    %3697 = vmatpush1.msra.mxu0 %v2711
    %3698 = vmatprep.subr.mxu0 %v2716
    %3699 = vmatpush1.msra.mxu0 %v2715
    %3700 = vmatprep.subr.mxu0 %v2720
    %3701 = vmatpush1.msra.mxu0 %v2719
    %3702 = vmatprep.subr.mxu0 %v2724
    %3703 = vmatpush1.msra.mxu0 %v2723
    %3704 = vmatprep.subr.mxu0 %v2728
    %3705 = vmatpush1.msra.mxu0 %v2727
    %3706 = vmatprep.subr.mxu0 %v2732
    %3707 = vmatpush1.msra.mxu0 %v2731
    %3708 = vmatprep.subr.mxu0 %v2736
    %3709 = vmatpush1.msra.mxu0 %v2735
    %3710 = vmatprep.subr.mxu0 0.0
    %3711 = vmatpush1.msra.mxu0 0.0
    %3712 = vmatprep.subr.mxu0 0.0
    %3713 = vmatpush1.msra.mxu0 0.0
    %3714 = vmatprep.subr.mxu0 0.0
    %3715 = vmatpush1.msra.mxu0 0.0
    %3716 = vmatprep.subr.mxu0 0.0
    %3717 = vmatpush1.msra.mxu0 0.0
    %3718 = vmatprep.subr.mxu0 0.0
    %3719 = vmatpush1.msra.mxu0 0.0
    %3720 = vmatprep.subr.mxu0 0.0
    %3721 = vmatpush1.msra.mxu0 0.0
    %3722 = vmatprep.subr.mxu0 0.0
    %3723 = vmatpush1.msra.mxu0 0.0
    %3724 = vmatprep.subr.mxu0 0.0
    %3725 = vmatpush1.msra.mxu0 0.0
    %3726 = vmatprep.subr.mxu0 0.0
    %3727 = vmatpush1.msra.mxu0 0.0
    %3728 = vmatprep.subr.mxu0 0.0
    %3729 = vmatpush1.msra.mxu0 0.0
    %3730 = vmatprep.subr.mxu0 0.0
    %3731 = vmatpush1.msra.mxu0 0.0
    %3732 = vmatprep.subr.mxu0 0.0
    %3733 = vmatpush1.msra.mxu0 0.0
    %3734 = vmatprep.subr.mxu0 0.0
    %3735 = vmatpush1.msra.mxu0 0.0
    %3736 = vmatprep.subr.mxu0 0.0
    %3737 = vmatpush1.msra.mxu0 0.0
    %3738 = vmatprep.subr.mxu0 0.0
    %3739 = vmatpush1.msra.mxu0 0.0
    %3740 = vmatprep.subr.mxu0 0.0
    %3741 = vmatpush1.msra.mxu0 0.0
    %3742 = vmatprep.mubr.f32.mxu0 0.0
    %3743 = vmatmul.mubr.f32.gmra.mrb[0].mxu0 %v3602
    %v3744 = vpop.f32.mrb[0].mxu0
    %v3745 = vadd.f32 0.0, %v3744
    %v3746 = vpop.f32.mrb[0].mxu0
    %v3747 = vadd.f32 0.0, %v3746
    %3748 = vdwg.mxu0
    %v3749 = vadd.f32 %v3603, %v3674
    %v3750 = vadd.f32 %v3604, %v3676
    %v3751 = vadd.f32 %v3605, %v3745
    %v3752 = vadd.f32 %v3606, %v3747
    %v3753 = vxor.u32 %v3749, 2147483648
    %v3754 = vmul.f32 %v3753, 1.442695
    %v3755 = vpow.pop %v3754
    %v3756 = vadd.f32 %v3755, 1.0
    %v3757 = vrcp.pop %v3756
    %v3758 = vmul.f32 1.0, %v3757
    %v3759 = vxor.u32 %v3750, 2147483648
    %v3760 = vmul.f32 %v3759, 1.442695
    %v3761 = vpow.pop %v3760
    %v3762 = vadd.f32 %v3761, 1.0
    %v3763 = vrcp.pop %v3762
    %v3764 = vmul.f32 1.0, %v3763
    %v3765 = vtanh.pop %v3751
    %v3766 = vxor.u32 %v3752, 2147483648
    %v3767 = vmul.f32 %v3766, 1.442695
    %v3768 = vpow.pop %v3767
    %v3769 = vadd.f32 %v3768, 1.0
    %v3770 = vrcp.pop %v3769
    %v3771 = vmul.f32 1.0, %v3770
    %v3772 = vmul.f32 %v3764, %v3600
    %v3773 = vmul.f32 %v3758, %v3765
    %v3774 = vadd.f32 %v3772, %v3773
    %v3775 = vtanh.pop %v3774
    %v3776 = vmul.f32 %v3771, %v3775
    %v3777 = vld [vmem:[%s1831] sm:$0xff]
    %v3778 = vld [vmem:[%s1831 + $0x8] sm:$0xff]
    %v3779 = vld [vmem:[%s1831 + $0x10] sm:$0xff]
    %v3780 = vld [vmem:[%s1831 + $0x18] sm:$0xff]
    %3781 = vmatprep.subr.mxu0 %v2674
    %3782 = vmatpush1.msra.mxu0 %v2673
    %3783 = vmatprep.subr.mxu0 %v2678
    %3784 = vmatpush1.msra.mxu0 %v2677
    %3785 = vmatprep.subr.mxu0 %v2682
    %3786 = vmatpush1.msra.mxu0 %v2681
    %3787 = vmatprep.subr.mxu0 %v2686
    %3788 = vmatpush1.msra.mxu0 %v2685
    %3789 = vmatprep.subr.mxu0 %v2690
    %3790 = vmatpush1.msra.mxu0 %v2689
    %3791 = vmatprep.subr.mxu0 %v2694
    %3792 = vmatpush1.msra.mxu0 %v2693
    %3793 = vmatprep.subr.mxu0 %v2698
    %3794 = vmatpush1.msra.mxu0 %v2697
    %3795 = vmatprep.subr.mxu0 %v2702
    %3796 = vmatpush1.msra.mxu0 %v2701
    %3797 = vmatprep.subr.mxu0 %v2706
    %3798 = vmatpush1.msra.mxu0 %v2705
    %3799 = vmatprep.subr.mxu0 %v2710
    %3800 = vmatpush1.msra.mxu0 %v2709
    %3801 = vmatprep.subr.mxu0 %v2714
    %3802 = vmatpush1.msra.mxu0 %v2713
    %3803 = vmatprep.subr.mxu0 %v2718
    %3804 = vmatpush1.msra.mxu0 %v2717
    %3805 = vmatprep.subr.mxu0 %v2722
    %3806 = vmatpush1.msra.mxu0 %v2721
    %3807 = vmatprep.subr.mxu0 %v2726
    %3808 = vmatpush1.msra.mxu0 %v2725
    %3809 = vmatprep.subr.mxu0 %v2730
    %3810 = vmatpush1.msra.mxu0 %v2729
    %3811 = vmatprep.subr.mxu0 %v2734
    %3812 = vmatpush1.msra.mxu0 %v2733
    %3813 = vmatprep.subr.mxu0 0.0
    %3814 = vmatpush1.msra.mxu0 0.0
    %3815 = vmatprep.subr.mxu0 0.0
    %3816 = vmatpush1.msra.mxu0 0.0
    %3817 = vmatprep.subr.mxu0 0.0
    %3818 = vmatpush1.msra.mxu0 0.0
    %3819 = vmatprep.subr.mxu0 0.0
    %3820 = vmatpush1.msra.mxu0 0.0
    %3821 = vmatprep.subr.mxu0 0.0
    %3822 = vmatpush1.msra.mxu0 0.0
    %3823 = vmatprep.subr.mxu0 0.0
    %3824 = vmatpush1.msra.mxu0 0.0
    %3825 = vmatprep.subr.mxu0 0.0
    %3826 = vmatpush1.msra.mxu0 0.0
    %3827 = vmatprep.subr.mxu0 0.0
    %3828 = vmatpush1.msra.mxu0 0.0
    %3829 = vmatprep.subr.mxu0 0.0
    %3830 = vmatpush1.msra.mxu0 0.0
    %3831 = vmatprep.subr.mxu0 0.0
    %3832 = vmatpush1.msra.mxu0 0.0
    %3833 = vmatprep.subr.mxu0 0.0
    %3834 = vmatpush1.msra.mxu0 0.0
    %3835 = vmatprep.subr.mxu0 0.0
    %3836 = vmatpush1.msra.mxu0 0.0
    %3837 = vmatprep.subr.mxu0 0.0
    %3838 = vmatpush1.msra.mxu0 0.0
    %3839 = vmatprep.subr.mxu0 0.0
    %3840 = vmatpush1.msra.mxu0 0.0
    %3841 = vmatprep.subr.mxu0 0.0
    %3842 = vmatpush1.msra.mxu0 0.0
    %3843 = vmatprep.subr.mxu0 0.0
    %3844 = vmatpush1.msra.mxu0 0.0
    %3845 = vmatprep.mubr.f32.mxu0 0.0
    %3846 = vmatmul.mubr.f32.gmra.mrb[0].mxu0 %v3776
    %v3847 = vpop.f32.mrb[0].mxu0
    %v3848 = vadd.f32 0.0, %v3847
    %v3849 = vpop.f32.mrb[0].mxu0
    %v3850 = vadd.f32 0.0, %v3849
    %3851 = vdwg.mxu0
    %3852 = vmatprep.subr.mxu0 %v2676
    %3853 = vmatpush1.msra.mxu0 %v2675
    %3854 = vmatprep.subr.mxu0 %v2680
    %3855 = vmatpush1.msra.mxu0 %v2679
    %3856 = vmatprep.subr.mxu0 %v2684
    %3857 = vmatpush1.msra.mxu0 %v2683
    %3858 = vmatprep.subr.mxu0 %v2688
    %3859 = vmatpush1.msra.mxu0 %v2687
    %3860 = vmatprep.subr.mxu0 %v2692
    %3861 = vmatpush1.msra.mxu0 %v2691
    %3862 = vmatprep.subr.mxu0 %v2696
    %3863 = vmatpush1.msra.mxu0 %v2695
    %3864 = vmatprep.subr.mxu0 %v2700
    %3865 = vmatpush1.msra.mxu0 %v2699
    %3866 = vmatprep.subr.mxu0 %v2704
    %3867 = vmatpush1.msra.mxu0 %v2703
    %3868 = vmatprep.subr.mxu0 %v2708
    %3869 = vmatpush1.msra.mxu0 %v2707
    %3870 = vmatprep.subr.mxu0 %v2712
    %3871 = vmatpush1.msra.mxu0 %v2711
    %3872 = vmatprep.subr.mxu0 %v2716
    %3873 = vmatpush1.msra.mxu0 %v2715
    %3874 = vmatprep.subr.mxu0 %v2720
    %3875 = vmatpush1.msra.mxu0 %v2719
    %3876 = vmatprep.subr.mxu0 %v2724
    %3877 = vmatpush1.msra.mxu0 %v2723
    %3878 = vmatprep.subr.mxu0 %v2728
    %3879 = vmatpush1.msra.mxu0 %v2727
    %3880 = vmatprep.subr.mxu0 %v2732
    %3881 = vmatpush1.msra.mxu0 %v2731
    %3882 = vmatprep.subr.mxu0 %v2736
    %3883 = vmatpush1.msra.mxu0 %v2735
    %3884 = vmatprep.subr.mxu0 0.0
    %3885 = vmatpush1.msra.mxu0 0.0
    %3886 = vmatprep.subr.mxu0 0.0
    %3887 = vmatpush1.msra.mxu0 0.0
    %3888 = vmatprep.subr.mxu0 0.0
    %3889 = vmatpush1.msra.mxu0 0.0
    %3890 = vmatprep.subr.mxu0 0.0
    %3891 = vmatpush1.msra.mxu0 0.0
    %3892 = vmatprep.subr.mxu0 0.0
    %3893 = vmatpush1.msra.mxu0 0.0
    %3894 = vmatprep.subr.mxu0 0.0
    %3895 = vmatpush1.msra.mxu0 0.0
    %3896 = vmatprep.subr.mxu0 0.0
    %3897 = vmatpush1.msra.mxu0 0.0
    %3898 = vmatprep.subr.mxu0 0.0
    %3899 = vmatpush1.msra.mxu0 0.0
    %3900 = vmatprep.subr.mxu0 0.0
    %3901 = vmatpush1.msra.mxu0 0.0
    %3902 = vmatprep.subr.mxu0 0.0
    %3903 = vmatpush1.msra.mxu0 0.0
    %3904 = vmatprep.subr.mxu0 0.0
    %3905 = vmatpush1.msra.mxu0 0.0
    %3906 = vmatprep.subr.mxu0 0.0
    %3907 = vmatpush1.msra.mxu0 0.0
    %3908 = vmatprep.subr.mxu0 0.0
    %3909 = vmatpush1.msra.mxu0 0.0
    %3910 = vmatprep.subr.mxu0 0.0
    %3911 = vmatpush1.msra.mxu0 0.0
    %3912 = vmatprep.subr.mxu0 0.0
    %3913 = vmatpush1.msra.mxu0 0.0
    %3914 = vmatprep.subr.mxu0 0.0
    %3915 = vmatpush1.msra.mxu0 0.0
    %3916 = vmatprep.mubr.f32.mxu0 0.0
    %3917 = vmatmul.mubr.f32.gmra.mrb[0].mxu0 %v3776
    %v3918 = vpop.f32.mrb[0].mxu0
    %v3919 = vadd.f32 0.0, %v3918
    %v3920 = vpop.f32.mrb[0].mxu0
    %v3921 = vadd.f32 0.0, %v3920
    %3922 = vdwg.mxu0
    %v3923 = vadd.f32 %v3777, %v3848
    %v3924 = vadd.f32 %v3778, %v3850
    %v3925 = vadd.f32 %v3779, %v3919
    %v3926 = vadd.f32 %v3780, %v3921
    %v3927 = vxor.u32 %v3923, 2147483648
    %v3928 = vmul.f32 %v3927, 1.442695
    %v3929 = vpow.pop %v3928
    %v3930 = vadd.f32 %v3929, 1.0
    %v3931 = vrcp.pop %v3930
    %v3932 = vmul.f32 1.0, %v3931
    %v3933 = vxor.u32 %v3924, 2147483648
    %v3934 = vmul.f32 %v3933, 1.442695
    %v3935 = vpow.pop %v3934
    %v3936 = vadd.f32 %v3935, 1.0
    %v3937 = vrcp.pop %v3936
    %v3938 = vmul.f32 1.0, %v3937
    %v3939 = vtanh.pop %v3925
    %v3940 = vxor.u32 %v3926, 2147483648
    %v3941 = vmul.f32 %v3940, 1.442695
    %v3942 = vpow.pop %v3941
    %v3943 = vadd.f32 %v3942, 1.0
    %v3944 = vrcp.pop %v3943
    %v3945 = vmul.f32 1.0, %v3944
    %v3946 = vmul.f32 %v3938, %v3774
    %v3947 = vmul.f32 %v3932, %v3939
    %v3948 = vadd.f32 %v3946, %v3947
    %v3949 = vtanh.pop %v3948
    %v3950 = vmul.f32 %v3945, %v3949
    %v3951 = vld [vmem:[%s2074] sm:$0xff]
    %v3952 = vld [vmem:[%s2074 + $0x8] sm:$0xff]
    %v3953 = vld [vmem:[%s2074 + $0x10] sm:$0xff]
    %v3954 = vld [vmem:[%s2074 + $0x18] sm:$0xff]
    %3955 = vmatprep.subr.mxu0 %v2674
    %3956 = vmatpush1.msra.mxu0 %v2673
    %3957 = vmatprep.subr.mxu0 %v2678
    %3958 = vmatpush1.msra.mxu0 %v2677
    %3959 = vmatprep.subr.mxu0 %v2682
    %3960 = vmatpush1.msra.mxu0 %v2681
    %3961 = vmatprep.subr.mxu0 %v2686
    %3962 = vmatpush1.msra.mxu0 %v2685
    %3963 = vmatprep.subr.mxu0 %v2690
    %3964 = vmatpush1.msra.mxu0 %v2689
    %3965 = vmatprep.subr.mxu0 %v2694
    %3966 = vmatpush1.msra.mxu0 %v2693
    %3967 = vmatprep.subr.mxu0 %v2698
    %3968 = vmatpush1.msra.mxu0 %v2697
    %3969 = vmatprep.subr.mxu0 %v2702
    %3970 = vmatpush1.msra.mxu0 %v2701
    %3971 = vmatprep.subr.mxu0 %v2706
    %3972 = vmatpush1.msra.mxu0 %v2705
    %3973 = vmatprep.subr.mxu0 %v2710
    %3974 = vmatpush1.msra.mxu0 %v2709
    %3975 = vmatprep.subr.mxu0 %v2714
    %3976 = vmatpush1.msra.mxu0 %v2713
    %3977 = vmatprep.subr.mxu0 %v2718
    %3978 = vmatpush1.msra.mxu0 %v2717
    %3979 = vmatprep.subr.mxu0 %v2722
    %3980 = vmatpush1.msra.mxu0 %v2721
    %3981 = vmatprep.subr.mxu0 %v2726
    %3982 = vmatpush1.msra.mxu0 %v2725
    %3983 = vmatprep.subr.mxu0 %v2730
    %3984 = vmatpush1.msra.mxu0 %v2729
    %3985 = vmatprep.subr.mxu0 %v2734
    %3986 = vmatpush1.msra.mxu0 %v2733
    %3987 = vmatprep.subr.mxu0 0.0
    %3988 = vmatpush1.msra.mxu0 0.0
    %3989 = vmatprep.subr.mxu0 0.0
    %3990 = vmatpush1.msra.mxu0 0.0
    %3991 = vmatprep.subr.mxu0 0.0
    %3992 = vmatpush1.msra.mxu0 0.0
    %3993 = vmatprep.subr.mxu0 0.0
    %3994 = vmatpush1.msra.mxu0 0.0
    %3995 = vmatprep.subr.mxu0 0.0
    %3996 = vmatpush1.msra.mxu0 0.0
    %3997 = vmatprep.subr.mxu0 0.0
    %3998 = vmatpush1.msra.mxu0 0.0
    %3999 = vmatprep.subr.mxu0 0.0
    %4000 = vmatpush1.msra.mxu0 0.0
    %4001 = vmatprep.subr.mxu0 0.0
    %4002 = vmatpush1.msra.mxu0 0.0
    %4003 = vmatprep.subr.mxu0 0.0
    %4004 = vmatpush1.msra.mxu0 0.0
    %4005 = vmatprep.subr.mxu0 0.0
    %4006 = vmatpush1.msra.mxu0 0.0
    %4007 = vmatprep.subr.mxu0 0.0
    %4008 = vmatpush1.msra.mxu0 0.0
    %4009 = vmatprep.subr.mxu0 0.0
    %4010 = vmatpush1.msra.mxu0 0.0
    %4011 = vmatprep.subr.mxu0 0.0
    %4012 = vmatpush1.msra.mxu0 0.0
    %4013 = vmatprep.subr.mxu0 0.0
    %4014 = vmatpush1.msra.mxu0 0.0
    %4015 = vmatprep.subr.mxu0 0.0
    %4016 = vmatpush1.msra.mxu0 0.0
    %4017 = vmatprep.subr.mxu0 0.0
    %4018 = vmatpush1.msra.mxu0 0.0
    %4019 = vmatprep.mubr.f32.mxu0 0.0
    %4020 = vmatmul.mubr.f32.gmra.mrb[0].mxu0 %v3950
    %v4021 = vpop.f32.mrb[0].mxu0
    %v4022 = vadd.f32 0.0, %v4021
    %v4023 = vpop.f32.mrb[0].mxu0
    %v4024 = vadd.f32 0.0, %v4023
    %4025 = vdwg.mxu0
    %4026 = vmatprep.subr.mxu0 %v2676
    %4027 = vmatpush1.msra.mxu0 %v2675
    %4028 = vmatprep.subr.mxu0 %v2680
    %4029 = vmatpush1.msra.mxu0 %v2679
    %4030 = vmatprep.subr.mxu0 %v2684
    %4031 = vmatpush1.msra.mxu0 %v2683
    %4032 = vmatprep.subr.mxu0 %v2688
    %4033 = vmatpush1.msra.mxu0 %v2687
    %4034 = vmatprep.subr.mxu0 %v2692
    %4035 = vmatpush1.msra.mxu0 %v2691
    %4036 = vmatprep.subr.mxu0 %v2696
    %4037 = vmatpush1.msra.mxu0 %v2695
    %4038 = vmatprep.subr.mxu0 %v2700
    %4039 = vmatpush1.msra.mxu0 %v2699
    %4040 = vmatprep.subr.mxu0 %v2704
    %4041 = vmatpush1.msra.mxu0 %v2703
    %4042 = vmatprep.subr.mxu0 %v2708
    %4043 = vmatpush1.msra.mxu0 %v2707
    %4044 = vmatprep.subr.mxu0 %v2712
    %4045 = vmatpush1.msra.mxu0 %v2711
    %4046 = vmatprep.subr.mxu0 %v2716
    %4047 = vmatpush1.msra.mxu0 %v2715
    %4048 = vmatprep.subr.mxu0 %v2720
    %4049 = vmatpush1.msra.mxu0 %v2719
    %4050 = vmatprep.subr.mxu0 %v2724
    %4051 = vmatpush1.msra.mxu0 %v2723
    %4052 = vmatprep.subr.mxu0 %v2728
    %4053 = vmatpush1.msra.mxu0 %v2727
    %4054 = vmatprep.subr.mxu0 %v2732
    %4055 = vmatpush1.msra.mxu0 %v2731
    %4056 = vmatprep.subr.mxu0 %v2736
    %4057 = vmatpush1.msra.mxu0 %v2735
    %4058 = vmatprep.subr.mxu0 0.0
    %4059 = vmatpush1.msra.mxu0 0.0
    %4060 = vmatprep.subr.mxu0 0.0
    %4061 = vmatpush1.msra.mxu0 0.0
    %4062 = vmatprep.subr.mxu0 0.0
    %4063 = vmatpush1.msra.mxu0 0.0
    %4064 = vmatprep.subr.mxu0 0.0
    %4065 = vmatpush1.msra.mxu0 0.0
    %4066 = vmatprep.subr.mxu0 0.0
    %4067 = vmatpush1.msra.mxu0 0.0
    %4068 = vmatprep.subr.mxu0 0.0
    %4069 = vmatpush1.msra.mxu0 0.0
    %4070 = vmatprep.subr.mxu0 0.0
    %4071 = vmatpush1.msra.mxu0 0.0
    %4072 = vmatprep.subr.mxu0 0.0
    %4073 = vmatpush1.msra.mxu0 0.0
    %4074 = vmatprep.subr.mxu0 0.0
    %4075 = vmatpush1.msra.mxu0 0.0
    %4076 = vmatprep.subr.mxu0 0.0
    %4077 = vmatpush1.msra.mxu0 0.0
    %4078 = vmatprep.subr.mxu0 0.0
    %4079 = vmatpush1.msra.mxu0 0.0
    %4080 = vmatprep.subr.mxu0 0.0
    %4081 = vmatpush1.msra.mxu0 0.0
    %4082 = vmatprep.subr.mxu0 0.0
    %4083 = vmatpush1.msra.mxu0 0.0
    %4084 = vmatprep.subr.mxu0 0.0
    %4085 = vmatpush1.msra.mxu0 0.0
    %4086 = vmatprep.subr.mxu0 0.0
    %4087 = vmatpush1.msra.mxu0 0.0
    %4088 = vmatprep.subr.mxu0 0.0
    %4089 = vmatpush1.msra.mxu0 0.0
    %4090 = vmatprep.mubr.f32.mxu0 0.0
    %4091 = vmatmul.mubr.f32.gmra.mrb[0].mxu0 %v3950
    %v4092 = vpop.f32.mrb[0].mxu0
    %v4093 = vadd.f32 0.0, %v4092
    %v4094 = vpop.f32.mrb[0].mxu0
    %v4095 = vadd.f32 0.0, %v4094
    %4096 = vdwg.mxu0
    %v4097 = vadd.f32 %v3951, %v4022
    %v4098 = vadd.f32 %v3952, %v4024
    %v4099 = vadd.f32 %v3953, %v4093
    %v4100 = vadd.f32 %v3954, %v4095
    %v4101 = vxor.u32 %v4097, 2147483648
    %v4102 = vmul.f32 %v4101, 1.442695
    %v4103 = vpow.pop %v4102
    %v4104 = vadd.f32 %v4103, 1.0
    %v4105 = vrcp.pop %v4104
    %v4106 = vmul.f32 1.0, %v4105
    %v4107 = vxor.u32 %v4098, 2147483648
    %v4108 = vmul.f32 %v4107, 1.442695
    %v4109 = vpow.pop %v4108
    %v4110 = vadd.f32 %v4109, 1.0
    %v4111 = vrcp.pop %v4110
    %v4112 = vmul.f32 1.0, %v4111
    %v4113 = vtanh.pop %v4099
    %v4114 = vxor.u32 %v4100, 2147483648
    %v4115 = vmul.f32 %v4114, 1.442695
    %v4116 = vpow.pop %v4115
    %v4117 = vadd.f32 %v4116, 1.0
    %v4118 = vrcp.pop %v4117
    %v4119 = vmul.f32 1.0, %v4118
    %v4120 = vmul.f32 %v4112, %v3948
    %v4121 = vmul.f32 %v4106, %v4113
    %v4122 = vadd.f32 %v4120, %v4121
    %v4123 = vtanh.pop %v4122
    %v4124 = vmul.f32 %v4119, %v4123
    %v4125 = vld [vmem:[%s5] sm:$0xff]
    %v4126 = vld [vmem:[%s5 + $0x8] sm:$0xff]
    %v4127 = vld [vmem:[%s5 + $0x10] sm:$0xff]
    %v4128 = vld [vmem:[%s5 + $0x18] sm:$0xff]
    %v4129 = vld [vmem:[%s5 + $0x20] sm:$0xff]
    %v4130 = vld [vmem:[%s5 + $0x28] sm:$0xff]
    %v4131 = vld [vmem:[%s5 + $0x30] sm:$0xff]
    %v4132 = vld [vmem:[%s5 + $0x38] sm:$0xff]
    %v4133 = vld [vmem:[%s5 + $0x40] sm:$0xff]
    %v4134 = vld [vmem:[%s5 + $0x48] sm:$0xff]
    %v4135 = vld [vmem:[%s5 + $0x50] sm:$0xff]
    %v4136 = vld [vmem:[%s5 + $0x58] sm:$0xff]
    %v4137 = vld [vmem:[%s5 + $0x60] sm:$0xff]
    %v4138 = vld [vmem:[%s5 + $0x68] sm:$0xff]
    %v4139 = vld [vmem:[%s5 + $0x70] sm:$0xff]
    %v4140 = vld [vmem:[%s5 + $0x78] sm:$0xff]
    %v4141 = vld [vmem:[%s6] sm:$0x1]
    %v4143 = vlaneseq
    %v4144 = vshrl.u32 %v4143, 7
    %v4145 = vsub.s32 0, %v4144
    %v4146 = vrot.slane %v4141, %v4145
    %4148 = vmatprep.subr.mxu0 0.0
    %4149 = vmatpush1.msra.mxu0 %v4125
    %4150 = vmatprep.subr.mxu0 0.0
    %4151 = vmatpush1.msra.mxu0 %v4126
    %4152 = vmatprep.subr.mxu0 0.0
    %4153 = vmatpush1.msra.mxu0 %v4127
    %4154 = vmatprep.subr.mxu0 0.0
    %4155 = vmatpush1.msra.mxu0 %v4128
    %4156 = vmatprep.subr.mxu0 0.0
    %4157 = vmatpush1.msra.mxu0 %v4129
    %4158 = vmatprep.subr.mxu0 0.0
    %4159 = vmatpush1.msra.mxu0 %v4130
    %4160 = vmatprep.subr.mxu0 0.0
    %4161 = vmatpush1.msra.mxu0 %v4131
    %4162 = vmatprep.subr.mxu0 0.0
    %4163 = vmatpush1.msra.mxu0 %v4132
    %4164 = vmatprep.subr.mxu0 0.0
    %4165 = vmatpush1.msra.mxu0 %v4133
    %4166 = vmatprep.subr.mxu0 0.0
    %4167 = vmatpush1.msra.mxu0 %v4134
    %4168 = vmatprep.subr.mxu0 0.0
    %4169 = vmatpush1.msra.mxu0 %v4135
    %4170 = vmatprep.subr.mxu0 0.0
    %4171 = vmatpush1.msra.mxu0 %v4136
    %4172 = vmatprep.subr.mxu0 0.0
    %4173 = vmatpush1.msra.mxu0 %v4137
    %4174 = vmatprep.subr.mxu0 0.0
    %4175 = vmatpush1.msra.mxu0 %v4138
    %4176 = vmatprep.subr.mxu0 0.0
    %4177 = vmatpush1.msra.mxu0 %v4139
    %4178 = vmatprep.subr.mxu0 0.0
    %4179 = vmatpush1.msra.mxu0 %v4140
    %4180 = vmatprep.subr.mxu0 0.0
    %4181 = vmatpush1.msra.mxu0 0.0
    %4182 = vmatprep.subr.mxu0 0.0
    %4183 = vmatpush1.msra.mxu0 0.0
    %4184 = vmatprep.subr.mxu0 0.0
    %4185 = vmatpush1.msra.mxu0 0.0
    %4186 = vmatprep.subr.mxu0 0.0
    %4187 = vmatpush1.msra.mxu0 0.0
    %4188 = vmatprep.subr.mxu0 0.0
    %4189 = vmatpush1.msra.mxu0 0.0
    %4190 = vmatprep.subr.mxu0 0.0
    %4191 = vmatpush1.msra.mxu0 0.0
    %4192 = vmatprep.subr.mxu0 0.0
    %4193 = vmatpush1.msra.mxu0 0.0
    %4194 = vmatprep.subr.mxu0 0.0
    %4195 = vmatpush1.msra.mxu0 0.0
    %4196 = vmatprep.subr.mxu0 0.0
    %4197 = vmatpush1.msra.mxu0 0.0
    %4198 = vmatprep.subr.mxu0 0.0
    %4199 = vmatpush1.msra.mxu0 0.0
    %4200 = vmatprep.subr.mxu0 0.0
    %4201 = vmatpush1.msra.mxu0 0.0
    %4202 = vmatprep.subr.mxu0 0.0
    %4203 = vmatpush1.msra.mxu0 0.0
    %4204 = vmatprep.subr.mxu0 0.0
    %4205 = vmatpush1.msra.mxu0 0.0
    %4206 = vmatprep.subr.mxu0 0.0
    %4207 = vmatpush1.msra.mxu0 0.0
    %4208 = vmatprep.subr.mxu0 0.0
    %4209 = vmatpush1.msra.mxu0 0.0
    %4210 = vmatprep.subr.mxu0 0.0
    %4211 = vmatpush1.msra.mxu0 0.0
    %4212 = vmatprep.mubr.f32.mxu0 0.0
    %4213 = vmatmul.mubr.f32.gmra.mrb[0].mxu0 %v4124
    %v4214 = vpop.f32.mrb[0].mxu0
    %v4215 = vadd.f32 %v4146, %v4214
    %v4216 = vpop.f32.mrb[0].mxu0
    %4217 = vdwg.mxu0
    %vm4218 = vcmask 130048
    %4219 = vst.msk [vmem:[#allocation9] sm:$0xff] %vm4218, %v4215
    // Predicated region
    $region38: #{tpu_custom_call.1} parent=1 // pred_check
      _
    $region39: #{tpu_custom_call.1} parent=1 // pred_check_branch
      %4221 = sbr.rel (0) target = $region41
    $region40: #{tpu_custom_call.1} parent=1 // pred_region
      %s4223 = ssub.s32 128, 128
      %4224 = vsyncadd [#allocation6], %s4223
      %s4226 = sshll.u32 [#allocation9], 4
      %s4227 = int_to_ptr.vmem [resolvable:$true] %s4226
      %4229 = dma.vmem_to_hbm [thread:$0]  %s4227, 128, %s7, [#allocation6]
    $region41: #{tpu_custom_call.1} parent=1 // pred_fallthru
      _
    // Predicated region
    $region42: #{tpu_custom_call.1} parent=1 // pred_check
      _
    $region43: #{tpu_custom_call.1} parent=1 // pred_check_branch
      %4231 = sbr.rel (0) target = $region45
    $region44: #{tpu_custom_call.1} parent=1 // pred_region
      %4232 = dma.done [#allocation6], 128
    $region45: #{tpu_custom_call.1} parent=1 // pred_fallthru
      _
    %4233 = vsyncpa [#allocation5], 1
    %4234 = vsyncpa [#allocation8], 1
    %4235 = vsyncpa [#allocation6], 1

</llo_original>
